<compile_context>
chip_gen: v7x
topology: tpu7x:2x2x1
jax: 0.10.0
libtpu: 0.0.40
codegen_flags: <defaults>
</compile_context>

<pallas_src>
import numpy as np

import jax
import jax.numpy as jnp
from jax import lax
from jax.experimental import pallas as pl
from jax.experimental.pallas import tpu as pltpu


# ----------------------------------------------------------------------------
# Host-side slab packer: each piece starts at a 16-row (bf16 sublane-pack)
# aligned offset of a (R, 128) bf16 slab, zero padded in the lane direction.
# ----------------------------------------------------------------------------
def _align16(n):
    return (n + 15) & ~15


def _pack_slab(pieces):
    offs, row = {}, 0
    for name, arr in pieces:
        row = _align16(row)
        offs[name] = row
        row += arr.shape[0]
    total = _align16(row)
    slab = np.zeros((total, 128), np.float32)
    for name, arr in pieces:
        r, c = arr.shape
        slab[offs[name]:offs[name] + r, :c] = arr
    return jnp.asarray(slab, dtype=jnp.bfloat16), offs


# ----------------------------------------------------------------------------
# One-time parameter preparation: even/odd Toeplitz conv weights (W-pooling
# fused into the conv layout), tiny H-pool row selectors, CHW-permuted /
# 128-padded fc weights; everything packed into 2 bf16 slabs.
# ----------------------------------------------------------------------------
def prepare_params(p):
    cw1 = np.asarray(p["cw1"], np.float32)   # (6, 1, 5, 5)
    cb1 = np.asarray(p["cb1"], np.float32)   # (6,)
    cw2 = np.asarray(p["cw2"], np.float32)   # (16, 6, 5, 5)
    cb2 = np.asarray(p["cb2"], np.float32)   # (16,)
    fw1 = np.asarray(p["fw1"], np.float32)   # (400, 120)
    fb1 = np.asarray(p["fb1"], np.float32)
    fw2 = np.asarray(p["fw2"], np.float32)   # (120, 84)
    fb2 = np.asarray(p["fb2"], np.float32)
    fw3 = np.asarray(p["fw3"], np.float32)   # (84, 10)
    fb3 = np.asarray(p["fb3"], np.float32)

    # conv1 even/odd Toeplitz: column co*14+wp of the even (odd) accumulator is
    # the conv1 output at width 2*wp (2*wp+1); 2x2 W-pooling is then a plain
    # elementwise max of the two accumulators -> no se/so gather matrices.
    t1e = np.zeros((5, 32, 6, 14), np.float32)
    t1o = np.zeros((5, 32, 6, 14), np.float32)
    for ki in range(5):
        for kj in range(5):
            for wp in range(14):
                t1e[ki, 2 * wp + kj,     :, wp] = cw1[:, 0, ki, kj]
                t1o[ki, 2 * wp + 1 + kj, :, wp] = cw1[:, 0, ki, kj]
    t1e = t1e.reshape(160, 84)               # rows: ki*32 + w_in
    t1o = t1o.reshape(160, 84)
    b1 = np.repeat(cb1, 14)[None, :]         # (1, 84)

    # H-direction 2x2 pooling row selectors (tiny), padded to aligned rows.
    re1 = np.zeros((16, 28), np.float32)
    ro1 = np.zeros((16, 28), np.float32)
    for hp in range(14):
        re1[hp, 2 * hp] = 1.0
        ro1[hp, 2 * hp + 1] = 1.0

    early, offE = _pack_slab([("t1e", t1e), ("t1o", t1o), ("b1", b1),
                              ("re1", re1), ("ro1", ro1)])

    # conv2 even/odd Toeplitz over the pooled conv1 layout [h, cin*14 + w].
    t2e = np.zeros((5, 6, 14, 16, 5), np.float32)
    t2o = np.zeros((5, 6, 14, 16, 5), np.float32)
    for ki in range(5):
        for kj in range(5):
            for wp in range(5):
                t2e[ki, :, 2 * wp + kj,     :, wp] = cw2[:, :, ki, kj].T
                t2o[ki, :, 2 * wp + 1 + kj, :, wp] = cw2[:, :, ki, kj].T
    t2e = t2e.reshape(5, 84, 80)             # rows: cin*14 + w_in, cols: co*5 + wp
    t2o = t2o.reshape(5, 84, 80)
    b2 = np.repeat(cb2, 5)[None, :]          # (1, 80)

    re2 = np.zeros((8, 10), np.float32)
    ro2 = np.zeros((8, 10), np.float32)
    for hp in range(5):
        re2[hp, 2 * hp] = 1.0
        ro2[hp, 2 * hp + 1] = 1.0

    # fc1 with the torch CHW flatten baked into the rows, split per pooled row h.
    fw1r = fw1.reshape(16, 5, 5, 120)        # [c, h, w, n]
    w1 = [fw1r[:, h, :, :].reshape(80, 120) for h in range(5)]

    w2 = np.zeros((128, 84), np.float32); w2[:120] = fw2
    w3 = np.zeros((128, 10), np.float32); w3[:84] = fw3

    late_pieces = ([(f"t2e{k}", t2e[k]) for k in range(5)]
                   + [(f"t2o{k}", t2o[k]) for k in range(5)]
                   + [("b2", b2), ("re2", re2), ("ro2", ro2)]
                   + [(f"w1{h}", w1[h]) for h in range(5)]
                   + [("fb1", fb1[None, :]), ("w2", w2), ("fb2", fb2[None, :]),
                      ("w3", w3), ("fb3", fb3[None, :])])
    late, offL = _pack_slab(late_pieces)

    arrays = {"early": early, "late": late}
    meta = {"offE": offE, "offL": offL}
    return arrays, meta


# ----------------------------------------------------------------------------
# Fused kernel: conv1+pool -> (DMA wait) -> conv2+pool -> fc1 -> fc2 -> fc3
# ----------------------------------------------------------------------------
def build_forward(offE, offL):

    def kernel(x_ref, e_ref, l_hbm, o_ref, l_vmem, sem_ref, p1_s, p2_s):
        f32 = jnp.float32

        # Kick off the conv2/fc weight transfer (bulk of the bytes) so it
        # overlaps the conv1 + pool1 compute below.
        cp = pltpu.make_async_copy(l_hbm, l_vmem, sem_ref.at[0])
        cp.start()

        def mm(a, b):
            return jnp.dot(a, b, preferred_element_type=f32)

        def epc(name, r, c=128):                         # early-slab piece
            o = offE[name]
            return e_ref[o:o + r, 0:c].astype(f32)

        def lpc(name, r, c=128):                         # late-slab piece
            o = offL[name]
            return l_vmem[o:o + r, 0:c].astype(f32)

        # ---- conv1 (5x5, 1->6): even/odd Toeplitz matmuls on the MXU --------
        oe, oo = offE["t1e"], offE["t1o"]
        acc_e = mm(x_ref[0:28, :], e_ref[oe:oe + 32, :].astype(f32))
        acc_o = mm(x_ref[0:28, :], e_ref[oo:oo + 32, :].astype(f32))
        for ki in range(1, 5):
            re_ = e_ref[oe + 32 * ki:oe + 32 * ki + 32, :].astype(f32)
            ro_ = e_ref[oo + 32 * ki:oo + 32 * ki + 32, :].astype(f32)
            acc_e = acc_e + mm(x_ref[ki:ki + 28, :], re_)
            acc_o = acc_o + mm(x_ref[ki:ki + 28, :], ro_)
        # W-direction 2x2 pool == elementwise max of even/odd; bias added once.
        m1 = jnp.maximum(jnp.maximum(acc_e, acc_o) + epc("b1", 1), 0.0)   # (28,128)
        # H-direction 2x2 pool via tiny row-selector matmuls.
        p1_s[...] = jnp.maximum(mm(epc("re1", 16, 28), m1),
                                mm(epc("ro1", 16, 28), m1))               # (16,128)

        # Late weights must be resident from here on.
        cp.wait()

        # ---- conv2 (5x5, 6->16): even/odd Toeplitz matmuls ------------------
        a2e = mm(p1_s[0:10, 0:84], lpc("t2e0", 84))
        a2o = mm(p1_s[0:10, 0:84], lpc("t2o0", 84))
        for ki in range(1, 5):
            a2e = a2e + mm(p1_s[ki:ki + 10, 0:84], lpc(f"t2e{ki}", 84))
            a2o = a2o + mm(p1_s[ki:ki + 10, 0:84], lpc(f"t2o{ki}", 84))
        m2 = jnp.maximum(jnp.maximum(a2e, a2o) + lpc("b2", 1), 0.0)       # (10,128)
        p2_s[...] = jnp.maximum(mm(lpc("re2", 8, 10), m2),
                                mm(lpc("ro2", 8, 10), m2))                # (8,128)

        # ---- fc1 (400->120), torch CHW flatten baked into w1 rows -----------
        h1 = mm(p2_s[0:1, 0:80], lpc("w10", 80))
        for h in range(1, 5):
            h1 = h1 + mm(p2_s[h:h + 1, 0:80], lpc(f"w1{h}", 80))
        h1 = jnp.maximum(h1 + lpc("fb1", 1), 0.0)                         # (1,128)

        # ---- fc2 (120->84) and fc3 (84->10), lane-padded to 128 -------------
        h2 = jnp.maximum(mm(h1, lpc("w2", 128)) + lpc("fb2", 1), 0.0)     # (1,128)
        o_ref[...] = mm(h2, lpc("w3", 128)) + lpc("fb3", 1)               # (1,128)

    def forward(x_nchw, early, late):
        N, C, H, W = x_nchw.shape
        assert N == 1 and C == 1, "this synthetic kernel handles the (1,1,32,32) case"
        x2d = x_nchw.reshape(H, W)

        out_pad = pl.pallas_call(
            kernel,
            out_shape=jax.ShapeDtypeStruct((1, 128), jnp.float32),
            in_specs=[pl.BlockSpec(memory_space=pltpu.MemorySpace.VMEM),   # image
                      pl.BlockSpec(memory_space=pltpu.MemorySpace.VMEM),   # early slab
                      pl.BlockSpec(memory_space=pl.ANY)],                  # late slab (manual DMA)
            out_specs=pl.BlockSpec(memory_space=pltpu.MemorySpace.VMEM),
            scratch_shapes=[pltpu.VMEM(late.shape, jnp.bfloat16),   # prefetched late weights
                            pltpu.SemaphoreType.DMA((1,)),
                            pltpu.VMEM((16, 128), jnp.float32),     # pooled conv1
                            pltpu.VMEM((8, 128), jnp.float32)],     # pooled conv2
            cost_estimate=pl.CostEstimate(flops=5_000_000, transcendentals=0,
                                          bytes_accessed=540_000),
        )(x2d, early, late)

        return out_pad[:, :10]                           # drop lane padding

    return forward


# ----------------------------------------------------------------------------
# Pure-JAX reference (same math, NCHW) for the correctness check
# ----------------------------------------------------------------------------
def reference_forward(x, p):
    def conv_block(x, w, b):
        y = lax.conv_general_dilated(x, w, (1, 1), "VALID",
                                     dimension_numbers=("NCHW", "OIHW", "NCHW"))
        y = jnp.maximum(y + b[None, :, None, None], 0.0)
        return lax.reduce_window(y, -jnp.inf, lax.max,
                                 (1, 1, 2, 2), (1, 1, 2, 2), "VALID")

    y = conv_block(x, p["cw1"], p["cb1"])
    y = conv_block(y, p["cw2"], p["cb2"])
    y = y.reshape(y.shape[0], -1)
    y = jnp.maximum(y @ p["fw1"] + p["fb1"], 0.0)
    y = jnp.maximum(y @ p["fw2"] + p["fb2"], 0.0)
    return y @ p["fw3"] + p["fb3"]


def quantize_params_bf16(p):
    # The kernel stores its weights in bf16; this reference uses the same
    # (bf16-rounded) values so the structural check can be reasonably tight.
    return {k: jnp.asarray(v, jnp.bfloat16).astype(jnp.float32) for k, v in p.items()}


def init_params(key):
    ks = jax.random.split(key, 10)
    s = 0.1
    return {
        "cw1": jax.random.normal(ks[0], (6, 1, 5, 5), jnp.float32) * s,
        "cb1": jax.random.normal(ks[1], (6,), jnp.float32) * s,
        "cw2": jax.random.normal(ks[2], (16, 6, 5, 5), jnp.float32) * s,
        "cb2": jax.random.normal(ks[3], (16,), jnp.float32) * s,
        "fw1": jax.random.normal(ks[4], (400, 120), jnp.float32) * s,
        "fb1": jax.random.normal(ks[5], (120,), jnp.float32) * s,
        "fw2": jax.random.normal(ks[6], (120, 84), jnp.float32) * s,
        "fb2": jax.random.normal(ks[7], (84,), jnp.float32) * s,
        "fw3": jax.random.normal(ks[8], (84, 10), jnp.float32) * s,
        "fb3": jax.random.normal(ks[9], (10,), jnp.float32) * s,
    }


if __name__ == "__main__":
    key = jax.random.PRNGKey(0)
    pkey, xkey = jax.random.split(key)
    params = init_params(pkey)
    x = jax.random.normal(xkey, (1, 1, 32, 32), jnp.float32)

    prep_arrays, prep_meta = prepare_params(params)        # one-time host prep
    fwd = jax.jit(build_forward(prep_meta["offE"], prep_meta["offL"]))
    out = jax.block_until_ready(fwd(x, prep_arrays["early"], prep_arrays["late"]))
    assert out.shape == (1, 10), out.shape

    # Structural check vs. a reference using the same bf16-rounded weights
    # (tolerance covers MXU default-precision / accumulation-order noise).
    ref_q = reference_forward(x, quantize_params_bf16(params))
    assert jnp.allclose(out, ref_q, rtol=2e-2, atol=2e-2), (out, ref_q)

    # Semantics check vs. the full-precision reference (bf16 weight storage
    # introduces a small, bounded quantization error).
    ref = reference_forward(x, params)
    assert jnp.allclose(out, ref, rtol=5e-2, atol=5e-2), (out, ref)

    # TODO(synk): the surrounding script's autograd / MSELoss / SGD step (and
    # the debug prints in Net.forward) are training/logging logic, not part of
    # the module's forward pass, and are not ported.
    print("KERNEL_OK")
</pallas_src>

<mosaic_0001>
module attributes {stable_mosaic.version = 11 : i64} {
  func.func @kernel(%arg0: memref<32x32xf32, #tpu.memory_space<vmem>>, %arg1: memref<368x128xbf16, #tpu.memory_space<vmem>>, %arg2: memref<1712x128xbf16, #tpu.memory_space<any>>, %arg3: memref<1x128xf32, #tpu.memory_space<vmem>>, %arg4: memref<1712x128xbf16, #tpu.memory_space<vmem>>, %arg5: memref<1x!tpu.dma_semaphore, #tpu.memory_space<semaphore_mem>>, %arg6: memref<16x128xf32, #tpu.memory_space<vmem>>, %arg7: memref<8x128xf32, #tpu.memory_space<vmem>>) attributes {dimension_semantics = [], scalar_prefetch = 0 : i64, scratch_operands = 4 : i64, tpu.core_type = #tpu.core_type<tc>} {
    %c0_i32 = arith.constant 0 : i32
    %0 = tpu.memref_slice %arg5[%c0_i32] : memref<1x!tpu.dma_semaphore, #tpu.memory_space<semaphore_mem>> -> memref<1x!tpu.dma_semaphore, #tpu.memory_space<semaphore_mem>>
    %1 = tpu.memref_squeeze %0 : memref<1x!tpu.dma_semaphore, #tpu.memory_space<semaphore_mem>> -> memref<!tpu.dma_semaphore, #tpu.memory_space<semaphore_mem>>
    tpu.enqueue_dma source(%arg2 : memref<1712x128xbf16, #tpu.memory_space<any>>) target(%arg4 : memref<1712x128xbf16, #tpu.memory_space<vmem>>) target_semaphore(%1 : memref<!tpu.dma_semaphore, #tpu.memory_space<semaphore_mem>>)
    %c0 = arith.constant 0 : index
    %c0_0 = arith.constant 0 : index
    %2 = vector.load %arg0[%c0, %c0_0] : memref<32x32xf32, #tpu.memory_space<vmem>>, vector<28x32xf32>
    %c0_1 = arith.constant 0 : index
    %c0_2 = arith.constant 0 : index
    %3 = vector.load %arg1[%c0_1, %c0_2] : memref<368x128xbf16, #tpu.memory_space<vmem>>, vector<32x128xbf16>
    %4 = arith.extf %3 : vector<32x128xbf16> to vector<32x128xf32>
    %cst = arith.constant dense<0.000000e+00> : vector<28x128xf32>
    %5 = tpu.matmul %2, %4, %cst {dimension_numbers = #tpu.dot_dimension_numbers<[1], [0], [0], [1], [0, 0, 1, 1], [], []>} : vector<28x32xf32>, vector<32x128xf32>, vector<28x128xf32> -> vector<28x128xf32>
    %c0_3 = arith.constant 0 : index
    %c0_4 = arith.constant 0 : index
    %6 = vector.load %arg0[%c0_3, %c0_4] : memref<32x32xf32, #tpu.memory_space<vmem>>, vector<28x32xf32>
    %c160 = arith.constant 160 : index
    %c0_5 = arith.constant 0 : index
    %7 = vector.load %arg1[%c160, %c0_5] : memref<368x128xbf16, #tpu.memory_space<vmem>>, vector<32x128xbf16>
    %8 = arith.extf %7 : vector<32x128xbf16> to vector<32x128xf32>
    %cst_6 = arith.constant dense<0.000000e+00> : vector<28x128xf32>
    %9 = tpu.matmul %6, %8, %cst_6 {dimension_numbers = #tpu.dot_dimension_numbers<[1], [0], [0], [1], [0, 0, 1, 1], [], []>} : vector<28x32xf32>, vector<32x128xf32>, vector<28x128xf32> -> vector<28x128xf32>
    %c32 = arith.constant 32 : index
    %c0_7 = arith.constant 0 : index
    %10 = vector.load %arg1[%c32, %c0_7] : memref<368x128xbf16, #tpu.memory_space<vmem>>, vector<32x128xbf16>
    %11 = arith.extf %10 : vector<32x128xbf16> to vector<32x128xf32>
    %c192 = arith.constant 192 : index
    %c0_8 = arith.constant 0 : index
    %12 = vector.load %arg1[%c192, %c0_8] : memref<368x128xbf16, #tpu.memory_space<vmem>>, vector<32x128xbf16>
    %13 = arith.extf %12 : vector<32x128xbf16> to vector<32x128xf32>
    %c1 = arith.constant 1 : index
    %c0_9 = arith.constant 0 : index
    %14 = vector.load %arg0[%c1, %c0_9] : memref<32x32xf32, #tpu.memory_space<vmem>>, vector<28x32xf32>
    %cst_10 = arith.constant dense<0.000000e+00> : vector<28x128xf32>
    %15 = tpu.matmul %14, %11, %cst_10 {dimension_numbers = #tpu.dot_dimension_numbers<[1], [0], [0], [1], [0, 0, 1, 1], [], []>} : vector<28x32xf32>, vector<32x128xf32>, vector<28x128xf32> -> vector<28x128xf32>
    %16 = arith.addf %5, %15 : vector<28x128xf32>
    %c1_11 = arith.constant 1 : index
    %c0_12 = arith.constant 0 : index
    %17 = vector.load %arg0[%c1_11, %c0_12] : memref<32x32xf32, #tpu.memory_space<vmem>>, vector<28x32xf32>
    %cst_13 = arith.constant dense<0.000000e+00> : vector<28x128xf32>
    %18 = tpu.matmul %17, %13, %cst_13 {dimension_numbers = #tpu.dot_dimension_numbers<[1], [0], [0], [1], [0, 0, 1, 1], [], []>} : vector<28x32xf32>, vector<32x128xf32>, vector<28x128xf32> -> vector<28x128xf32>
    %19 = arith.addf %9, %18 : vector<28x128xf32>
    %c64 = arith.constant 64 : index
    %c0_14 = arith.constant 0 : index
    %20 = vector.load %arg1[%c64, %c0_14] : memref<368x128xbf16, #tpu.memory_space<vmem>>, vector<32x128xbf16>
    %21 = arith.extf %20 : vector<32x128xbf16> to vector<32x128xf32>
    %c224 = arith.constant 224 : index
    %c0_15 = arith.constant 0 : index
    %22 = vector.load %arg1[%c224, %c0_15] : memref<368x128xbf16, #tpu.memory_space<vmem>>, vector<32x128xbf16>
    %23 = arith.extf %22 : vector<32x128xbf16> to vector<32x128xf32>
    %c2 = arith.constant 2 : index
    %c0_16 = arith.constant 0 : index
    %24 = vector.load %arg0[%c2, %c0_16] : memref<32x32xf32, #tpu.memory_space<vmem>>, vector<28x32xf32>
    %cst_17 = arith.constant dense<0.000000e+00> : vector<28x128xf32>
    %25 = tpu.matmul %24, %21, %cst_17 {dimension_numbers = #tpu.dot_dimension_numbers<[1], [0], [0], [1], [0, 0, 1, 1], [], []>} : vector<28x32xf32>, vector<32x128xf32>, vector<28x128xf32> -> vector<28x128xf32>
    %26 = arith.addf %16, %25 : vector<28x128xf32>
    %c2_18 = arith.constant 2 : index
    %c0_19 = arith.constant 0 : index
    %27 = vector.load %arg0[%c2_18, %c0_19] : memref<32x32xf32, #tpu.memory_space<vmem>>, vector<28x32xf32>
    %cst_20 = arith.constant dense<0.000000e+00> : vector<28x128xf32>
    %28 = tpu.matmul %27, %23, %cst_20 {dimension_numbers = #tpu.dot_dimension_numbers<[1], [0], [0], [1], [0, 0, 1, 1], [], []>} : vector<28x32xf32>, vector<32x128xf32>, vector<28x128xf32> -> vector<28x128xf32>
    %29 = arith.addf %19, %28 : vector<28x128xf32>
    %c96 = arith.constant 96 : index
    %c0_21 = arith.constant 0 : index
    %30 = vector.load %arg1[%c96, %c0_21] : memref<368x128xbf16, #tpu.memory_space<vmem>>, vector<32x128xbf16>
    %31 = arith.extf %30 : vector<32x128xbf16> to vector<32x128xf32>
    %c256 = arith.constant 256 : index
    %c0_22 = arith.constant 0 : index
    %32 = vector.load %arg1[%c256, %c0_22] : memref<368x128xbf16, #tpu.memory_space<vmem>>, vector<32x128xbf16>
    %33 = arith.extf %32 : vector<32x128xbf16> to vector<32x128xf32>
    %c3 = arith.constant 3 : index
    %c0_23 = arith.constant 0 : index
    %34 = vector.load %arg0[%c3, %c0_23] : memref<32x32xf32, #tpu.memory_space<vmem>>, vector<28x32xf32>
    %cst_24 = arith.constant dense<0.000000e+00> : vector<28x128xf32>
    %35 = tpu.matmul %34, %31, %cst_24 {dimension_numbers = #tpu.dot_dimension_numbers<[1], [0], [0], [1], [0, 0, 1, 1], [], []>} : vector<28x32xf32>, vector<32x128xf32>, vector<28x128xf32> -> vector<28x128xf32>
    %36 = arith.addf %26, %35 : vector<28x128xf32>
    %c3_25 = arith.constant 3 : index
    %c0_26 = arith.constant 0 : index
    %37 = vector.load %arg0[%c3_25, %c0_26] : memref<32x32xf32, #tpu.memory_space<vmem>>, vector<28x32xf32>
    %cst_27 = arith.constant dense<0.000000e+00> : vector<28x128xf32>
    %38 = tpu.matmul %37, %33, %cst_27 {dimension_numbers = #tpu.dot_dimension_numbers<[1], [0], [0], [1], [0, 0, 1, 1], [], []>} : vector<28x32xf32>, vector<32x128xf32>, vector<28x128xf32> -> vector<28x128xf32>
    %39 = arith.addf %29, %38 : vector<28x128xf32>
    %c128 = arith.constant 128 : index
    %c0_28 = arith.constant 0 : index
    %40 = vector.load %arg1[%c128, %c0_28] : memref<368x128xbf16, #tpu.memory_space<vmem>>, vector<32x128xbf16>
    %41 = arith.extf %40 : vector<32x128xbf16> to vector<32x128xf32>
    %c288 = arith.constant 288 : index
    %c0_29 = arith.constant 0 : index
    %42 = vector.load %arg1[%c288, %c0_29] : memref<368x128xbf16, #tpu.memory_space<vmem>>, vector<32x128xbf16>
    %43 = arith.extf %42 : vector<32x128xbf16> to vector<32x128xf32>
    %c4 = arith.constant 4 : index
    %c0_30 = arith.constant 0 : index
    %44 = vector.load %arg0[%c4, %c0_30] : memref<32x32xf32, #tpu.memory_space<vmem>>, vector<28x32xf32>
    %cst_31 = arith.constant dense<0.000000e+00> : vector<28x128xf32>
    %45 = tpu.matmul %44, %41, %cst_31 {dimension_numbers = #tpu.dot_dimension_numbers<[1], [0], [0], [1], [0, 0, 1, 1], [], []>} : vector<28x32xf32>, vector<32x128xf32>, vector<28x128xf32> -> vector<28x128xf32>
    %46 = arith.addf %36, %45 : vector<28x128xf32>
    %c4_32 = arith.constant 4 : index
    %c0_33 = arith.constant 0 : index
    %47 = vector.load %arg0[%c4_32, %c0_33] : memref<32x32xf32, #tpu.memory_space<vmem>>, vector<28x32xf32>
    %cst_34 = arith.constant dense<0.000000e+00> : vector<28x128xf32>
    %48 = tpu.matmul %47, %43, %cst_34 {dimension_numbers = #tpu.dot_dimension_numbers<[1], [0], [0], [1], [0, 0, 1, 1], [], []>} : vector<28x32xf32>, vector<32x128xf32>, vector<28x128xf32> -> vector<28x128xf32>
    %49 = arith.addf %39, %48 : vector<28x128xf32>
    %50 = arith.maximumf %46, %49 : vector<28x128xf32>
    %c320 = arith.constant 320 : index
    %c0_35 = arith.constant 0 : index
    %51 = vector.load %arg1[%c320, %c0_35] : memref<368x128xbf16, #tpu.memory_space<vmem>>, vector<1x128xbf16>
    %52 = arith.extf %51 : vector<1x128xbf16> to vector<1x128xf32>
    %53 = vector.broadcast %52 : vector<1x128xf32> to vector<28x128xf32>
    %54 = arith.addf %50, %53 : vector<28x128xf32>
    %cst_36 = arith.constant 0.000000e+00 : f32
    %55 = vector.broadcast %cst_36 : f32 to vector<28x128xf32>
    %56 = arith.maximumf %54, %55 : vector<28x128xf32>
    %c336 = arith.constant 336 : index
    %c0_37 = arith.constant 0 : index
    %57 = vector.load %arg1[%c336, %c0_37] : memref<368x128xbf16, #tpu.memory_space<vmem>>, vector<16x28xbf16>
    %58 = arith.extf %57 : vector<16x28xbf16> to vector<16x28xf32>
    %cst_38 = arith.constant dense<0.000000e+00> : vector<16x128xf32>
    %59 = tpu.matmul %58, %56, %cst_38 {dimension_numbers = #tpu.dot_dimension_numbers<[1], [0], [0], [1], [0, 0, 1, 1], [], []>} : vector<16x28xf32>, vector<28x128xf32>, vector<16x128xf32> -> vector<16x128xf32>
    %c352 = arith.constant 352 : index
    %c0_39 = arith.constant 0 : index
    %60 = vector.load %arg1[%c352, %c0_39] : memref<368x128xbf16, #tpu.memory_space<vmem>>, vector<16x28xbf16>
    %61 = arith.extf %60 : vector<16x28xbf16> to vector<16x28xf32>
    %cst_40 = arith.constant dense<0.000000e+00> : vector<16x128xf32>
    %62 = tpu.matmul %61, %56, %cst_40 {dimension_numbers = #tpu.dot_dimension_numbers<[1], [0], [0], [1], [0, 0, 1, 1], [], []>} : vector<16x28xf32>, vector<28x128xf32>, vector<16x128xf32> -> vector<16x128xf32>
    %63 = arith.maximumf %59, %62 : vector<16x128xf32>
    %c0_41 = arith.constant 0 : index
    %c0_42 = arith.constant 0 : index
    %64 = vector.load %arg6[%c0_41, %c0_42] : memref<16x128xf32, #tpu.memory_space<vmem>>, vector<16x128xf32>
    tpu.vector_store %arg6[%c0_41, %c0_42], %63 {strides = array<i32>} : memref<16x128xf32, #tpu.memory_space<vmem>>, vector<16x128xf32>,
    %c0_i32_43 = arith.constant 0 : i32
    %65 = tpu.memref_slice %arg5[%c0_i32_43] : memref<1x!tpu.dma_semaphore, #tpu.memory_space<semaphore_mem>> -> memref<1x!tpu.dma_semaphore, #tpu.memory_space<semaphore_mem>>
    %66 = tpu.memref_squeeze %65 : memref<1x!tpu.dma_semaphore, #tpu.memory_space<semaphore_mem>> -> memref<!tpu.dma_semaphore, #tpu.memory_space<semaphore_mem>>
    tpu.wait_dma2 semaphore(%66 : memref<!tpu.dma_semaphore, #tpu.memory_space<semaphore_mem>>) src(%arg2 : memref<1712x128xbf16, #tpu.memory_space<any>>) dst(%arg4 : memref<1712x128xbf16, #tpu.memory_space<vmem>>)
    %c0_44 = arith.constant 0 : index
    %c0_45 = arith.constant 0 : index
    %67 = vector.load %arg6[%c0_44, %c0_45] : memref<16x128xf32, #tpu.memory_space<vmem>>, vector<10x84xf32>
    %c0_46 = arith.constant 0 : index
    %c0_47 = arith.constant 0 : index
    %68 = vector.load %arg4[%c0_46, %c0_47] : memref<1712x128xbf16, #tpu.memory_space<vmem>>, vector<84x128xbf16>
    %69 = arith.extf %68 : vector<84x128xbf16> to vector<84x128xf32>
    %cst_48 = arith.constant dense<0.000000e+00> : vector<10x128xf32>
    %70 = tpu.matmul %67, %69, %cst_48 {dimension_numbers = #tpu.dot_dimension_numbers<[1], [0], [0], [1], [0, 0, 1, 1], [], []>} : vector<10x84xf32>, vector<84x128xf32>, vector<10x128xf32> -> vector<10x128xf32>
    %c0_49 = arith.constant 0 : index
    %c0_50 = arith.constant 0 : index
    %71 = vector.load %arg6[%c0_49, %c0_50] : memref<16x128xf32, #tpu.memory_space<vmem>>, vector<10x84xf32>
    %c480 = arith.constant 480 : index
    %c0_51 = arith.constant 0 : index
    %72 = vector.load %arg4[%c480, %c0_51] : memref<1712x128xbf16, #tpu.memory_space<vmem>>, vector<84x128xbf16>
    %73 = arith.extf %72 : vector<84x128xbf16> to vector<84x128xf32>
    %cst_52 = arith.constant dense<0.000000e+00> : vector<10x128xf32>
    %74 = tpu.matmul %71, %73, %cst_52 {dimension_numbers = #tpu.dot_dimension_numbers<[1], [0], [0], [1], [0, 0, 1, 1], [], []>} : vector<10x84xf32>, vector<84x128xf32>, vector<10x128xf32> -> vector<10x128xf32>
    %c1_53 = arith.constant 1 : index
    %c0_54 = arith.constant 0 : index
    %75 = vector.load %arg6[%c1_53, %c0_54] : memref<16x128xf32, #tpu.memory_space<vmem>>, vector<10x84xf32>
    %c96_55 = arith.constant 96 : index
    %c0_56 = arith.constant 0 : index
    %76 = vector.load %arg4[%c96_55, %c0_56] : memref<1712x128xbf16, #tpu.memory_space<vmem>>, vector<84x128xbf16>
    %77 = arith.extf %76 : vector<84x128xbf16> to vector<84x128xf32>
    %cst_57 = arith.constant dense<0.000000e+00> : vector<10x128xf32>
    %78 = tpu.matmul %75, %77, %cst_57 {dimension_numbers = #tpu.dot_dimension_numbers<[1], [0], [0], [1], [0, 0, 1, 1], [], []>} : vector<10x84xf32>, vector<84x128xf32>, vector<10x128xf32> -> vector<10x128xf32>
    %79 = arith.addf %70, %78 : vector<10x128xf32>
    %c1_58 = arith.constant 1 : index
    %c0_59 = arith.constant 0 : index
    %80 = vector.load %arg6[%c1_58, %c0_59] : memref<16x128xf32, #tpu.memory_space<vmem>>, vector<10x84xf32>
    %c576 = arith.constant 576 : index
    %c0_60 = arith.constant 0 : index
    %81 = vector.load %arg4[%c576, %c0_60] : memref<1712x128xbf16, #tpu.memory_space<vmem>>, vector<84x128xbf16>
    %82 = arith.extf %81 : vector<84x128xbf16> to vector<84x128xf32>
    %cst_61 = arith.constant dense<0.000000e+00> : vector<10x128xf32>
    %83 = tpu.matmul %80, %82, %cst_61 {dimension_numbers = #tpu.dot_dimension_numbers<[1], [0], [0], [1], [0, 0, 1, 1], [], []>} : vector<10x84xf32>, vector<84x128xf32>, vector<10x128xf32> -> vector<10x128xf32>
    %84 = arith.addf %74, %83 : vector<10x128xf32>
    %c2_62 = arith.constant 2 : index
    %c0_63 = arith.constant 0 : index
    %85 = vector.load %arg6[%c2_62, %c0_63] : memref<16x128xf32, #tpu.memory_space<vmem>>, vector<10x84xf32>
    %c192_64 = arith.constant 192 : index
    %c0_65 = arith.constant 0 : index
    %86 = vector.load %arg4[%c192_64, %c0_65] : memref<1712x128xbf16, #tpu.memory_space<vmem>>, vector<84x128xbf16>
    %87 = arith.extf %86 : vector<84x128xbf16> to vector<84x128xf32>
    %cst_66 = arith.constant dense<0.000000e+00> : vector<10x128xf32>
    %88 = tpu.matmul %85, %87, %cst_66 {dimension_numbers = #tpu.dot_dimension_numbers<[1], [0], [0], [1], [0, 0, 1, 1], [], []>} : vector<10x84xf32>, vector<84x128xf32>, vector<10x128xf32> -> vector<10x128xf32>
    %89 = arith.addf %79, %88 : vector<10x128xf32>
    %c2_67 = arith.constant 2 : index
    %c0_68 = arith.constant 0 : index
    %90 = vector.load %arg6[%c2_67, %c0_68] : memref<16x128xf32, #tpu.memory_space<vmem>>, vector<10x84xf32>
    %c672 = arith.constant 672 : index
    %c0_69 = arith.constant 0 : index
    %91 = vector.load %arg4[%c672, %c0_69] : memref<1712x128xbf16, #tpu.memory_space<vmem>>, vector<84x128xbf16>
    %92 = arith.extf %91 : vector<84x128xbf16> to vector<84x128xf32>
    %cst_70 = arith.constant dense<0.000000e+00> : vector<10x128xf32>
    %93 = tpu.matmul %90, %92, %cst_70 {dimension_numbers = #tpu.dot_dimension_numbers<[1], [0], [0], [1], [0, 0, 1, 1], [], []>} : vector<10x84xf32>, vector<84x128xf32>, vector<10x128xf32> -> vector<10x128xf32>
    %94 = arith.addf %84, %93 : vector<10x128xf32>
    %c3_71 = arith.constant 3 : index
    %c0_72 = arith.constant 0 : index
    %95 = vector.load %arg6[%c3_71, %c0_72] : memref<16x128xf32, #tpu.memory_space<vmem>>, vector<10x84xf32>
    %c288_73 = arith.constant 288 : index
    %c0_74 = arith.constant 0 : index
    %96 = vector.load %arg4[%c288_73, %c0_74] : memref<1712x128xbf16, #tpu.memory_space<vmem>>, vector<84x128xbf16>
    %97 = arith.extf %96 : vector<84x128xbf16> to vector<84x128xf32>
    %cst_75 = arith.constant dense<0.000000e+00> : vector<10x128xf32>
    %98 = tpu.matmul %95, %97, %cst_75 {dimension_numbers = #tpu.dot_dimension_numbers<[1], [0], [0], [1], [0, 0, 1, 1], [], []>} : vector<10x84xf32>, vector<84x128xf32>, vector<10x128xf32> -> vector<10x128xf32>
    %99 = arith.addf %89, %98 : vector<10x128xf32>
    %c3_76 = arith.constant 3 : index
    %c0_77 = arith.constant 0 : index
    %100 = vector.load %arg6[%c3_76, %c0_77] : memref<16x128xf32, #tpu.memory_space<vmem>>, vector<10x84xf32>
    %c768 = arith.constant 768 : index
    %c0_78 = arith.constant 0 : index
    %101 = vector.load %arg4[%c768, %c0_78] : memref<1712x128xbf16, #tpu.memory_space<vmem>>, vector<84x128xbf16>
    %102 = arith.extf %101 : vector<84x128xbf16> to vector<84x128xf32>
    %cst_79 = arith.constant dense<0.000000e+00> : vector<10x128xf32>
    %103 = tpu.matmul %100, %102, %cst_79 {dimension_numbers = #tpu.dot_dimension_numbers<[1], [0], [0], [1], [0, 0, 1, 1], [], []>} : vector<10x84xf32>, vector<84x128xf32>, vector<10x128xf32> -> vector<10x128xf32>
    %104 = arith.addf %94, %103 : vector<10x128xf32>
    %c4_80 = arith.constant 4 : index
    %c0_81 = arith.constant 0 : index
    %105 = vector.load %arg6[%c4_80, %c0_81] : memref<16x128xf32, #tpu.memory_space<vmem>>, vector<10x84xf32>
    %c384 = arith.constant 384 : index
    %c0_82 = arith.constant 0 : index
    %106 = vector.load %arg4[%c384, %c0_82] : memref<1712x128xbf16, #tpu.memory_space<vmem>>, vector<84x128xbf16>
    %107 = arith.extf %106 : vector<84x128xbf16> to vector<84x128xf32>
    %cst_83 = arith.constant dense<0.000000e+00> : vector<10x128xf32>
    %108 = tpu.matmul %105, %107, %cst_83 {dimension_numbers = #tpu.dot_dimension_numbers<[1], [0], [0], [1], [0, 0, 1, 1], [], []>} : vector<10x84xf32>, vector<84x128xf32>, vector<10x128xf32> -> vector<10x128xf32>
    %109 = arith.addf %99, %108 : vector<10x128xf32>
    %c4_84 = arith.constant 4 : index
    %c0_85 = arith.constant 0 : index
    %110 = vector.load %arg6[%c4_84, %c0_85] : memref<16x128xf32, #tpu.memory_space<vmem>>, vector<10x84xf32>
    %c864 = arith.constant 864 : index
    %c0_86 = arith.constant 0 : index
    %111 = vector.load %arg4[%c864, %c0_86] : memref<1712x128xbf16, #tpu.memory_space<vmem>>, vector<84x128xbf16>
    %112 = arith.extf %111 : vector<84x128xbf16> to vector<84x128xf32>
    %cst_87 = arith.constant dense<0.000000e+00> : vector<10x128xf32>
    %113 = tpu.matmul %110, %112, %cst_87 {dimension_numbers = #tpu.dot_dimension_numbers<[1], [0], [0], [1], [0, 0, 1, 1], [], []>} : vector<10x84xf32>, vector<84x128xf32>, vector<10x128xf32> -> vector<10x128xf32>
    %114 = arith.addf %104, %113 : vector<10x128xf32>
    %115 = arith.maximumf %109, %114 : vector<10x128xf32>
    %c960 = arith.constant 960 : index
    %c0_88 = arith.constant 0 : index
    %116 = vector.load %arg4[%c960, %c0_88] : memref<1712x128xbf16, #tpu.memory_space<vmem>>, vector<1x128xbf16>
    %117 = arith.extf %116 : vector<1x128xbf16> to vector<1x128xf32>
    %118 = vector.broadcast %117 : vector<1x128xf32> to vector<10x128xf32>
    %119 = arith.addf %115, %118 : vector<10x128xf32>
    %cst_89 = arith.constant 0.000000e+00 : f32
    %120 = vector.broadcast %cst_89 : f32 to vector<10x128xf32>
    %121 = arith.maximumf %119, %120 : vector<10x128xf32>
    %c976 = arith.constant 976 : index
    %c0_90 = arith.constant 0 : index
    %122 = vector.load %arg4[%c976, %c0_90] : memref<1712x128xbf16, #tpu.memory_space<vmem>>, vector<8x10xbf16>
    %123 = arith.extf %122 : vector<8x10xbf16> to vector<8x10xf32>
    %cst_91 = arith.constant dense<0.000000e+00> : vector<8x128xf32>
    %124 = tpu.matmul %123, %121, %cst_91 {dimension_numbers = #tpu.dot_dimension_numbers<[1], [0], [0], [1], [0, 0, 1, 1], [], []>} : vector<8x10xf32>, vector<10x128xf32>, vector<8x128xf32> -> vector<8x128xf32>
    %c992 = arith.constant 992 : index
    %c0_92 = arith.constant 0 : index
    %125 = vector.load %arg4[%c992, %c0_92] : memref<1712x128xbf16, #tpu.memory_space<vmem>>, vector<8x10xbf16>
    %126 = arith.extf %125 : vector<8x10xbf16> to vector<8x10xf32>
    %cst_93 = arith.constant dense<0.000000e+00> : vector<8x128xf32>
    %127 = tpu.matmul %126, %121, %cst_93 {dimension_numbers = #tpu.dot_dimension_numbers<[1], [0], [0], [1], [0, 0, 1, 1], [], []>} : vector<8x10xf32>, vector<10x128xf32>, vector<8x128xf32> -> vector<8x128xf32>
    %128 = arith.maximumf %124, %127 : vector<8x128xf32>
    %c0_94 = arith.constant 0 : index
    %c0_95 = arith.constant 0 : index
    %129 = vector.load %arg7[%c0_94, %c0_95] : memref<8x128xf32, #tpu.memory_space<vmem>>, vector<8x128xf32>
    tpu.vector_store %arg7[%c0_94, %c0_95], %128 {strides = array<i32>} : memref<8x128xf32, #tpu.memory_space<vmem>>, vector<8x128xf32>,
    %c0_96 = arith.constant 0 : index
    %c0_97 = arith.constant 0 : index
    %130 = vector.load %arg7[%c0_96, %c0_97] : memref<8x128xf32, #tpu.memory_space<vmem>>, vector<1x80xf32>
    %c1008 = arith.constant 1008 : index
    %c0_98 = arith.constant 0 : index
    %131 = vector.load %arg4[%c1008, %c0_98] : memref<1712x128xbf16, #tpu.memory_space<vmem>>, vector<80x128xbf16>
    %132 = arith.extf %131 : vector<80x128xbf16> to vector<80x128xf32>
    %cst_99 = arith.constant dense<0.000000e+00> : vector<1x128xf32>
    %133 = tpu.matmul %130, %132, %cst_99 {dimension_numbers = #tpu.dot_dimension_numbers<[1], [0], [0], [1], [0, 0, 1, 1], [], []>} : vector<1x80xf32>, vector<80x128xf32>, vector<1x128xf32> -> vector<1x128xf32>
    %c1_100 = arith.constant 1 : index
    %c0_101 = arith.constant 0 : index
    %134 = vector.load %arg7[%c1_100, %c0_101] : memref<8x128xf32, #tpu.memory_space<vmem>>, vector<1x80xf32>
    %c1088 = arith.constant 1088 : index
    %c0_102 = arith.constant 0 : index
    %135 = vector.load %arg4[%c1088, %c0_102] : memref<1712x128xbf16, #tpu.memory_space<vmem>>, vector<80x128xbf16>
    %136 = arith.extf %135 : vector<80x128xbf16> to vector<80x128xf32>
    %cst_103 = arith.constant dense<0.000000e+00> : vector<1x128xf32>
    %137 = tpu.matmul %134, %136, %cst_103 {dimension_numbers = #tpu.dot_dimension_numbers<[1], [0], [0], [1], [0, 0, 1, 1], [], []>} : vector<1x80xf32>, vector<80x128xf32>, vector<1x128xf32> -> vector<1x128xf32>
    %138 = arith.addf %133, %137 : vector<1x128xf32>
    %c2_104 = arith.constant 2 : index
    %c0_105 = arith.constant 0 : index
    %139 = vector.load %arg7[%c2_104, %c0_105] : memref<8x128xf32, #tpu.memory_space<vmem>>, vector<1x80xf32>
    %c1168 = arith.constant 1168 : index
    %c0_106 = arith.constant 0 : index
    %140 = vector.load %arg4[%c1168, %c0_106] : memref<1712x128xbf16, #tpu.memory_space<vmem>>, vector<80x128xbf16>
    %141 = arith.extf %140 : vector<80x128xbf16> to vector<80x128xf32>
    %cst_107 = arith.constant dense<0.000000e+00> : vector<1x128xf32>
    %142 = tpu.matmul %139, %141, %cst_107 {dimension_numbers = #tpu.dot_dimension_numbers<[1], [0], [0], [1], [0, 0, 1, 1], [], []>} : vector<1x80xf32>, vector<80x128xf32>, vector<1x128xf32> -> vector<1x128xf32>
    %143 = arith.addf %138, %142 : vector<1x128xf32>
    %c3_108 = arith.constant 3 : index
    %c0_109 = arith.constant 0 : index
    %144 = vector.load %arg7[%c3_108, %c0_109] : memref<8x128xf32, #tpu.memory_space<vmem>>, vector<1x80xf32>
    %c1248 = arith.constant 1248 : index
    %c0_110 = arith.constant 0 : index
    %145 = vector.load %arg4[%c1248, %c0_110] : memref<1712x128xbf16, #tpu.memory_space<vmem>>, vector<80x128xbf16>
    %146 = arith.extf %145 : vector<80x128xbf16> to vector<80x128xf32>
    %cst_111 = arith.constant dense<0.000000e+00> : vector<1x128xf32>
    %147 = tpu.matmul %144, %146, %cst_111 {dimension_numbers = #tpu.dot_dimension_numbers<[1], [0], [0], [1], [0, 0, 1, 1], [], []>} : vector<1x80xf32>, vector<80x128xf32>, vector<1x128xf32> -> vector<1x128xf32>
    %148 = arith.addf %143, %147 : vector<1x128xf32>
    %c4_112 = arith.constant 4 : index
    %c0_113 = arith.constant 0 : index
    %149 = vector.load %arg7[%c4_112, %c0_113] : memref<8x128xf32, #tpu.memory_space<vmem>>, vector<1x80xf32>
    %c1328 = arith.constant 1328 : index
    %c0_114 = arith.constant 0 : index
    %150 = vector.load %arg4[%c1328, %c0_114] : memref<1712x128xbf16, #tpu.memory_space<vmem>>, vector<80x128xbf16>
    %151 = arith.extf %150 : vector<80x128xbf16> to vector<80x128xf32>
    %cst_115 = arith.constant dense<0.000000e+00> : vector<1x128xf32>
    %152 = tpu.matmul %149, %151, %cst_115 {dimension_numbers = #tpu.dot_dimension_numbers<[1], [0], [0], [1], [0, 0, 1, 1], [], []>} : vector<1x80xf32>, vector<80x128xf32>, vector<1x128xf32> -> vector<1x128xf32>
    %153 = arith.addf %148, %152 : vector<1x128xf32>
    %c1408 = arith.constant 1408 : index
    %c0_116 = arith.constant 0 : index
    %154 = vector.load %arg4[%c1408, %c0_116] : memref<1712x128xbf16, #tpu.memory_space<vmem>>, vector<1x128xbf16>
    %155 = arith.extf %154 : vector<1x128xbf16> to vector<1x128xf32>
    %156 = arith.addf %153, %155 : vector<1x128xf32>
    %cst_117 = arith.constant 0.000000e+00 : f32
    %157 = vector.broadcast %cst_117 : f32 to vector<1x128xf32>
    %158 = arith.maximumf %156, %157 : vector<1x128xf32>
    %c1424 = arith.constant 1424 : index
    %c0_118 = arith.constant 0 : index
    %159 = vector.load %arg4[%c1424, %c0_118] : memref<1712x128xbf16, #tpu.memory_space<vmem>>, vector<128x128xbf16>
    %160 = arith.extf %159 : vector<128x128xbf16> to vector<128x128xf32>
    %cst_119 = arith.constant dense<0.000000e+00> : vector<1x128xf32>
    %161 = tpu.matmul %158, %160, %cst_119 {dimension_numbers = #tpu.dot_dimension_numbers<[1], [0], [0], [1], [0, 0, 1, 1], [], []>} : vector<1x128xf32>, vector<128x128xf32>, vector<1x128xf32> -> vector<1x128xf32>
    %c1552 = arith.constant 1552 : index
    %c0_120 = arith.constant 0 : index
    %162 = vector.load %arg4[%c1552, %c0_120] : memref<1712x128xbf16, #tpu.memory_space<vmem>>, vector<1x128xbf16>
    %163 = arith.extf %162 : vector<1x128xbf16> to vector<1x128xf32>
    %164 = arith.addf %161, %163 : vector<1x128xf32>
    %cst_121 = arith.constant 0.000000e+00 : f32
    %165 = vector.broadcast %cst_121 : f32 to vector<1x128xf32>
    %166 = arith.maximumf %164, %165 : vector<1x128xf32>
    %c1568 = arith.constant 1568 : index
    %c0_122 = arith.constant 0 : index
    %167 = vector.load %arg4[%c1568, %c0_122] : memref<1712x128xbf16, #tpu.memory_space<vmem>>, vector<128x128xbf16>
    %168 = arith.extf %167 : vector<128x128xbf16> to vector<128x128xf32>
    %cst_123 = arith.constant dense<0.000000e+00> : vector<1x128xf32>
    %169 = tpu.matmul %166, %168, %cst_123 {dimension_numbers = #tpu.dot_dimension_numbers<[1], [0], [0], [1], [0, 0, 1, 1], [], []>} : vector<1x128xf32>, vector<128x128xf32>, vector<1x128xf32> -> vector<1x128xf32>
    %c1696 = arith.constant 1696 : index
    %c0_124 = arith.constant 0 : index
    %170 = vector.load %arg4[%c1696, %c0_124] : memref<1712x128xbf16, #tpu.memory_space<vmem>>, vector<1x128xbf16>
    %171 = arith.extf %170 : vector<1x128xbf16> to vector<1x128xf32>
    %172 = arith.addf %169, %171 : vector<1x128xf32>
    %c0_125 = arith.constant 0 : index
    %c0_126 = arith.constant 0 : index
    %173 = vector.load %arg3[%c0_125, %c0_126] : memref<1x128xf32, #tpu.memory_space<vmem>>, vector<1x128xf32>
    tpu.vector_store %arg3[%c0_125, %c0_126], %172 {strides = array<i32>} : memref<1x128xf32, #tpu.memory_space<vmem>>, vector<1x128xf32>,
    return
  }
}

</mosaic_0001>

<llo_original>
// kernel: forward.1
$region0: #{forward.1}
  #allocation0 [shape = 'u32[]', space=smem, size = 0x4, offset = 0x4, fixed_abs, tag = 'smem constant byte address 0x4 - core index']
  #allocation1 [shape = 'u32[144,128]{1,0:T(1,128)}', space=vmem, size = 0x12000, scoped, tag = 'internal scratch']
  #allocation2 [shape = 'bf16[1712,128]{1,0:T(16,128)(2,1)}', space=vmem, size = 0x6b000, scoped, tag = 'scratch operand']
  #allocation3 [shape = 's32[1]{0}', space=sflag, size = 0x4, scoped, tag = 'scratch operand']
  #allocation4 [shape = 'f32[16,128]{1,0:T(8,128)}', space=vmem, size = 0x2000, scoped, tag = 'scratch operand']
  #allocation5 [shape = 'f32[8,128]{1,0:T(8,128)}', space=vmem, size = 0x1000, scoped, tag = 'scratch operand']
  #allocation12 [shape = 's32[]', space=sflag, size = 0x4, offset = 0, fixed_abs, tag = 'sflag constant byte address 0x0 - dummy sync flag']
  #allocation13 [shape = 's32[]', space=sflag, size = 0x4, offset = 0, fixed_abs, tag = 'sflag constant byte address 0x0 - dummy sync flag']
  #allocation14 [shape = 'u32[]', space=smem, size = 0x4, offset = 0x44, fixed_abs, tag = 'smem constant byte address 0x44 - assertion arg 0']
  #allocation15 [shape = 'u32[]', space=smem, size = 0x4, offset = 0x48, fixed_abs, tag = 'smem constant byte address 0x48 - assertion arg 1']
  %s0 = inlined_call_operand.hbm [shape: f32[32,32], index: 0, kind: input, shape index: {}]
  %s1 = inlined_call_operand.hbm [shape: bf16[368,128], index: 1, kind: input, shape index: {}]
  %s2 = inlined_call_operand.hbm [shape: bf16[1712,128], index: 2, kind: input, shape index: {}]
  %s3 = inlined_call_operand.hbm [shape: f32[1,128], index: 3, kind: output, shape index: {}]
  %s4 = sld [smem:[#allocation0]]
  $region30: #{forward.1} parent=0
    _
  %s6 = ssub.s32 1, %s4
  %s7 = scalar_select 0, %s6, %s4
  $region1: #{forward.1} parent=0
    #allocation6 [shape = 'u8[16384]{0}', space=vmem, size = 0x4000, scoped, tag = 'input window, operand 0, single buffered']
    #allocation7 [shape = 's32[1]{0}', space=sflag, size = 0x4, scoped, tag = 'scoped memory for forward.1']
    #allocation8 [shape = 's32[1]{0}', space=sflag, size = 0x4, scoped, tag = 'scoped memory for forward.1']
    #allocation9 [shape = 'u8[94208]{0}', space=vmem, size = 0x17000, scoped, tag = 'input window, operand 1, single buffered']
    #allocation10 [shape = 's32[1]{0}', space=sflag, size = 0x4, scoped, tag = 'scoped memory for forward.1']
    #allocation11 [shape = 'u8[512]{0}', space=vmem, size = 0x400, scoped, tag = 'output window, operand 0, single buffered']
    %8 = vsyncpa [#allocation7], 0
    %9 = vsyncpa [#allocation10], 0
    %10 = vsyncpa [#allocation8], 0
    // Predicated region
    $region2: #{forward.1} parent=1 // pred_check
      _
    $region3: #{forward.1} parent=1 // pred_check_branch
      %12 = sbr.rel (0) target = $region5
    $region4: #{forward.1} parent=1 // pred_region
      %s14 = ssub.s32 512, 512
      %15 = vsyncadd [#allocation7], %s14
      %s16 = sshll.u32 [#allocation6], 4
      %s17 = int_to_ptr.vmem [resolvable:$true] %s16
      %22 = dma.hbm_to_vmem [thread:$0]  %s0, 512, %s17, [#allocation7], 128, 128, 8
    $region5: #{forward.1} parent=1 // pred_fallthru
      _
    // Predicated region
    $region6: #{forward.1} parent=1 // pred_check
      _
    $region7: #{forward.1} parent=1 // pred_check_branch
      %24 = sbr.rel (0) target = $region9
    $region8: #{forward.1} parent=1 // pred_region
      %s26 = ssub.s32 2944, 2944
      %27 = vsyncadd [#allocation10], %s26
      %s28 = sshll.u32 [#allocation9], 4
      %s29 = int_to_ptr.vmem [resolvable:$true] %s28
      %34 = dma.hbm_to_vmem [thread:$0]  %s1, 2944, %s29, [#allocation10], 64, 64, 4
    $region9: #{forward.1} parent=1 // pred_fallthru
      _
    // Predicated region
    $region10: #{forward.1} parent=1 // pred_check
      _
    $region11: #{forward.1} parent=1 // pred_check_branch
      %36 = sbr.rel (0) target = $region13
    $region12: #{forward.1} parent=1 // pred_region
      %37 = dma.done [#allocation7], 512
    $region13: #{forward.1} parent=1 // pred_fallthru
      _
    // Predicated region
    $region14: #{forward.1} parent=1 // pred_check
      _
    $region15: #{forward.1} parent=1 // pred_check_branch
      %39 = sbr.rel (0) target = $region17
    $region16: #{forward.1} parent=1 // pred_region
      %40 = dma.done [#allocation10], 2944
    $region17: #{forward.1} parent=1 // pred_fallthru
      _
    // Predicated region
    $region18: #{forward.1} parent=1 // pred_check
      _
    $region19: #{forward.1} parent=1 // pred_check_branch
      %42 = sbr.rel target = $region21
    $region20: #{forward.1} parent=1 // pred_region
      %43 = sst [smem:[#allocation14]] [#allocation13]
      %44 = sst [smem:[#allocation15]] [#allocation12]
    $region21: #{forward.1} parent=1 // pred_fallthru
      _
    %46 = shalt.err (0)
    %s48 = sshll.u32 [#allocation2], 4
    %s49 = int_to_ptr.vmem [resolvable:$true] %s48
    %51 = dma.hbm_to_vmem [thread:$0]  %s2, 13696, %s49, [#allocation3]
    %v52 = vld [vmem:[#allocation6] sm:$0xff]
    %v53 = vld [vmem:[#allocation6 + $0x8] sm:$0xff]
    %v54 = vld [vmem:[#allocation6 + $0x10] sm:$0xff]
    %v55 = vld [vmem:[#allocation6 + $0x18] sm:$0xf]
    %v56 = vld [vmem:[#allocation9] sm:$0xf]
    %v57 = vld [vmem:[#allocation9 + $0x4] sm:$0xf]
    %v58 = vld [vmem:[#allocation9 + $0x8] sm:$0xf]
    %v59 = vld [vmem:[#allocation9 + $0xc] sm:$0xf]
    %v60 = vunpack.c.l.bf16 %v56
    %v61 = vunpack.c.l.bf16 %v57
    %v62 = vunpack.c.l.bf16 %v58
    %v63 = vunpack.c.l.bf16 %v59
    %v64 = vld [vmem:[#allocation9 + $0x50] sm:$0xf]
    %v65 = vld [vmem:[#allocation9 + $0x54] sm:$0xf]
    %v66 = vld [vmem:[#allocation9 + $0x58] sm:$0xf]
    %v67 = vld [vmem:[#allocation9 + $0x5c] sm:$0xf]
    %v68 = vunpack.c.l.bf16 %v64
    %v69 = vunpack.c.l.bf16 %v65
    %v70 = vunpack.c.l.bf16 %v66
    %v71 = vunpack.c.l.bf16 %v67
    %v72 = vld [vmem:[#allocation9 + $0x10] sm:$0xf]
    %v73 = vld [vmem:[#allocation9 + $0x14] sm:$0xf]
    %v74 = vld [vmem:[#allocation9 + $0x18] sm:$0xf]
    %v75 = vld [vmem:[#allocation9 + $0x1c] sm:$0xf]
    %v76 = vunpack.c.l.bf16 %v72
    %v77 = vunpack.c.l.bf16 %v73
    %v78 = vunpack.c.l.bf16 %v74
    %v79 = vunpack.c.l.bf16 %v75
    %v80 = vld [vmem:[#allocation9 + $0x60] sm:$0xf]
    %v81 = vld [vmem:[#allocation9 + $0x64] sm:$0xf]
    %v82 = vld [vmem:[#allocation9 + $0x68] sm:$0xf]
    %v83 = vld [vmem:[#allocation9 + $0x6c] sm:$0xf]
    %v84 = vunpack.c.l.bf16 %v80
    %v85 = vunpack.c.l.bf16 %v81
    %v86 = vunpack.c.l.bf16 %v82
    %v87 = vunpack.c.l.bf16 %v83
    %v88 = vld [vmem:[#allocation6 + $0x1] sm:$0xff]
    %v89 = vld [vmem:[#allocation6 + $0x9] sm:$0xff]
    %v90 = vld [vmem:[#allocation6 + $0x11] sm:$0xff]
    %v91 = vld [vmem:[#allocation6 + $0x19] sm:$0xf]
    %vm92 = vcmask 261120
    %v94 = vsel %vm92, %v88, 0
    %v97 = vsel %vm92, %v89, 0
    %v100 = vsel %vm92, %v90, 0
    %v103 = vsel %vm92, %v91, 0
    %105 = vmatprep.subr.mxu0 0.0
    %106 = vmatpush1.msra.mxu0 %v76
    %107 = vmatprep.subr.mxu0 0.0
    %108 = vmatpush1.msra.mxu0 %v77
    %109 = vmatprep.subr.mxu0 0.0
    %110 = vmatpush1.msra.mxu0 %v78
    %111 = vmatprep.subr.mxu0 0.0
    %112 = vmatpush1.msra.mxu0 %v79
    %113 = vmatprep.subr.mxu0 0.0
    %114 = vmatpush1.msra.mxu0 0.0
    %115 = vmatprep.subr.mxu0 0.0
    %116 = vmatpush1.msra.mxu0 0.0
    %117 = vmatprep.subr.mxu0 0.0
    %118 = vmatpush1.msra.mxu0 0.0
    %119 = vmatprep.subr.mxu0 0.0
    %120 = vmatpush1.msra.mxu0 0.0
    %121 = vmatprep.subr.mxu0 0.0
    %122 = vmatpush1.msra.mxu0 0.0
    %123 = vmatprep.subr.mxu0 0.0
    %124 = vmatpush1.msra.mxu0 0.0
    %125 = vmatprep.subr.mxu0 0.0
    %126 = vmatpush1.msra.mxu0 0.0
    %127 = vmatprep.subr.mxu0 0.0
    %128 = vmatpush1.msra.mxu0 0.0
    %129 = vmatprep.subr.mxu0 0.0
    %130 = vmatpush1.msra.mxu0 0.0
    %131 = vmatprep.subr.mxu0 0.0
    %132 = vmatpush1.msra.mxu0 0.0
    %133 = vmatprep.subr.mxu0 0.0
    %134 = vmatpush1.msra.mxu0 0.0
    %135 = vmatprep.subr.mxu0 0.0
    %136 = vmatpush1.msra.mxu0 0.0
    %137 = vmatprep.subr.mxu0 0.0
    %138 = vmatpush1.msra.mxu0 0.0
    %139 = vmatprep.subr.mxu0 0.0
    %140 = vmatpush1.msra.mxu0 0.0
    %141 = vmatprep.subr.mxu0 0.0
    %142 = vmatpush1.msra.mxu0 0.0
    %143 = vmatprep.subr.mxu0 0.0
    %144 = vmatpush1.msra.mxu0 0.0
    %145 = vmatprep.subr.mxu0 0.0
    %146 = vmatpush1.msra.mxu0 0.0
    %147 = vmatprep.subr.mxu0 0.0
    %148 = vmatpush1.msra.mxu0 0.0
    %149 = vmatprep.subr.mxu0 0.0
    %150 = vmatpush1.msra.mxu0 0.0
    %151 = vmatprep.subr.mxu0 0.0
    %152 = vmatpush1.msra.mxu0 0.0
    %153 = vmatprep.subr.mxu0 0.0
    %154 = vmatpush1.msra.mxu0 0.0
    %155 = vmatprep.subr.mxu0 0.0
    %156 = vmatpush1.msra.mxu0 0.0
    %157 = vmatprep.subr.mxu0 0.0
    %158 = vmatpush1.msra.mxu0 0.0
    %159 = vmatprep.subr.mxu0 0.0
    %160 = vmatpush1.msra.mxu0 0.0
    %161 = vmatprep.subr.mxu0 0.0
    %162 = vmatpush1.msra.mxu0 0.0
    %163 = vmatprep.subr.mxu0 0.0
    %164 = vmatpush1.msra.mxu0 0.0
    %165 = vmatprep.subr.mxu0 0.0
    %166 = vmatpush1.msra.mxu0 0.0
    %167 = vmatprep.subr.mxu0 0.0
    %168 = vmatpush1.msra.mxu0 0.0
    %169 = vmatprep.mubr.f32.mxu0 0.0
    %170 = vmatmul.mubr.f32.gmra.mrb[0].mxu0 %v94
    %v171 = vpop.f32.mrb[0].mxu0
    %v172 = vadd.f32 0.0, %v171
    %v173 = vpop.f32.mrb[0].mxu0
    %174 = vmatprep.mubr.f32.mxu0 0.0
    %175 = vmatmul.mubr.f32.gmra.mrb[0].mxu0 %v97
    %v176 = vpop.f32.mrb[0].mxu0
    %v177 = vadd.f32 0.0, %v176
    %v178 = vpop.f32.mrb[0].mxu0
    %179 = vmatprep.mubr.f32.mxu0 0.0
    %180 = vmatmul.mubr.f32.gmra.mrb[0].mxu0 %v100
    %v181 = vpop.f32.mrb[0].mxu0
    %v182 = vadd.f32 0.0, %v181
    %v183 = vpop.f32.mrb[0].mxu0
    %184 = vmatprep.mubr.f32.mxu0 0.0
    %185 = vmatmul.mubr.f32.gmra.mrb[0].mxu0 %v103
    %v186 = vpop.f32.mrb[0].mxu0
    %v187 = vadd.f32 0.0, %v186
    %v188 = vpop.f32.mrb[0].mxu0
    %189 = vdwg.mxu0
    %v191 = vsel %vm92, %v52, 0
    %v194 = vsel %vm92, %v53, 0
    %v197 = vsel %vm92, %v54, 0
    %v200 = vsel %vm92, %v55, 0
    %202 = vmatprep.subr.mxu0 0.0
    %203 = vmatpush1.msra.mxu0 %v60
    %204 = vmatprep.subr.mxu0 0.0
    %205 = vmatpush1.msra.mxu0 %v61
    %206 = vmatprep.subr.mxu0 0.0
    %207 = vmatpush1.msra.mxu0 %v62
    %208 = vmatprep.subr.mxu0 0.0
    %209 = vmatpush1.msra.mxu0 %v63
    %210 = vmatprep.subr.mxu0 0.0
    %211 = vmatpush1.msra.mxu0 0.0
    %212 = vmatprep.subr.mxu0 0.0
    %213 = vmatpush1.msra.mxu0 0.0
    %214 = vmatprep.subr.mxu0 0.0
    %215 = vmatpush1.msra.mxu0 0.0
    %216 = vmatprep.subr.mxu0 0.0
    %217 = vmatpush1.msra.mxu0 0.0
    %218 = vmatprep.subr.mxu0 0.0
    %219 = vmatpush1.msra.mxu0 0.0
    %220 = vmatprep.subr.mxu0 0.0
    %221 = vmatpush1.msra.mxu0 0.0
    %222 = vmatprep.subr.mxu0 0.0
    %223 = vmatpush1.msra.mxu0 0.0
    %224 = vmatprep.subr.mxu0 0.0
    %225 = vmatpush1.msra.mxu0 0.0
    %226 = vmatprep.subr.mxu0 0.0
    %227 = vmatpush1.msra.mxu0 0.0
    %228 = vmatprep.subr.mxu0 0.0
    %229 = vmatpush1.msra.mxu0 0.0
    %230 = vmatprep.subr.mxu0 0.0
    %231 = vmatpush1.msra.mxu0 0.0
    %232 = vmatprep.subr.mxu0 0.0
    %233 = vmatpush1.msra.mxu0 0.0
    %234 = vmatprep.subr.mxu0 0.0
    %235 = vmatpush1.msra.mxu0 0.0
    %236 = vmatprep.subr.mxu0 0.0
    %237 = vmatpush1.msra.mxu0 0.0
    %238 = vmatprep.subr.mxu0 0.0
    %239 = vmatpush1.msra.mxu0 0.0
    %240 = vmatprep.subr.mxu0 0.0
    %241 = vmatpush1.msra.mxu0 0.0
    %242 = vmatprep.subr.mxu0 0.0
    %243 = vmatpush1.msra.mxu0 0.0
    %244 = vmatprep.subr.mxu0 0.0
    %245 = vmatpush1.msra.mxu0 0.0
    %246 = vmatprep.subr.mxu0 0.0
    %247 = vmatpush1.msra.mxu0 0.0
    %248 = vmatprep.subr.mxu0 0.0
    %249 = vmatpush1.msra.mxu0 0.0
    %250 = vmatprep.subr.mxu0 0.0
    %251 = vmatpush1.msra.mxu0 0.0
    %252 = vmatprep.subr.mxu0 0.0
    %253 = vmatpush1.msra.mxu0 0.0
    %254 = vmatprep.subr.mxu0 0.0
    %255 = vmatpush1.msra.mxu0 0.0
    %256 = vmatprep.subr.mxu0 0.0
    %257 = vmatpush1.msra.mxu0 0.0
    %258 = vmatprep.subr.mxu0 0.0
    %259 = vmatpush1.msra.mxu0 0.0
    %260 = vmatprep.subr.mxu0 0.0
    %261 = vmatpush1.msra.mxu0 0.0
    %262 = vmatprep.subr.mxu0 0.0
    %263 = vmatpush1.msra.mxu0 0.0
    %264 = vmatprep.subr.mxu0 0.0
    %265 = vmatpush1.msra.mxu0 0.0
    %266 = vmatprep.mubr.f32.mxu0 0.0
    %267 = vmatmul.mubr.f32.gmra.mrb[0].mxu0 %v191
    %v268 = vpop.f32.mrb[0].mxu0
    %v269 = vadd.f32 %v172, %v268
    %v270 = vpop.f32.mrb[0].mxu0
    %271 = vmatprep.mubr.f32.mxu0 0.0
    %272 = vmatmul.mubr.f32.gmra.mrb[0].mxu0 %v194
    %v273 = vpop.f32.mrb[0].mxu0
    %v274 = vadd.f32 %v177, %v273
    %v275 = vpop.f32.mrb[0].mxu0
    %276 = vmatprep.mubr.f32.mxu0 0.0
    %277 = vmatmul.mubr.f32.gmra.mrb[0].mxu0 %v197
    %v278 = vpop.f32.mrb[0].mxu0
    %v279 = vadd.f32 %v182, %v278
    %v280 = vpop.f32.mrb[0].mxu0
    %281 = vmatprep.mubr.f32.mxu0 0.0
    %282 = vmatmul.mubr.f32.gmra.mrb[0].mxu0 %v200
    %v283 = vpop.f32.mrb[0].mxu0
    %v284 = vadd.f32 %v187, %v283
    %v285 = vpop.f32.mrb[0].mxu0
    %286 = vdwg.mxu0
    %287 = vmatprep.subr.mxu0 0.0
    %288 = vmatpush1.msra.mxu0 %v84
    %289 = vmatprep.subr.mxu0 0.0
    %290 = vmatpush1.msra.mxu0 %v85
    %291 = vmatprep.subr.mxu0 0.0
    %292 = vmatpush1.msra.mxu0 %v86
    %293 = vmatprep.subr.mxu0 0.0
    %294 = vmatpush1.msra.mxu0 %v87
    %295 = vmatprep.subr.mxu0 0.0
    %296 = vmatpush1.msra.mxu0 0.0
    %297 = vmatprep.subr.mxu0 0.0
    %298 = vmatpush1.msra.mxu0 0.0
    %299 = vmatprep.subr.mxu0 0.0
    %300 = vmatpush1.msra.mxu0 0.0
    %301 = vmatprep.subr.mxu0 0.0
    %302 = vmatpush1.msra.mxu0 0.0
    %303 = vmatprep.subr.mxu0 0.0
    %304 = vmatpush1.msra.mxu0 0.0
    %305 = vmatprep.subr.mxu0 0.0
    %306 = vmatpush1.msra.mxu0 0.0
    %307 = vmatprep.subr.mxu0 0.0
    %308 = vmatpush1.msra.mxu0 0.0
    %309 = vmatprep.subr.mxu0 0.0
    %310 = vmatpush1.msra.mxu0 0.0
    %311 = vmatprep.subr.mxu0 0.0
    %312 = vmatpush1.msra.mxu0 0.0
    %313 = vmatprep.subr.mxu0 0.0
    %314 = vmatpush1.msra.mxu0 0.0
    %315 = vmatprep.subr.mxu0 0.0
    %316 = vmatpush1.msra.mxu0 0.0
    %317 = vmatprep.subr.mxu0 0.0
    %318 = vmatpush1.msra.mxu0 0.0
    %319 = vmatprep.subr.mxu0 0.0
    %320 = vmatpush1.msra.mxu0 0.0
    %321 = vmatprep.subr.mxu0 0.0
    %322 = vmatpush1.msra.mxu0 0.0
    %323 = vmatprep.subr.mxu0 0.0
    %324 = vmatpush1.msra.mxu0 0.0
    %325 = vmatprep.subr.mxu0 0.0
    %326 = vmatpush1.msra.mxu0 0.0
    %327 = vmatprep.subr.mxu0 0.0
    %328 = vmatpush1.msra.mxu0 0.0
    %329 = vmatprep.subr.mxu0 0.0
    %330 = vmatpush1.msra.mxu0 0.0
    %331 = vmatprep.subr.mxu0 0.0
    %332 = vmatpush1.msra.mxu0 0.0
    %333 = vmatprep.subr.mxu0 0.0
    %334 = vmatpush1.msra.mxu0 0.0
    %335 = vmatprep.subr.mxu0 0.0
    %336 = vmatpush1.msra.mxu0 0.0
    %337 = vmatprep.subr.mxu0 0.0
    %338 = vmatpush1.msra.mxu0 0.0
    %339 = vmatprep.subr.mxu0 0.0
    %340 = vmatpush1.msra.mxu0 0.0
    %341 = vmatprep.subr.mxu0 0.0
    %342 = vmatpush1.msra.mxu0 0.0
    %343 = vmatprep.subr.mxu0 0.0
    %344 = vmatpush1.msra.mxu0 0.0
    %345 = vmatprep.subr.mxu0 0.0
    %346 = vmatpush1.msra.mxu0 0.0
    %347 = vmatprep.subr.mxu0 0.0
    %348 = vmatpush1.msra.mxu0 0.0
    %349 = vmatprep.subr.mxu0 0.0
    %350 = vmatpush1.msra.mxu0 0.0
    %351 = vmatprep.mubr.f32.mxu0 0.0
    %352 = vmatmul.mubr.f32.gmra.mrb[0].mxu0 %v94
    %v353 = vpop.f32.mrb[0].mxu0
    %v354 = vadd.f32 0.0, %v353
    %v355 = vpop.f32.mrb[0].mxu0
    %356 = vmatprep.mubr.f32.mxu0 0.0
    %357 = vmatmul.mubr.f32.gmra.mrb[0].mxu0 %v97
    %v358 = vpop.f32.mrb[0].mxu0
    %v359 = vadd.f32 0.0, %v358
    %v360 = vpop.f32.mrb[0].mxu0
    %361 = vmatprep.mubr.f32.mxu0 0.0
    %362 = vmatmul.mubr.f32.gmra.mrb[0].mxu0 %v100
    %v363 = vpop.f32.mrb[0].mxu0
    %v364 = vadd.f32 0.0, %v363
    %v365 = vpop.f32.mrb[0].mxu0
    %366 = vmatprep.mubr.f32.mxu0 0.0
    %367 = vmatmul.mubr.f32.gmra.mrb[0].mxu0 %v103
    %v368 = vpop.f32.mrb[0].mxu0
    %v369 = vadd.f32 0.0, %v368
    %v370 = vpop.f32.mrb[0].mxu0
    %371 = vdwg.mxu0
    %372 = vmatprep.subr.mxu0 0.0
    %373 = vmatpush1.msra.mxu0 %v68
    %374 = vmatprep.subr.mxu0 0.0
    %375 = vmatpush1.msra.mxu0 %v69
    %376 = vmatprep.subr.mxu0 0.0
    %377 = vmatpush1.msra.mxu0 %v70
    %378 = vmatprep.subr.mxu0 0.0
    %379 = vmatpush1.msra.mxu0 %v71
    %380 = vmatprep.subr.mxu0 0.0
    %381 = vmatpush1.msra.mxu0 0.0
    %382 = vmatprep.subr.mxu0 0.0
    %383 = vmatpush1.msra.mxu0 0.0
    %384 = vmatprep.subr.mxu0 0.0
    %385 = vmatpush1.msra.mxu0 0.0
    %386 = vmatprep.subr.mxu0 0.0
    %387 = vmatpush1.msra.mxu0 0.0
    %388 = vmatprep.subr.mxu0 0.0
    %389 = vmatpush1.msra.mxu0 0.0
    %390 = vmatprep.subr.mxu0 0.0
    %391 = vmatpush1.msra.mxu0 0.0
    %392 = vmatprep.subr.mxu0 0.0
    %393 = vmatpush1.msra.mxu0 0.0
    %394 = vmatprep.subr.mxu0 0.0
    %395 = vmatpush1.msra.mxu0 0.0
    %396 = vmatprep.subr.mxu0 0.0
    %397 = vmatpush1.msra.mxu0 0.0
    %398 = vmatprep.subr.mxu0 0.0
    %399 = vmatpush1.msra.mxu0 0.0
    %400 = vmatprep.subr.mxu0 0.0
    %401 = vmatpush1.msra.mxu0 0.0
    %402 = vmatprep.subr.mxu0 0.0
    %403 = vmatpush1.msra.mxu0 0.0
    %404 = vmatprep.subr.mxu0 0.0
    %405 = vmatpush1.msra.mxu0 0.0
    %406 = vmatprep.subr.mxu0 0.0
    %407 = vmatpush1.msra.mxu0 0.0
    %408 = vmatprep.subr.mxu0 0.0
    %409 = vmatpush1.msra.mxu0 0.0
    %410 = vmatprep.subr.mxu0 0.0
    %411 = vmatpush1.msra.mxu0 0.0
    %412 = vmatprep.subr.mxu0 0.0
    %413 = vmatpush1.msra.mxu0 0.0
    %414 = vmatprep.subr.mxu0 0.0
    %415 = vmatpush1.msra.mxu0 0.0
    %416 = vmatprep.subr.mxu0 0.0
    %417 = vmatpush1.msra.mxu0 0.0
    %418 = vmatprep.subr.mxu0 0.0
    %419 = vmatpush1.msra.mxu0 0.0
    %420 = vmatprep.subr.mxu0 0.0
    %421 = vmatpush1.msra.mxu0 0.0
    %422 = vmatprep.subr.mxu0 0.0
    %423 = vmatpush1.msra.mxu0 0.0
    %424 = vmatprep.subr.mxu0 0.0
    %425 = vmatpush1.msra.mxu0 0.0
    %426 = vmatprep.subr.mxu0 0.0
    %427 = vmatpush1.msra.mxu0 0.0
    %428 = vmatprep.subr.mxu0 0.0
    %429 = vmatpush1.msra.mxu0 0.0
    %430 = vmatprep.subr.mxu0 0.0
    %431 = vmatpush1.msra.mxu0 0.0
    %432 = vmatprep.subr.mxu0 0.0
    %433 = vmatpush1.msra.mxu0 0.0
    %434 = vmatprep.subr.mxu0 0.0
    %435 = vmatpush1.msra.mxu0 0.0
    %436 = vmatprep.mubr.f32.mxu0 0.0
    %437 = vmatmul.mubr.f32.gmra.mrb[0].mxu0 %v191
    %v438 = vpop.f32.mrb[0].mxu0
    %v439 = vadd.f32 %v354, %v438
    %v440 = vpop.f32.mrb[0].mxu0
    %441 = vmatprep.mubr.f32.mxu0 0.0
    %442 = vmatmul.mubr.f32.gmra.mrb[0].mxu0 %v194
    %v443 = vpop.f32.mrb[0].mxu0
    %v444 = vadd.f32 %v359, %v443
    %v445 = vpop.f32.mrb[0].mxu0
    %446 = vmatprep.mubr.f32.mxu0 0.0
    %447 = vmatmul.mubr.f32.gmra.mrb[0].mxu0 %v197
    %v448 = vpop.f32.mrb[0].mxu0
    %v449 = vadd.f32 %v364, %v448
    %v450 = vpop.f32.mrb[0].mxu0
    %451 = vmatprep.mubr.f32.mxu0 0.0
    %452 = vmatmul.mubr.f32.gmra.mrb[0].mxu0 %v200
    %v453 = vpop.f32.mrb[0].mxu0
    %v454 = vadd.f32 %v369, %v453
    %v455 = vpop.f32.mrb[0].mxu0
    %456 = vdwg.mxu0
    %v457 = vld [vmem:[#allocation9 + $0x20] sm:$0xf]
    %v458 = vld [vmem:[#allocation9 + $0x24] sm:$0xf]
    %v459 = vld [vmem:[#allocation9 + $0x28] sm:$0xf]
    %v460 = vld [vmem:[#allocation9 + $0x2c] sm:$0xf]
    %v461 = vunpack.c.l.bf16 %v457
    %v462 = vunpack.c.l.bf16 %v458
    %v463 = vunpack.c.l.bf16 %v459
    %v464 = vunpack.c.l.bf16 %v460
    %v465 = vld [vmem:[#allocation9 + $0x70] sm:$0xf]
    %v466 = vld [vmem:[#allocation9 + $0x74] sm:$0xf]
    %v467 = vld [vmem:[#allocation9 + $0x78] sm:$0xf]
    %v468 = vld [vmem:[#allocation9 + $0x7c] sm:$0xf]
    %v469 = vunpack.c.l.bf16 %v465
    %v470 = vunpack.c.l.bf16 %v466
    %v471 = vunpack.c.l.bf16 %v467
    %v472 = vunpack.c.l.bf16 %v468
    %v473 = vld [vmem:[#allocation6 + $0x2] sm:$0xff]
    %v474 = vld [vmem:[#allocation6 + $0xa] sm:$0xff]
    %v475 = vld [vmem:[#allocation6 + $0x12] sm:$0xff]
    %v476 = vld [vmem:[#allocation6 + $0x1a] sm:$0xf]
    %v478 = vsel %vm92, %v473, 0
    %v481 = vsel %vm92, %v474, 0
    %v484 = vsel %vm92, %v475, 0
    %v487 = vsel %vm92, %v476, 0
    %489 = vmatprep.subr.mxu0 0.0
    %490 = vmatpush1.msra.mxu0 %v461
    %491 = vmatprep.subr.mxu0 0.0
    %492 = vmatpush1.msra.mxu0 %v462
    %493 = vmatprep.subr.mxu0 0.0
    %494 = vmatpush1.msra.mxu0 %v463
    %495 = vmatprep.subr.mxu0 0.0
    %496 = vmatpush1.msra.mxu0 %v464
    %497 = vmatprep.subr.mxu0 0.0
    %498 = vmatpush1.msra.mxu0 0.0
    %499 = vmatprep.subr.mxu0 0.0
    %500 = vmatpush1.msra.mxu0 0.0
    %501 = vmatprep.subr.mxu0 0.0
    %502 = vmatpush1.msra.mxu0 0.0
    %503 = vmatprep.subr.mxu0 0.0
    %504 = vmatpush1.msra.mxu0 0.0
    %505 = vmatprep.subr.mxu0 0.0
    %506 = vmatpush1.msra.mxu0 0.0
    %507 = vmatprep.subr.mxu0 0.0
    %508 = vmatpush1.msra.mxu0 0.0
    %509 = vmatprep.subr.mxu0 0.0
    %510 = vmatpush1.msra.mxu0 0.0
    %511 = vmatprep.subr.mxu0 0.0
    %512 = vmatpush1.msra.mxu0 0.0
    %513 = vmatprep.subr.mxu0 0.0
    %514 = vmatpush1.msra.mxu0 0.0
    %515 = vmatprep.subr.mxu0 0.0
    %516 = vmatpush1.msra.mxu0 0.0
    %517 = vmatprep.subr.mxu0 0.0
    %518 = vmatpush1.msra.mxu0 0.0
    %519 = vmatprep.subr.mxu0 0.0
    %520 = vmatpush1.msra.mxu0 0.0
    %521 = vmatprep.subr.mxu0 0.0
    %522 = vmatpush1.msra.mxu0 0.0
    %523 = vmatprep.subr.mxu0 0.0
    %524 = vmatpush1.msra.mxu0 0.0
    %525 = vmatprep.subr.mxu0 0.0
    %526 = vmatpush1.msra.mxu0 0.0
    %527 = vmatprep.subr.mxu0 0.0
    %528 = vmatpush1.msra.mxu0 0.0
    %529 = vmatprep.subr.mxu0 0.0
    %530 = vmatpush1.msra.mxu0 0.0
    %531 = vmatprep.subr.mxu0 0.0
    %532 = vmatpush1.msra.mxu0 0.0
    %533 = vmatprep.subr.mxu0 0.0
    %534 = vmatpush1.msra.mxu0 0.0
    %535 = vmatprep.subr.mxu0 0.0
    %536 = vmatpush1.msra.mxu0 0.0
    %537 = vmatprep.subr.mxu0 0.0
    %538 = vmatpush1.msra.mxu0 0.0
    %539 = vmatprep.subr.mxu0 0.0
    %540 = vmatpush1.msra.mxu0 0.0
    %541 = vmatprep.subr.mxu0 0.0
    %542 = vmatpush1.msra.mxu0 0.0
    %543 = vmatprep.subr.mxu0 0.0
    %544 = vmatpush1.msra.mxu0 0.0
    %545 = vmatprep.subr.mxu0 0.0
    %546 = vmatpush1.msra.mxu0 0.0
    %547 = vmatprep.subr.mxu0 0.0
    %548 = vmatpush1.msra.mxu0 0.0
    %549 = vmatprep.subr.mxu0 0.0
    %550 = vmatpush1.msra.mxu0 0.0
    %551 = vmatprep.subr.mxu0 0.0
    %552 = vmatpush1.msra.mxu0 0.0
    %553 = vmatprep.mubr.f32.mxu0 0.0
    %554 = vmatmul.mubr.f32.gmra.mrb[0].mxu0 %v478
    %v555 = vpop.f32.mrb[0].mxu0
    %v556 = vadd.f32 0.0, %v555
    %v557 = vpop.f32.mrb[0].mxu0
    %558 = vmatprep.mubr.f32.mxu0 0.0
    %559 = vmatmul.mubr.f32.gmra.mrb[0].mxu0 %v481
    %v560 = vpop.f32.mrb[0].mxu0
    %v561 = vadd.f32 0.0, %v560
    %v562 = vpop.f32.mrb[0].mxu0
    %563 = vmatprep.mubr.f32.mxu0 0.0
    %564 = vmatmul.mubr.f32.gmra.mrb[0].mxu0 %v484
    %v565 = vpop.f32.mrb[0].mxu0
    %v566 = vadd.f32 0.0, %v565
    %v567 = vpop.f32.mrb[0].mxu0
    %568 = vmatprep.mubr.f32.mxu0 0.0
    %569 = vmatmul.mubr.f32.gmra.mrb[0].mxu0 %v487
    %v570 = vpop.f32.mrb[0].mxu0
    %v571 = vadd.f32 0.0, %v570
    %v572 = vpop.f32.mrb[0].mxu0
    %573 = vdwg.mxu0
    %v574 = vadd.f32 %v269, %v556
    %v575 = vadd.f32 %v274, %v561
    %v576 = vadd.f32 %v279, %v566
    %v577 = vadd.f32 %v284, %v571
    %578 = vmatprep.subr.mxu0 0.0
    %579 = vmatpush1.msra.mxu0 %v469
    %580 = vmatprep.subr.mxu0 0.0
    %581 = vmatpush1.msra.mxu0 %v470
    %582 = vmatprep.subr.mxu0 0.0
    %583 = vmatpush1.msra.mxu0 %v471
    %584 = vmatprep.subr.mxu0 0.0
    %585 = vmatpush1.msra.mxu0 %v472
    %586 = vmatprep.subr.mxu0 0.0
    %587 = vmatpush1.msra.mxu0 0.0
    %588 = vmatprep.subr.mxu0 0.0
    %589 = vmatpush1.msra.mxu0 0.0
    %590 = vmatprep.subr.mxu0 0.0
    %591 = vmatpush1.msra.mxu0 0.0
    %592 = vmatprep.subr.mxu0 0.0
    %593 = vmatpush1.msra.mxu0 0.0
    %594 = vmatprep.subr.mxu0 0.0
    %595 = vmatpush1.msra.mxu0 0.0
    %596 = vmatprep.subr.mxu0 0.0
    %597 = vmatpush1.msra.mxu0 0.0
    %598 = vmatprep.subr.mxu0 0.0
    %599 = vmatpush1.msra.mxu0 0.0
    %600 = vmatprep.subr.mxu0 0.0
    %601 = vmatpush1.msra.mxu0 0.0
    %602 = vmatprep.subr.mxu0 0.0
    %603 = vmatpush1.msra.mxu0 0.0
    %604 = vmatprep.subr.mxu0 0.0
    %605 = vmatpush1.msra.mxu0 0.0
    %606 = vmatprep.subr.mxu0 0.0
    %607 = vmatpush1.msra.mxu0 0.0
    %608 = vmatprep.subr.mxu0 0.0
    %609 = vmatpush1.msra.mxu0 0.0
    %610 = vmatprep.subr.mxu0 0.0
    %611 = vmatpush1.msra.mxu0 0.0
    %612 = vmatprep.subr.mxu0 0.0
    %613 = vmatpush1.msra.mxu0 0.0
    %614 = vmatprep.subr.mxu0 0.0
    %615 = vmatpush1.msra.mxu0 0.0
    %616 = vmatprep.subr.mxu0 0.0
    %617 = vmatpush1.msra.mxu0 0.0
    %618 = vmatprep.subr.mxu0 0.0
    %619 = vmatpush1.msra.mxu0 0.0
    %620 = vmatprep.subr.mxu0 0.0
    %621 = vmatpush1.msra.mxu0 0.0
    %622 = vmatprep.subr.mxu0 0.0
    %623 = vmatpush1.msra.mxu0 0.0
    %624 = vmatprep.subr.mxu0 0.0
    %625 = vmatpush1.msra.mxu0 0.0
    %626 = vmatprep.subr.mxu0 0.0
    %627 = vmatpush1.msra.mxu0 0.0
    %628 = vmatprep.subr.mxu0 0.0
    %629 = vmatpush1.msra.mxu0 0.0
    %630 = vmatprep.subr.mxu0 0.0
    %631 = vmatpush1.msra.mxu0 0.0
    %632 = vmatprep.subr.mxu0 0.0
    %633 = vmatpush1.msra.mxu0 0.0
    %634 = vmatprep.subr.mxu0 0.0
    %635 = vmatpush1.msra.mxu0 0.0
    %636 = vmatprep.subr.mxu0 0.0
    %637 = vmatpush1.msra.mxu0 0.0
    %638 = vmatprep.subr.mxu0 0.0
    %639 = vmatpush1.msra.mxu0 0.0
    %640 = vmatprep.subr.mxu0 0.0
    %641 = vmatpush1.msra.mxu0 0.0
    %642 = vmatprep.mubr.f32.mxu0 0.0
    %643 = vmatmul.mubr.f32.gmra.mrb[0].mxu0 %v478
    %v644 = vpop.f32.mrb[0].mxu0
    %v645 = vadd.f32 0.0, %v644
    %v646 = vpop.f32.mrb[0].mxu0
    %647 = vmatprep.mubr.f32.mxu0 0.0
    %648 = vmatmul.mubr.f32.gmra.mrb[0].mxu0 %v481
    %v649 = vpop.f32.mrb[0].mxu0
    %v650 = vadd.f32 0.0, %v649
    %v651 = vpop.f32.mrb[0].mxu0
    %652 = vmatprep.mubr.f32.mxu0 0.0
    %653 = vmatmul.mubr.f32.gmra.mrb[0].mxu0 %v484
    %v654 = vpop.f32.mrb[0].mxu0
    %v655 = vadd.f32 0.0, %v654
    %v656 = vpop.f32.mrb[0].mxu0
    %657 = vmatprep.mubr.f32.mxu0 0.0
    %658 = vmatmul.mubr.f32.gmra.mrb[0].mxu0 %v487
    %v659 = vpop.f32.mrb[0].mxu0
    %v660 = vadd.f32 0.0, %v659
    %v661 = vpop.f32.mrb[0].mxu0
    %662 = vdwg.mxu0
    %v663 = vadd.f32 %v439, %v645
    %v664 = vadd.f32 %v444, %v650
    %v665 = vadd.f32 %v449, %v655
    %v666 = vadd.f32 %v454, %v660
    %v667 = vld [vmem:[#allocation9 + $0x30] sm:$0xf]
    %v668 = vld [vmem:[#allocation9 + $0x34] sm:$0xf]
    %v669 = vld [vmem:[#allocation9 + $0x38] sm:$0xf]
    %v670 = vld [vmem:[#allocation9 + $0x3c] sm:$0xf]
    %v671 = vunpack.c.l.bf16 %v667
    %v672 = vunpack.c.l.bf16 %v668
    %v673 = vunpack.c.l.bf16 %v669
    %v674 = vunpack.c.l.bf16 %v670
    %v675 = vld [vmem:[#allocation9 + $0x80] sm:$0xf]
    %v676 = vld [vmem:[#allocation9 + $0x84] sm:$0xf]
    %v677 = vld [vmem:[#allocation9 + $0x88] sm:$0xf]
    %v678 = vld [vmem:[#allocation9 + $0x8c] sm:$0xf]
    %v679 = vunpack.c.l.bf16 %v675
    %v680 = vunpack.c.l.bf16 %v676
    %v681 = vunpack.c.l.bf16 %v677
    %v682 = vunpack.c.l.bf16 %v678
    %v683 = vld [vmem:[#allocation6 + $0x3] sm:$0xff]
    %v684 = vld [vmem:[#allocation6 + $0xb] sm:$0xff]
    %v685 = vld [vmem:[#allocation6 + $0x13] sm:$0xff]
    %v686 = vld [vmem:[#allocation6 + $0x1b] sm:$0xf]
    %v688 = vsel %vm92, %v683, 0
    %v691 = vsel %vm92, %v684, 0
    %v694 = vsel %vm92, %v685, 0
    %v697 = vsel %vm92, %v686, 0
    %699 = vmatprep.subr.mxu0 0.0
    %700 = vmatpush1.msra.mxu0 %v671
    %701 = vmatprep.subr.mxu0 0.0
    %702 = vmatpush1.msra.mxu0 %v672
    %703 = vmatprep.subr.mxu0 0.0
    %704 = vmatpush1.msra.mxu0 %v673
    %705 = vmatprep.subr.mxu0 0.0
    %706 = vmatpush1.msra.mxu0 %v674
    %707 = vmatprep.subr.mxu0 0.0
    %708 = vmatpush1.msra.mxu0 0.0
    %709 = vmatprep.subr.mxu0 0.0
    %710 = vmatpush1.msra.mxu0 0.0
    %711 = vmatprep.subr.mxu0 0.0
    %712 = vmatpush1.msra.mxu0 0.0
    %713 = vmatprep.subr.mxu0 0.0
    %714 = vmatpush1.msra.mxu0 0.0
    %715 = vmatprep.subr.mxu0 0.0
    %716 = vmatpush1.msra.mxu0 0.0
    %717 = vmatprep.subr.mxu0 0.0
    %718 = vmatpush1.msra.mxu0 0.0
    %719 = vmatprep.subr.mxu0 0.0
    %720 = vmatpush1.msra.mxu0 0.0
    %721 = vmatprep.subr.mxu0 0.0
    %722 = vmatpush1.msra.mxu0 0.0
    %723 = vmatprep.subr.mxu0 0.0
    %724 = vmatpush1.msra.mxu0 0.0
    %725 = vmatprep.subr.mxu0 0.0
    %726 = vmatpush1.msra.mxu0 0.0
    %727 = vmatprep.subr.mxu0 0.0
    %728 = vmatpush1.msra.mxu0 0.0
    %729 = vmatprep.subr.mxu0 0.0
    %730 = vmatpush1.msra.mxu0 0.0
    %731 = vmatprep.subr.mxu0 0.0
    %732 = vmatpush1.msra.mxu0 0.0
    %733 = vmatprep.subr.mxu0 0.0
    %734 = vmatpush1.msra.mxu0 0.0
    %735 = vmatprep.subr.mxu0 0.0
    %736 = vmatpush1.msra.mxu0 0.0
    %737 = vmatprep.subr.mxu0 0.0
    %738 = vmatpush1.msra.mxu0 0.0
    %739 = vmatprep.subr.mxu0 0.0
    %740 = vmatpush1.msra.mxu0 0.0
    %741 = vmatprep.subr.mxu0 0.0
    %742 = vmatpush1.msra.mxu0 0.0
    %743 = vmatprep.subr.mxu0 0.0
    %744 = vmatpush1.msra.mxu0 0.0
    %745 = vmatprep.subr.mxu0 0.0
    %746 = vmatpush1.msra.mxu0 0.0
    %747 = vmatprep.subr.mxu0 0.0
    %748 = vmatpush1.msra.mxu0 0.0
    %749 = vmatprep.subr.mxu0 0.0
    %750 = vmatpush1.msra.mxu0 0.0
    %751 = vmatprep.subr.mxu0 0.0
    %752 = vmatpush1.msra.mxu0 0.0
    %753 = vmatprep.subr.mxu0 0.0
    %754 = vmatpush1.msra.mxu0 0.0
    %755 = vmatprep.subr.mxu0 0.0
    %756 = vmatpush1.msra.mxu0 0.0
    %757 = vmatprep.subr.mxu0 0.0
    %758 = vmatpush1.msra.mxu0 0.0
    %759 = vmatprep.subr.mxu0 0.0
    %760 = vmatpush1.msra.mxu0 0.0
    %761 = vmatprep.subr.mxu0 0.0
    %762 = vmatpush1.msra.mxu0 0.0
    %763 = vmatprep.mubr.f32.mxu0 0.0
    %764 = vmatmul.mubr.f32.gmra.mrb[0].mxu0 %v688
    %v765 = vpop.f32.mrb[0].mxu0
    %v766 = vadd.f32 0.0, %v765
    %v767 = vpop.f32.mrb[0].mxu0
    %768 = vmatprep.mubr.f32.mxu0 0.0
    %769 = vmatmul.mubr.f32.gmra.mrb[0].mxu0 %v691
    %v770 = vpop.f32.mrb[0].mxu0
    %v771 = vadd.f32 0.0, %v770
    %v772 = vpop.f32.mrb[0].mxu0
    %773 = vmatprep.mubr.f32.mxu0 0.0
    %774 = vmatmul.mubr.f32.gmra.mrb[0].mxu0 %v694
    %v775 = vpop.f32.mrb[0].mxu0
    %v776 = vadd.f32 0.0, %v775
    %v777 = vpop.f32.mrb[0].mxu0
    %778 = vmatprep.mubr.f32.mxu0 0.0
    %779 = vmatmul.mubr.f32.gmra.mrb[0].mxu0 %v697
    %v780 = vpop.f32.mrb[0].mxu0
    %v781 = vadd.f32 0.0, %v780
    %v782 = vpop.f32.mrb[0].mxu0
    %783 = vdwg.mxu0
    %v784 = vadd.f32 %v574, %v766
    %v785 = vadd.f32 %v575, %v771
    %v786 = vadd.f32 %v576, %v776
    %v787 = vadd.f32 %v577, %v781
    %788 = vmatprep.subr.mxu0 0.0
    %789 = vmatpush1.msra.mxu0 %v679
    %790 = vmatprep.subr.mxu0 0.0
    %791 = vmatpush1.msra.mxu0 %v680
    %792 = vmatprep.subr.mxu0 0.0
    %793 = vmatpush1.msra.mxu0 %v681
    %794 = vmatprep.subr.mxu0 0.0
    %795 = vmatpush1.msra.mxu0 %v682
    %796 = vmatprep.subr.mxu0 0.0
    %797 = vmatpush1.msra.mxu0 0.0
    %798 = vmatprep.subr.mxu0 0.0
    %799 = vmatpush1.msra.mxu0 0.0
    %800 = vmatprep.subr.mxu0 0.0
    %801 = vmatpush1.msra.mxu0 0.0
    %802 = vmatprep.subr.mxu0 0.0
    %803 = vmatpush1.msra.mxu0 0.0
    %804 = vmatprep.subr.mxu0 0.0
    %805 = vmatpush1.msra.mxu0 0.0
    %806 = vmatprep.subr.mxu0 0.0
    %807 = vmatpush1.msra.mxu0 0.0
    %808 = vmatprep.subr.mxu0 0.0
    %809 = vmatpush1.msra.mxu0 0.0
    %810 = vmatprep.subr.mxu0 0.0
    %811 = vmatpush1.msra.mxu0 0.0
    %812 = vmatprep.subr.mxu0 0.0
    %813 = vmatpush1.msra.mxu0 0.0
    %814 = vmatprep.subr.mxu0 0.0
    %815 = vmatpush1.msra.mxu0 0.0
    %816 = vmatprep.subr.mxu0 0.0
    %817 = vmatpush1.msra.mxu0 0.0
    %818 = vmatprep.subr.mxu0 0.0
    %819 = vmatpush1.msra.mxu0 0.0
    %820 = vmatprep.subr.mxu0 0.0
    %821 = vmatpush1.msra.mxu0 0.0
    %822 = vmatprep.subr.mxu0 0.0
    %823 = vmatpush1.msra.mxu0 0.0
    %824 = vmatprep.subr.mxu0 0.0
    %825 = vmatpush1.msra.mxu0 0.0
    %826 = vmatprep.subr.mxu0 0.0
    %827 = vmatpush1.msra.mxu0 0.0
    %828 = vmatprep.subr.mxu0 0.0
    %829 = vmatpush1.msra.mxu0 0.0
    %830 = vmatprep.subr.mxu0 0.0
    %831 = vmatpush1.msra.mxu0 0.0
    %832 = vmatprep.subr.mxu0 0.0
    %833 = vmatpush1.msra.mxu0 0.0
    %834 = vmatprep.subr.mxu0 0.0
    %835 = vmatpush1.msra.mxu0 0.0
    %836 = vmatprep.subr.mxu0 0.0
    %837 = vmatpush1.msra.mxu0 0.0
    %838 = vmatprep.subr.mxu0 0.0
    %839 = vmatpush1.msra.mxu0 0.0
    %840 = vmatprep.subr.mxu0 0.0
    %841 = vmatpush1.msra.mxu0 0.0
    %842 = vmatprep.subr.mxu0 0.0
    %843 = vmatpush1.msra.mxu0 0.0
    %844 = vmatprep.subr.mxu0 0.0
    %845 = vmatpush1.msra.mxu0 0.0
    %846 = vmatprep.subr.mxu0 0.0
    %847 = vmatpush1.msra.mxu0 0.0
    %848 = vmatprep.subr.mxu0 0.0
    %849 = vmatpush1.msra.mxu0 0.0
    %850 = vmatprep.subr.mxu0 0.0
    %851 = vmatpush1.msra.mxu0 0.0
    %852 = vmatprep.mubr.f32.mxu0 0.0
    %853 = vmatmul.mubr.f32.gmra.mrb[0].mxu0 %v688
    %v854 = vpop.f32.mrb[0].mxu0
    %v855 = vadd.f32 0.0, %v854
    %v856 = vpop.f32.mrb[0].mxu0
    %857 = vmatprep.mubr.f32.mxu0 0.0
    %858 = vmatmul.mubr.f32.gmra.mrb[0].mxu0 %v691
    %v859 = vpop.f32.mrb[0].mxu0
    %v860 = vadd.f32 0.0, %v859
    %v861 = vpop.f32.mrb[0].mxu0
    %862 = vmatprep.mubr.f32.mxu0 0.0
    %863 = vmatmul.mubr.f32.gmra.mrb[0].mxu0 %v694
    %v864 = vpop.f32.mrb[0].mxu0
    %v865 = vadd.f32 0.0, %v864
    %v866 = vpop.f32.mrb[0].mxu0
    %867 = vmatprep.mubr.f32.mxu0 0.0
    %868 = vmatmul.mubr.f32.gmra.mrb[0].mxu0 %v697
    %v869 = vpop.f32.mrb[0].mxu0
    %v870 = vadd.f32 0.0, %v869
    %v871 = vpop.f32.mrb[0].mxu0
    %872 = vdwg.mxu0
    %v873 = vadd.f32 %v663, %v855
    %v874 = vadd.f32 %v664, %v860
    %v875 = vadd.f32 %v665, %v865
    %v876 = vadd.f32 %v666, %v870
    %v877 = vld [vmem:[#allocation9 + $0x40] sm:$0xf]
    %v878 = vld [vmem:[#allocation9 + $0x44] sm:$0xf]
    %v879 = vld [vmem:[#allocation9 + $0x48] sm:$0xf]
    %v880 = vld [vmem:[#allocation9 + $0x4c] sm:$0xf]
    %v881 = vunpack.c.l.bf16 %v877
    %v882 = vunpack.c.l.bf16 %v878
    %v883 = vunpack.c.l.bf16 %v879
    %v884 = vunpack.c.l.bf16 %v880
    %v885 = vld [vmem:[#allocation9 + $0x90] sm:$0xf]
    %v886 = vld [vmem:[#allocation9 + $0x94] sm:$0xf]
    %v887 = vld [vmem:[#allocation9 + $0x98] sm:$0xf]
    %v888 = vld [vmem:[#allocation9 + $0x9c] sm:$0xf]
    %v889 = vunpack.c.l.bf16 %v885
    %v890 = vunpack.c.l.bf16 %v886
    %v891 = vunpack.c.l.bf16 %v887
    %v892 = vunpack.c.l.bf16 %v888
    %v893 = vld [vmem:[#allocation6 + $0x4] sm:$0xff]
    %v894 = vld [vmem:[#allocation6 + $0xc] sm:$0xff]
    %v895 = vld [vmem:[#allocation6 + $0x14] sm:$0xff]
    %v896 = vld [vmem:[#allocation6 + $0x1c] sm:$0xf]
    %v898 = vsel %vm92, %v893, 0
    %v901 = vsel %vm92, %v894, 0
    %v904 = vsel %vm92, %v895, 0
    %v907 = vsel %vm92, %v896, 0
    %909 = vmatprep.subr.mxu0 0.0
    %910 = vmatpush1.msra.mxu0 %v881
    %911 = vmatprep.subr.mxu0 0.0
    %912 = vmatpush1.msra.mxu0 %v882
    %913 = vmatprep.subr.mxu0 0.0
    %914 = vmatpush1.msra.mxu0 %v883
    %915 = vmatprep.subr.mxu0 0.0
    %916 = vmatpush1.msra.mxu0 %v884
    %917 = vmatprep.subr.mxu0 0.0
    %918 = vmatpush1.msra.mxu0 0.0
    %919 = vmatprep.subr.mxu0 0.0
    %920 = vmatpush1.msra.mxu0 0.0
    %921 = vmatprep.subr.mxu0 0.0
    %922 = vmatpush1.msra.mxu0 0.0
    %923 = vmatprep.subr.mxu0 0.0
    %924 = vmatpush1.msra.mxu0 0.0
    %925 = vmatprep.subr.mxu0 0.0
    %926 = vmatpush1.msra.mxu0 0.0
    %927 = vmatprep.subr.mxu0 0.0
    %928 = vmatpush1.msra.mxu0 0.0
    %929 = vmatprep.subr.mxu0 0.0
    %930 = vmatpush1.msra.mxu0 0.0
    %931 = vmatprep.subr.mxu0 0.0
    %932 = vmatpush1.msra.mxu0 0.0
    %933 = vmatprep.subr.mxu0 0.0
    %934 = vmatpush1.msra.mxu0 0.0
    %935 = vmatprep.subr.mxu0 0.0
    %936 = vmatpush1.msra.mxu0 0.0
    %937 = vmatprep.subr.mxu0 0.0
    %938 = vmatpush1.msra.mxu0 0.0
    %939 = vmatprep.subr.mxu0 0.0
    %940 = vmatpush1.msra.mxu0 0.0
    %941 = vmatprep.subr.mxu0 0.0
    %942 = vmatpush1.msra.mxu0 0.0
    %943 = vmatprep.subr.mxu0 0.0
    %944 = vmatpush1.msra.mxu0 0.0
    %945 = vmatprep.subr.mxu0 0.0
    %946 = vmatpush1.msra.mxu0 0.0
    %947 = vmatprep.subr.mxu0 0.0
    %948 = vmatpush1.msra.mxu0 0.0
    %949 = vmatprep.subr.mxu0 0.0
    %950 = vmatpush1.msra.mxu0 0.0
    %951 = vmatprep.subr.mxu0 0.0
    %952 = vmatpush1.msra.mxu0 0.0
    %953 = vmatprep.subr.mxu0 0.0
    %954 = vmatpush1.msra.mxu0 0.0
    %955 = vmatprep.subr.mxu0 0.0
    %956 = vmatpush1.msra.mxu0 0.0
    %957 = vmatprep.subr.mxu0 0.0
    %958 = vmatpush1.msra.mxu0 0.0
    %959 = vmatprep.subr.mxu0 0.0
    %960 = vmatpush1.msra.mxu0 0.0
    %961 = vmatprep.subr.mxu0 0.0
    %962 = vmatpush1.msra.mxu0 0.0
    %963 = vmatprep.subr.mxu0 0.0
    %964 = vmatpush1.msra.mxu0 0.0
    %965 = vmatprep.subr.mxu0 0.0
    %966 = vmatpush1.msra.mxu0 0.0
    %967 = vmatprep.subr.mxu0 0.0
    %968 = vmatpush1.msra.mxu0 0.0
    %969 = vmatprep.subr.mxu0 0.0
    %970 = vmatpush1.msra.mxu0 0.0
    %971 = vmatprep.subr.mxu0 0.0
    %972 = vmatpush1.msra.mxu0 0.0
    %973 = vmatprep.mubr.f32.mxu0 0.0
    %974 = vmatmul.mubr.f32.gmra.mrb[0].mxu0 %v898
    %v975 = vpop.f32.mrb[0].mxu0
    %v976 = vadd.f32 0.0, %v975
    %v977 = vpop.f32.mrb[0].mxu0
    %978 = vmatprep.mubr.f32.mxu0 0.0
    %979 = vmatmul.mubr.f32.gmra.mrb[0].mxu0 %v901
    %v980 = vpop.f32.mrb[0].mxu0
    %v981 = vadd.f32 0.0, %v980
    %v982 = vpop.f32.mrb[0].mxu0
    %983 = vmatprep.mubr.f32.mxu0 0.0
    %984 = vmatmul.mubr.f32.gmra.mrb[0].mxu0 %v904
    %v985 = vpop.f32.mrb[0].mxu0
    %v986 = vadd.f32 0.0, %v985
    %v987 = vpop.f32.mrb[0].mxu0
    %988 = vmatprep.mubr.f32.mxu0 0.0
    %989 = vmatmul.mubr.f32.gmra.mrb[0].mxu0 %v907
    %v990 = vpop.f32.mrb[0].mxu0
    %v991 = vadd.f32 0.0, %v990
    %v992 = vpop.f32.mrb[0].mxu0
    %993 = vdwg.mxu0
    %v994 = vadd.f32 %v784, %v976
    %v995 = vadd.f32 %v785, %v981
    %v996 = vadd.f32 %v786, %v986
    %v997 = vadd.f32 %v787, %v991
    %998 = vmatprep.subr.mxu0 0.0
    %999 = vmatpush1.msra.mxu0 %v889
    %1000 = vmatprep.subr.mxu0 0.0
    %1001 = vmatpush1.msra.mxu0 %v890
    %1002 = vmatprep.subr.mxu0 0.0
    %1003 = vmatpush1.msra.mxu0 %v891
    %1004 = vmatprep.subr.mxu0 0.0
    %1005 = vmatpush1.msra.mxu0 %v892
    %1006 = vmatprep.subr.mxu0 0.0
    %1007 = vmatpush1.msra.mxu0 0.0
    %1008 = vmatprep.subr.mxu0 0.0
    %1009 = vmatpush1.msra.mxu0 0.0
    %1010 = vmatprep.subr.mxu0 0.0
    %1011 = vmatpush1.msra.mxu0 0.0
    %1012 = vmatprep.subr.mxu0 0.0
    %1013 = vmatpush1.msra.mxu0 0.0
    %1014 = vmatprep.subr.mxu0 0.0
    %1015 = vmatpush1.msra.mxu0 0.0
    %1016 = vmatprep.subr.mxu0 0.0
    %1017 = vmatpush1.msra.mxu0 0.0
    %1018 = vmatprep.subr.mxu0 0.0
    %1019 = vmatpush1.msra.mxu0 0.0
    %1020 = vmatprep.subr.mxu0 0.0
    %1021 = vmatpush1.msra.mxu0 0.0
    %1022 = vmatprep.subr.mxu0 0.0
    %1023 = vmatpush1.msra.mxu0 0.0
    %1024 = vmatprep.subr.mxu0 0.0
    %1025 = vmatpush1.msra.mxu0 0.0
    %1026 = vmatprep.subr.mxu0 0.0
    %1027 = vmatpush1.msra.mxu0 0.0
    %1028 = vmatprep.subr.mxu0 0.0
    %1029 = vmatpush1.msra.mxu0 0.0
    %1030 = vmatprep.subr.mxu0 0.0
    %1031 = vmatpush1.msra.mxu0 0.0
    %1032 = vmatprep.subr.mxu0 0.0
    %1033 = vmatpush1.msra.mxu0 0.0
    %1034 = vmatprep.subr.mxu0 0.0
    %1035 = vmatpush1.msra.mxu0 0.0
    %1036 = vmatprep.subr.mxu0 0.0
    %1037 = vmatpush1.msra.mxu0 0.0
    %1038 = vmatprep.subr.mxu0 0.0
    %1039 = vmatpush1.msra.mxu0 0.0
    %1040 = vmatprep.subr.mxu0 0.0
    %1041 = vmatpush1.msra.mxu0 0.0
    %1042 = vmatprep.subr.mxu0 0.0
    %1043 = vmatpush1.msra.mxu0 0.0
    %1044 = vmatprep.subr.mxu0 0.0
    %1045 = vmatpush1.msra.mxu0 0.0
    %1046 = vmatprep.subr.mxu0 0.0
    %1047 = vmatpush1.msra.mxu0 0.0
    %1048 = vmatprep.subr.mxu0 0.0
    %1049 = vmatpush1.msra.mxu0 0.0
    %1050 = vmatprep.subr.mxu0 0.0
    %1051 = vmatpush1.msra.mxu0 0.0
    %1052 = vmatprep.subr.mxu0 0.0
    %1053 = vmatpush1.msra.mxu0 0.0
    %1054 = vmatprep.subr.mxu0 0.0
    %1055 = vmatpush1.msra.mxu0 0.0
    %1056 = vmatprep.subr.mxu0 0.0
    %1057 = vmatpush1.msra.mxu0 0.0
    %1058 = vmatprep.subr.mxu0 0.0
    %1059 = vmatpush1.msra.mxu0 0.0
    %1060 = vmatprep.subr.mxu0 0.0
    %1061 = vmatpush1.msra.mxu0 0.0
    %1062 = vmatprep.mubr.f32.mxu0 0.0
    %1063 = vmatmul.mubr.f32.gmra.mrb[0].mxu0 %v898
    %v1064 = vpop.f32.mrb[0].mxu0
    %v1065 = vadd.f32 0.0, %v1064
    %v1066 = vpop.f32.mrb[0].mxu0
    %1067 = vmatprep.mubr.f32.mxu0 0.0
    %1068 = vmatmul.mubr.f32.gmra.mrb[0].mxu0 %v901
    %v1069 = vpop.f32.mrb[0].mxu0
    %v1070 = vadd.f32 0.0, %v1069
    %v1071 = vpop.f32.mrb[0].mxu0
    %1072 = vmatprep.mubr.f32.mxu0 0.0
    %1073 = vmatmul.mubr.f32.gmra.mrb[0].mxu0 %v904
    %v1074 = vpop.f32.mrb[0].mxu0
    %v1075 = vadd.f32 0.0, %v1074
    %v1076 = vpop.f32.mrb[0].mxu0
    %1077 = vmatprep.mubr.f32.mxu0 0.0
    %1078 = vmatmul.mubr.f32.gmra.mrb[0].mxu0 %v907
    %v1079 = vpop.f32.mrb[0].mxu0
    %v1080 = vadd.f32 0.0, %v1079
    %v1081 = vpop.f32.mrb[0].mxu0
    %1082 = vdwg.mxu0
    %v1083 = vadd.f32 %v873, %v1065
    %v1084 = vadd.f32 %v874, %v1070
    %v1085 = vadd.f32 %v875, %v1075
    %v1086 = vadd.f32 %v876, %v1080
    %v1087 = vmax.f32 %v994, %v1083
    %v1088 = vmax.f32 %v995, %v1084
    %v1089 = vmax.f32 %v996, %v1085
    %v1090 = vmax.f32 %v997, %v1086
    %v1091 = vld [vmem:[#allocation9 + $0xa0] sm:$0x1]
    %v1092 = vunpack.c.l.bf16 %v1091
    %v1093 = vlaneseq
    %v1094 = vshrl.u32 %v1093, 7
    %v1095 = vsub.s32 0, %v1094
    %v1096 = vrot.slane %v1092, %v1095
    %v1097 = vadd.f32 %v1087, %v1096
    %v1098 = vadd.f32 %v1088, %v1096
    %v1099 = vadd.f32 %v1089, %v1096
    %v1100 = vadd.f32 %v1090, %v1096
    %v1101 = vmax.f32 %v1097, 0.0
    %v1102 = vmax.f32 %v1098, 0.0
    %v1103 = vmax.f32 %v1099, 0.0
    %v1104 = vmax.f32 %v1100, 0.0
    %v1105 = vld [vmem:[#allocation9 + $0xa8] sm:$0xf]
    %v1106 = vld [vmem:[#allocation9 + $0xac] sm:$0xf]
    %v1107 = vunpack.c.l.bf16 %v1105
    %v1108 = vunpack.c.l.bf16 %v1106
    %vm1109 = vcmask 228352
    %v1111 = vsel %vm1109, %v1107, 0
    %v1114 = vsel %vm1109, %v1108, 0
    %vm1116 = vcmask 1043456
    %v1118 = vsel %vm1116, %v1104, 0
    %1120 = vmatprep.subr.mxu0 0.0
    %1121 = vmatpush1.msra.mxu0 %v1101
    %1122 = vmatprep.subr.mxu0 0.0
    %1123 = vmatpush1.msra.mxu0 %v1102
    %1124 = vmatprep.subr.mxu0 0.0
    %1125 = vmatpush1.msra.mxu0 %v1103
    %1126 = vmatprep.subr.mxu0 0.0
    %1127 = vmatpush1.msra.mxu0 %v1118
    %1128 = vmatprep.subr.mxu0 0.0
    %1129 = vmatpush1.msra.mxu0 0.0
    %1130 = vmatprep.subr.mxu0 0.0
    %1131 = vmatpush1.msra.mxu0 0.0
    %1132 = vmatprep.subr.mxu0 0.0
    %1133 = vmatpush1.msra.mxu0 0.0
    %1134 = vmatprep.subr.mxu0 0.0
    %1135 = vmatpush1.msra.mxu0 0.0
    %1136 = vmatprep.subr.mxu0 0.0
    %1137 = vmatpush1.msra.mxu0 0.0
    %1138 = vmatprep.subr.mxu0 0.0
    %1139 = vmatpush1.msra.mxu0 0.0
    %1140 = vmatprep.subr.mxu0 0.0
    %1141 = vmatpush1.msra.mxu0 0.0
    %1142 = vmatprep.subr.mxu0 0.0
    %1143 = vmatpush1.msra.mxu0 0.0
    %1144 = vmatprep.subr.mxu0 0.0
    %1145 = vmatpush1.msra.mxu0 0.0
    %1146 = vmatprep.subr.mxu0 0.0
    %1147 = vmatpush1.msra.mxu0 0.0
    %1148 = vmatprep.subr.mxu0 0.0
    %1149 = vmatpush1.msra.mxu0 0.0
    %1150 = vmatprep.subr.mxu0 0.0
    %1151 = vmatpush1.msra.mxu0 0.0
    %1152 = vmatprep.subr.mxu0 0.0
    %1153 = vmatpush1.msra.mxu0 0.0
    %1154 = vmatprep.subr.mxu0 0.0
    %1155 = vmatpush1.msra.mxu0 0.0
    %1156 = vmatprep.subr.mxu0 0.0
    %1157 = vmatpush1.msra.mxu0 0.0
    %1158 = vmatprep.subr.mxu0 0.0
    %1159 = vmatpush1.msra.mxu0 0.0
    %1160 = vmatprep.subr.mxu0 0.0
    %1161 = vmatpush1.msra.mxu0 0.0
    %1162 = vmatprep.subr.mxu0 0.0
    %1163 = vmatpush1.msra.mxu0 0.0
    %1164 = vmatprep.subr.mxu0 0.0
    %1165 = vmatpush1.msra.mxu0 0.0
    %1166 = vmatprep.subr.mxu0 0.0
    %1167 = vmatpush1.msra.mxu0 0.0
    %1168 = vmatprep.subr.mxu0 0.0
    %1169 = vmatpush1.msra.mxu0 0.0
    %1170 = vmatprep.subr.mxu0 0.0
    %1171 = vmatpush1.msra.mxu0 0.0
    %1172 = vmatprep.subr.mxu0 0.0
    %1173 = vmatpush1.msra.mxu0 0.0
    %1174 = vmatprep.subr.mxu0 0.0
    %1175 = vmatpush1.msra.mxu0 0.0
    %1176 = vmatprep.subr.mxu0 0.0
    %1177 = vmatpush1.msra.mxu0 0.0
    %1178 = vmatprep.subr.mxu0 0.0
    %1179 = vmatpush1.msra.mxu0 0.0
    %1180 = vmatprep.subr.mxu0 0.0
    %1181 = vmatpush1.msra.mxu0 0.0
    %1182 = vmatprep.subr.mxu0 0.0
    %1183 = vmatpush1.msra.mxu0 0.0
    %1184 = vmatprep.mubr.f32.mxu0 0.0
    %1185 = vmatmul.mubr.f32.gmra.mrb[0].mxu0 %v1111
    %v1186 = vpop.f32.mrb[0].mxu0
    %v1187 = vadd.f32 0.0, %v1186
    %v1188 = vpop.f32.mrb[0].mxu0
    %1189 = vmatprep.mubr.f32.mxu0 0.0
    %1190 = vmatmul.mubr.f32.gmra.mrb[0].mxu0 %v1114
    %v1191 = vpop.f32.mrb[0].mxu0
    %v1192 = vadd.f32 0.0, %v1191
    %v1193 = vpop.f32.mrb[0].mxu0
    %1194 = vdwg.mxu0
    %v1195 = vld [vmem:[#allocation9 + $0xb0] sm:$0xf]
    %v1196 = vld [vmem:[#allocation9 + $0xb4] sm:$0xf]
    %v1197 = vunpack.c.l.bf16 %v1195
    %v1198 = vunpack.c.l.bf16 %v1196
    %v1200 = vsel %vm1109, %v1197, 0
    %v1203 = vsel %vm1109, %v1198, 0
    %1205 = vmatprep.subr.mxu0 0.0
    %1206 = vmatpush1.msra.mxu0 %v1101
    %1207 = vmatprep.subr.mxu0 0.0
    %1208 = vmatpush1.msra.mxu0 %v1102
    %1209 = vmatprep.subr.mxu0 0.0
    %1210 = vmatpush1.msra.mxu0 %v1103
    %1211 = vmatprep.subr.mxu0 0.0
    %1212 = vmatpush1.msra.mxu0 %v1118
    %1213 = vmatprep.subr.mxu0 0.0
    %1214 = vmatpush1.msra.mxu0 0.0
    %1215 = vmatprep.subr.mxu0 0.0
    %1216 = vmatpush1.msra.mxu0 0.0
    %1217 = vmatprep.subr.mxu0 0.0
    %1218 = vmatpush1.msra.mxu0 0.0
    %1219 = vmatprep.subr.mxu0 0.0
    %1220 = vmatpush1.msra.mxu0 0.0
    %1221 = vmatprep.subr.mxu0 0.0
    %1222 = vmatpush1.msra.mxu0 0.0
    %1223 = vmatprep.subr.mxu0 0.0
    %1224 = vmatpush1.msra.mxu0 0.0
    %1225 = vmatprep.subr.mxu0 0.0
    %1226 = vmatpush1.msra.mxu0 0.0
    %1227 = vmatprep.subr.mxu0 0.0
    %1228 = vmatpush1.msra.mxu0 0.0
    %1229 = vmatprep.subr.mxu0 0.0
    %1230 = vmatpush1.msra.mxu0 0.0
    %1231 = vmatprep.subr.mxu0 0.0
    %1232 = vmatpush1.msra.mxu0 0.0
    %1233 = vmatprep.subr.mxu0 0.0
    %1234 = vmatpush1.msra.mxu0 0.0
    %1235 = vmatprep.subr.mxu0 0.0
    %1236 = vmatpush1.msra.mxu0 0.0
    %1237 = vmatprep.subr.mxu0 0.0
    %1238 = vmatpush1.msra.mxu0 0.0
    %1239 = vmatprep.subr.mxu0 0.0
    %1240 = vmatpush1.msra.mxu0 0.0
    %1241 = vmatprep.subr.mxu0 0.0
    %1242 = vmatpush1.msra.mxu0 0.0
    %1243 = vmatprep.subr.mxu0 0.0
    %1244 = vmatpush1.msra.mxu0 0.0
    %1245 = vmatprep.subr.mxu0 0.0
    %1246 = vmatpush1.msra.mxu0 0.0
    %1247 = vmatprep.subr.mxu0 0.0
    %1248 = vmatpush1.msra.mxu0 0.0
    %1249 = vmatprep.subr.mxu0 0.0
    %1250 = vmatpush1.msra.mxu0 0.0
    %1251 = vmatprep.subr.mxu0 0.0
    %1252 = vmatpush1.msra.mxu0 0.0
    %1253 = vmatprep.subr.mxu0 0.0
    %1254 = vmatpush1.msra.mxu0 0.0
    %1255 = vmatprep.subr.mxu0 0.0
    %1256 = vmatpush1.msra.mxu0 0.0
    %1257 = vmatprep.subr.mxu0 0.0
    %1258 = vmatpush1.msra.mxu0 0.0
    %1259 = vmatprep.subr.mxu0 0.0
    %1260 = vmatpush1.msra.mxu0 0.0
    %1261 = vmatprep.subr.mxu0 0.0
    %1262 = vmatpush1.msra.mxu0 0.0
    %1263 = vmatprep.subr.mxu0 0.0
    %1264 = vmatpush1.msra.mxu0 0.0
    %1265 = vmatprep.subr.mxu0 0.0
    %1266 = vmatpush1.msra.mxu0 0.0
    %1267 = vmatprep.subr.mxu0 0.0
    %1268 = vmatpush1.msra.mxu0 0.0
    %1269 = vmatprep.mubr.f32.mxu0 0.0
    %1270 = vmatmul.mubr.f32.gmra.mrb[0].mxu0 %v1200
    %v1271 = vpop.f32.mrb[0].mxu0
    %v1272 = vadd.f32 0.0, %v1271
    %v1273 = vpop.f32.mrb[0].mxu0
    %1274 = vmatprep.mubr.f32.mxu0 0.0
    %1275 = vmatmul.mubr.f32.gmra.mrb[0].mxu0 %v1203
    %v1276 = vpop.f32.mrb[0].mxu0
    %v1277 = vadd.f32 0.0, %v1276
    %v1278 = vpop.f32.mrb[0].mxu0
    %1279 = vdwg.mxu0
    %v1280 = vmax.f32 %v1187, %v1272
    %v1281 = vmax.f32 %v1192, %v1277
    %1282 = vst [vmem:[#allocation4] sm:$0xff] %v1280
    %1283 = vst [vmem:[#allocation4 + $0x8] sm:$0xff] %v1281
    %s1284 = smul.u32 4, 214
    %s1285 = smul.u32 %s1284, 1
    %s1286 = sshll.u32 %s1285, 4
    %1287 = dma.done [#allocation3], %s1286
    %v1288 = vld [vmem:[#allocation4] sm:$0xff]
    %v1289 = vld [vmem:[#allocation4 + $0x8] sm:$0x3]
    %v1290 = vld [vmem:[#allocation2] sm:$0xff]
    %v1291 = vld [vmem:[#allocation2 + $0x8] sm:$0xff]
    %v1292 = vld [vmem:[#allocation2 + $0x10] sm:$0xff]
    %v1293 = vld [vmem:[#allocation2 + $0x18] sm:$0xff]
    %v1294 = vld [vmem:[#allocation2 + $0x20] sm:$0xff]
    %v1295 = vld [vmem:[#allocation2 + $0x28] sm:$0x3]
    %v1296 = vunpack.c.l.bf16 %v1290
    %v1297 = vunpack.c.h.bf16 %v1290
    %v1298 = vunpack.c.l.bf16 %v1291
    %v1299 = vunpack.c.h.bf16 %v1291
    %v1300 = vunpack.c.l.bf16 %v1292
    %v1301 = vunpack.c.h.bf16 %v1292
    %v1302 = vunpack.c.l.bf16 %v1293
    %v1303 = vunpack.c.h.bf16 %v1293
    %v1304 = vunpack.c.l.bf16 %v1294
    %v1305 = vunpack.c.h.bf16 %v1294
    %v1306 = vunpack.c.l.bf16 %v1295
    %v1307 = vld [vmem:[#allocation2 + $0xf0] sm:$0xff]
    %v1308 = vld [vmem:[#allocation2 + $0xf8] sm:$0xff]
    %v1309 = vld [vmem:[#allocation2 + $0x100] sm:$0xff]
    %v1310 = vld [vmem:[#allocation2 + $0x108] sm:$0xff]
    %v1311 = vld [vmem:[#allocation2 + $0x110] sm:$0xff]
    %v1312 = vld [vmem:[#allocation2 + $0x118] sm:$0x3]
    %v1313 = vunpack.c.l.bf16 %v1307
    %v1314 = vunpack.c.h.bf16 %v1307
    %v1315 = vunpack.c.l.bf16 %v1308
    %v1316 = vunpack.c.h.bf16 %v1308
    %v1317 = vunpack.c.l.bf16 %v1309
    %v1318 = vunpack.c.h.bf16 %v1309
    %v1319 = vunpack.c.l.bf16 %v1310
    %v1320 = vunpack.c.h.bf16 %v1310
    %v1321 = vunpack.c.l.bf16 %v1311
    %v1322 = vunpack.c.h.bf16 %v1311
    %v1323 = vunpack.c.l.bf16 %v1312
    %v1324 = vld [vmem:[#allocation4 + $0x1] sm:$0xff]
    %v1325 = vld [vmem:[#allocation4 + $0x9] sm:$0x3]
    %v1326 = vld [vmem:[#allocation2 + $0x30] sm:$0xff]
    %v1327 = vld [vmem:[#allocation2 + $0x38] sm:$0xff]
    %v1328 = vld [vmem:[#allocation2 + $0x40] sm:$0xff]
    %v1329 = vld [vmem:[#allocation2 + $0x48] sm:$0xff]
    %v1330 = vld [vmem:[#allocation2 + $0x50] sm:$0xff]
    %v1331 = vld [vmem:[#allocation2 + $0x58] sm:$0x3]
    %v1332 = vunpack.c.l.bf16 %v1326
    %v1333 = vunpack.c.h.bf16 %v1326
    %v1334 = vunpack.c.l.bf16 %v1327
    %v1335 = vunpack.c.h.bf16 %v1327
    %v1336 = vunpack.c.l.bf16 %v1328
    %v1337 = vunpack.c.h.bf16 %v1328
    %v1338 = vunpack.c.l.bf16 %v1329
    %v1339 = vunpack.c.h.bf16 %v1329
    %v1340 = vunpack.c.l.bf16 %v1330
    %v1341 = vunpack.c.h.bf16 %v1330
    %v1342 = vunpack.c.l.bf16 %v1331
    %vm1343 = vcmask 687104
    %v1345 = vsel %vm1343, %v1324, 0
    %v1348 = vsel %vm1343, %v1325, 0
    %v1351 = vsel %vm1116, %v1342, 0
    %1353 = vmatprep.subr.mxu0 0.0
    %1354 = vmatpush1.msra.mxu0 %v1332
    %1355 = vmatprep.subr.mxu0 0.0
    %1356 = vmatpush1.msra.mxu0 %v1333
    %1357 = vmatprep.subr.mxu0 0.0
    %1358 = vmatpush1.msra.mxu0 %v1334
    %1359 = vmatprep.subr.mxu0 0.0
    %1360 = vmatpush1.msra.mxu0 %v1335
    %1361 = vmatprep.subr.mxu0 0.0
    %1362 = vmatpush1.msra.mxu0 %v1336
    %1363 = vmatprep.subr.mxu0 0.0
    %1364 = vmatpush1.msra.mxu0 %v1337
    %1365 = vmatprep.subr.mxu0 0.0
    %1366 = vmatpush1.msra.mxu0 %v1338
    %1367 = vmatprep.subr.mxu0 0.0
    %1368 = vmatpush1.msra.mxu0 %v1339
    %1369 = vmatprep.subr.mxu0 0.0
    %1370 = vmatpush1.msra.mxu0 %v1340
    %1371 = vmatprep.subr.mxu0 0.0
    %1372 = vmatpush1.msra.mxu0 %v1341
    %1373 = vmatprep.subr.mxu0 0.0
    %1374 = vmatpush1.msra.mxu0 %v1351
    %1375 = vmatprep.subr.mxu0 0.0
    %1376 = vmatpush1.msra.mxu0 0.0
    %1377 = vmatprep.subr.mxu0 0.0
    %1378 = vmatpush1.msra.mxu0 0.0
    %1379 = vmatprep.subr.mxu0 0.0
    %1380 = vmatpush1.msra.mxu0 0.0
    %1381 = vmatprep.subr.mxu0 0.0
    %1382 = vmatpush1.msra.mxu0 0.0
    %1383 = vmatprep.subr.mxu0 0.0
    %1384 = vmatpush1.msra.mxu0 0.0
    %1385 = vmatprep.subr.mxu0 0.0
    %1386 = vmatpush1.msra.mxu0 0.0
    %1387 = vmatprep.subr.mxu0 0.0
    %1388 = vmatpush1.msra.mxu0 0.0
    %1389 = vmatprep.subr.mxu0 0.0
    %1390 = vmatpush1.msra.mxu0 0.0
    %1391 = vmatprep.subr.mxu0 0.0
    %1392 = vmatpush1.msra.mxu0 0.0
    %1393 = vmatprep.subr.mxu0 0.0
    %1394 = vmatpush1.msra.mxu0 0.0
    %1395 = vmatprep.subr.mxu0 0.0
    %1396 = vmatpush1.msra.mxu0 0.0
    %1397 = vmatprep.subr.mxu0 0.0
    %1398 = vmatpush1.msra.mxu0 0.0
    %1399 = vmatprep.subr.mxu0 0.0
    %1400 = vmatpush1.msra.mxu0 0.0
    %1401 = vmatprep.subr.mxu0 0.0
    %1402 = vmatpush1.msra.mxu0 0.0
    %1403 = vmatprep.subr.mxu0 0.0
    %1404 = vmatpush1.msra.mxu0 0.0
    %1405 = vmatprep.subr.mxu0 0.0
    %1406 = vmatpush1.msra.mxu0 0.0
    %1407 = vmatprep.subr.mxu0 0.0
    %1408 = vmatpush1.msra.mxu0 0.0
    %1409 = vmatprep.subr.mxu0 0.0
    %1410 = vmatpush1.msra.mxu0 0.0
    %1411 = vmatprep.subr.mxu0 0.0
    %1412 = vmatpush1.msra.mxu0 0.0
    %1413 = vmatprep.subr.mxu0 0.0
    %1414 = vmatpush1.msra.mxu0 0.0
    %1415 = vmatprep.subr.mxu0 0.0
    %1416 = vmatpush1.msra.mxu0 0.0
    %1417 = vmatprep.mubr.f32.mxu0 0.0
    %1418 = vmatmul.mubr.f32.gmra.mrb[0].mxu0 %v1345
    %v1419 = vpop.f32.mrb[0].mxu0
    %v1420 = vadd.f32 0.0, %v1419
    %v1421 = vpop.f32.mrb[0].mxu0
    %1422 = vmatprep.mubr.f32.mxu0 0.0
    %1423 = vmatmul.mubr.f32.gmra.mrb[0].mxu0 %v1348
    %v1424 = vpop.f32.mrb[0].mxu0
    %v1425 = vadd.f32 0.0, %v1424
    %v1426 = vpop.f32.mrb[0].mxu0
    %1427 = vdwg.mxu0
    %v1429 = vsel %vm1343, %v1288, 0
    %v1432 = vsel %vm1343, %v1289, 0
    %v1435 = vsel %vm1116, %v1306, 0
    %1437 = vmatprep.subr.mxu0 0.0
    %1438 = vmatpush1.msra.mxu0 %v1296
    %1439 = vmatprep.subr.mxu0 0.0
    %1440 = vmatpush1.msra.mxu0 %v1297
    %1441 = vmatprep.subr.mxu0 0.0
    %1442 = vmatpush1.msra.mxu0 %v1298
    %1443 = vmatprep.subr.mxu0 0.0
    %1444 = vmatpush1.msra.mxu0 %v1299
    %1445 = vmatprep.subr.mxu0 0.0
    %1446 = vmatpush1.msra.mxu0 %v1300
    %1447 = vmatprep.subr.mxu0 0.0
    %1448 = vmatpush1.msra.mxu0 %v1301
    %1449 = vmatprep.subr.mxu0 0.0
    %1450 = vmatpush1.msra.mxu0 %v1302
    %1451 = vmatprep.subr.mxu0 0.0
    %1452 = vmatpush1.msra.mxu0 %v1303
    %1453 = vmatprep.subr.mxu0 0.0
    %1454 = vmatpush1.msra.mxu0 %v1304
    %1455 = vmatprep.subr.mxu0 0.0
    %1456 = vmatpush1.msra.mxu0 %v1305
    %1457 = vmatprep.subr.mxu0 0.0
    %1458 = vmatpush1.msra.mxu0 %v1435
    %1459 = vmatprep.subr.mxu0 0.0
    %1460 = vmatpush1.msra.mxu0 0.0
    %1461 = vmatprep.subr.mxu0 0.0
    %1462 = vmatpush1.msra.mxu0 0.0
    %1463 = vmatprep.subr.mxu0 0.0
    %1464 = vmatpush1.msra.mxu0 0.0
    %1465 = vmatprep.subr.mxu0 0.0
    %1466 = vmatpush1.msra.mxu0 0.0
    %1467 = vmatprep.subr.mxu0 0.0
    %1468 = vmatpush1.msra.mxu0 0.0
    %1469 = vmatprep.subr.mxu0 0.0
    %1470 = vmatpush1.msra.mxu0 0.0
    %1471 = vmatprep.subr.mxu0 0.0
    %1472 = vmatpush1.msra.mxu0 0.0
    %1473 = vmatprep.subr.mxu0 0.0
    %1474 = vmatpush1.msra.mxu0 0.0
    %1475 = vmatprep.subr.mxu0 0.0
    %1476 = vmatpush1.msra.mxu0 0.0
    %1477 = vmatprep.subr.mxu0 0.0
    %1478 = vmatpush1.msra.mxu0 0.0
    %1479 = vmatprep.subr.mxu0 0.0
    %1480 = vmatpush1.msra.mxu0 0.0
    %1481 = vmatprep.subr.mxu0 0.0
    %1482 = vmatpush1.msra.mxu0 0.0
    %1483 = vmatprep.subr.mxu0 0.0
    %1484 = vmatpush1.msra.mxu0 0.0
    %1485 = vmatprep.subr.mxu0 0.0
    %1486 = vmatpush1.msra.mxu0 0.0
    %1487 = vmatprep.subr.mxu0 0.0
    %1488 = vmatpush1.msra.mxu0 0.0
    %1489 = vmatprep.subr.mxu0 0.0
    %1490 = vmatpush1.msra.mxu0 0.0
    %1491 = vmatprep.subr.mxu0 0.0
    %1492 = vmatpush1.msra.mxu0 0.0
    %1493 = vmatprep.subr.mxu0 0.0
    %1494 = vmatpush1.msra.mxu0 0.0
    %1495 = vmatprep.subr.mxu0 0.0
    %1496 = vmatpush1.msra.mxu0 0.0
    %1497 = vmatprep.subr.mxu0 0.0
    %1498 = vmatpush1.msra.mxu0 0.0
    %1499 = vmatprep.subr.mxu0 0.0
    %1500 = vmatpush1.msra.mxu0 0.0
    %1501 = vmatprep.mubr.f32.mxu0 0.0
    %1502 = vmatmul.mubr.f32.gmra.mrb[0].mxu0 %v1429
    %v1503 = vpop.f32.mrb[0].mxu0
    %v1504 = vadd.f32 %v1420, %v1503
    %v1505 = vpop.f32.mrb[0].mxu0
    %1506 = vmatprep.mubr.f32.mxu0 0.0
    %1507 = vmatmul.mubr.f32.gmra.mrb[0].mxu0 %v1432
    %v1508 = vpop.f32.mrb[0].mxu0
    %v1509 = vadd.f32 %v1425, %v1508
    %v1510 = vpop.f32.mrb[0].mxu0
    %1511 = vdwg.mxu0
    %v1512 = vld [vmem:[#allocation2 + $0x120] sm:$0xff]
    %v1513 = vld [vmem:[#allocation2 + $0x128] sm:$0xff]
    %v1514 = vld [vmem:[#allocation2 + $0x130] sm:$0xff]
    %v1515 = vld [vmem:[#allocation2 + $0x138] sm:$0xff]
    %v1516 = vld [vmem:[#allocation2 + $0x140] sm:$0xff]
    %v1517 = vld [vmem:[#allocation2 + $0x148] sm:$0x3]
    %v1518 = vunpack.c.l.bf16 %v1512
    %v1519 = vunpack.c.h.bf16 %v1512
    %v1520 = vunpack.c.l.bf16 %v1513
    %v1521 = vunpack.c.h.bf16 %v1513
    %v1522 = vunpack.c.l.bf16 %v1514
    %v1523 = vunpack.c.h.bf16 %v1514
    %v1524 = vunpack.c.l.bf16 %v1515
    %v1525 = vunpack.c.h.bf16 %v1515
    %v1526 = vunpack.c.l.bf16 %v1516
    %v1527 = vunpack.c.h.bf16 %v1516
    %v1528 = vunpack.c.l.bf16 %v1517
    %v1530 = vsel %vm1116, %v1528, 0
    %1532 = vmatprep.subr.mxu0 0.0
    %1533 = vmatpush1.msra.mxu0 %v1518
    %1534 = vmatprep.subr.mxu0 0.0
    %1535 = vmatpush1.msra.mxu0 %v1519
    %1536 = vmatprep.subr.mxu0 0.0
    %1537 = vmatpush1.msra.mxu0 %v1520
    %1538 = vmatprep.subr.mxu0 0.0
    %1539 = vmatpush1.msra.mxu0 %v1521
    %1540 = vmatprep.subr.mxu0 0.0
    %1541 = vmatpush1.msra.mxu0 %v1522
    %1542 = vmatprep.subr.mxu0 0.0
    %1543 = vmatpush1.msra.mxu0 %v1523
    %1544 = vmatprep.subr.mxu0 0.0
    %1545 = vmatpush1.msra.mxu0 %v1524
    %1546 = vmatprep.subr.mxu0 0.0
    %1547 = vmatpush1.msra.mxu0 %v1525
    %1548 = vmatprep.subr.mxu0 0.0
    %1549 = vmatpush1.msra.mxu0 %v1526
    %1550 = vmatprep.subr.mxu0 0.0
    %1551 = vmatpush1.msra.mxu0 %v1527
    %1552 = vmatprep.subr.mxu0 0.0
    %1553 = vmatpush1.msra.mxu0 %v1530
    %1554 = vmatprep.subr.mxu0 0.0
    %1555 = vmatpush1.msra.mxu0 0.0
    %1556 = vmatprep.subr.mxu0 0.0
    %1557 = vmatpush1.msra.mxu0 0.0
    %1558 = vmatprep.subr.mxu0 0.0
    %1559 = vmatpush1.msra.mxu0 0.0
    %1560 = vmatprep.subr.mxu0 0.0
    %1561 = vmatpush1.msra.mxu0 0.0
    %1562 = vmatprep.subr.mxu0 0.0
    %1563 = vmatpush1.msra.mxu0 0.0
    %1564 = vmatprep.subr.mxu0 0.0
    %1565 = vmatpush1.msra.mxu0 0.0
    %1566 = vmatprep.subr.mxu0 0.0
    %1567 = vmatpush1.msra.mxu0 0.0
    %1568 = vmatprep.subr.mxu0 0.0
    %1569 = vmatpush1.msra.mxu0 0.0
    %1570 = vmatprep.subr.mxu0 0.0
    %1571 = vmatpush1.msra.mxu0 0.0
    %1572 = vmatprep.subr.mxu0 0.0
    %1573 = vmatpush1.msra.mxu0 0.0
    %1574 = vmatprep.subr.mxu0 0.0
    %1575 = vmatpush1.msra.mxu0 0.0
    %1576 = vmatprep.subr.mxu0 0.0
    %1577 = vmatpush1.msra.mxu0 0.0
    %1578 = vmatprep.subr.mxu0 0.0
    %1579 = vmatpush1.msra.mxu0 0.0
    %1580 = vmatprep.subr.mxu0 0.0
    %1581 = vmatpush1.msra.mxu0 0.0
    %1582 = vmatprep.subr.mxu0 0.0
    %1583 = vmatpush1.msra.mxu0 0.0
    %1584 = vmatprep.subr.mxu0 0.0
    %1585 = vmatpush1.msra.mxu0 0.0
    %1586 = vmatprep.subr.mxu0 0.0
    %1587 = vmatpush1.msra.mxu0 0.0
    %1588 = vmatprep.subr.mxu0 0.0
    %1589 = vmatpush1.msra.mxu0 0.0
    %1590 = vmatprep.subr.mxu0 0.0
    %1591 = vmatpush1.msra.mxu0 0.0
    %1592 = vmatprep.subr.mxu0 0.0
    %1593 = vmatpush1.msra.mxu0 0.0
    %1594 = vmatprep.subr.mxu0 0.0
    %1595 = vmatpush1.msra.mxu0 0.0
    %1596 = vmatprep.mubr.f32.mxu0 0.0
    %1597 = vmatmul.mubr.f32.gmra.mrb[0].mxu0 %v1345
    %v1598 = vpop.f32.mrb[0].mxu0
    %v1599 = vadd.f32 0.0, %v1598
    %v1600 = vpop.f32.mrb[0].mxu0
    %1601 = vmatprep.mubr.f32.mxu0 0.0
    %1602 = vmatmul.mubr.f32.gmra.mrb[0].mxu0 %v1348
    %v1603 = vpop.f32.mrb[0].mxu0
    %v1604 = vadd.f32 0.0, %v1603
    %v1605 = vpop.f32.mrb[0].mxu0
    %1606 = vdwg.mxu0
    %v1608 = vsel %vm1116, %v1323, 0
    %1610 = vmatprep.subr.mxu0 0.0
    %1611 = vmatpush1.msra.mxu0 %v1313
    %1612 = vmatprep.subr.mxu0 0.0
    %1613 = vmatpush1.msra.mxu0 %v1314
    %1614 = vmatprep.subr.mxu0 0.0
    %1615 = vmatpush1.msra.mxu0 %v1315
    %1616 = vmatprep.subr.mxu0 0.0
    %1617 = vmatpush1.msra.mxu0 %v1316
    %1618 = vmatprep.subr.mxu0 0.0
    %1619 = vmatpush1.msra.mxu0 %v1317
    %1620 = vmatprep.subr.mxu0 0.0
    %1621 = vmatpush1.msra.mxu0 %v1318
    %1622 = vmatprep.subr.mxu0 0.0
    %1623 = vmatpush1.msra.mxu0 %v1319
    %1624 = vmatprep.subr.mxu0 0.0
    %1625 = vmatpush1.msra.mxu0 %v1320
    %1626 = vmatprep.subr.mxu0 0.0
    %1627 = vmatpush1.msra.mxu0 %v1321
    %1628 = vmatprep.subr.mxu0 0.0
    %1629 = vmatpush1.msra.mxu0 %v1322
    %1630 = vmatprep.subr.mxu0 0.0
    %1631 = vmatpush1.msra.mxu0 %v1608
    %1632 = vmatprep.subr.mxu0 0.0
    %1633 = vmatpush1.msra.mxu0 0.0
    %1634 = vmatprep.subr.mxu0 0.0
    %1635 = vmatpush1.msra.mxu0 0.0
    %1636 = vmatprep.subr.mxu0 0.0
    %1637 = vmatpush1.msra.mxu0 0.0
    %1638 = vmatprep.subr.mxu0 0.0
    %1639 = vmatpush1.msra.mxu0 0.0
    %1640 = vmatprep.subr.mxu0 0.0
    %1641 = vmatpush1.msra.mxu0 0.0
    %1642 = vmatprep.subr.mxu0 0.0
    %1643 = vmatpush1.msra.mxu0 0.0
    %1644 = vmatprep.subr.mxu0 0.0
    %1645 = vmatpush1.msra.mxu0 0.0
    %1646 = vmatprep.subr.mxu0 0.0
    %1647 = vmatpush1.msra.mxu0 0.0
    %1648 = vmatprep.subr.mxu0 0.0
    %1649 = vmatpush1.msra.mxu0 0.0
    %1650 = vmatprep.subr.mxu0 0.0
    %1651 = vmatpush1.msra.mxu0 0.0
    %1652 = vmatprep.subr.mxu0 0.0
    %1653 = vmatpush1.msra.mxu0 0.0
    %1654 = vmatprep.subr.mxu0 0.0
    %1655 = vmatpush1.msra.mxu0 0.0
    %1656 = vmatprep.subr.mxu0 0.0
    %1657 = vmatpush1.msra.mxu0 0.0
    %1658 = vmatprep.subr.mxu0 0.0
    %1659 = vmatpush1.msra.mxu0 0.0
    %1660 = vmatprep.subr.mxu0 0.0
    %1661 = vmatpush1.msra.mxu0 0.0
    %1662 = vmatprep.subr.mxu0 0.0
    %1663 = vmatpush1.msra.mxu0 0.0
    %1664 = vmatprep.subr.mxu0 0.0
    %1665 = vmatpush1.msra.mxu0 0.0
    %1666 = vmatprep.subr.mxu0 0.0
    %1667 = vmatpush1.msra.mxu0 0.0
    %1668 = vmatprep.subr.mxu0 0.0
    %1669 = vmatpush1.msra.mxu0 0.0
    %1670 = vmatprep.subr.mxu0 0.0
    %1671 = vmatpush1.msra.mxu0 0.0
    %1672 = vmatprep.subr.mxu0 0.0
    %1673 = vmatpush1.msra.mxu0 0.0
    %1674 = vmatprep.mubr.f32.mxu0 0.0
    %1675 = vmatmul.mubr.f32.gmra.mrb[0].mxu0 %v1429
    %v1676 = vpop.f32.mrb[0].mxu0
    %v1677 = vadd.f32 %v1599, %v1676
    %v1678 = vpop.f32.mrb[0].mxu0
    %1679 = vmatprep.mubr.f32.mxu0 0.0
    %1680 = vmatmul.mubr.f32.gmra.mrb[0].mxu0 %v1432
    %v1681 = vpop.f32.mrb[0].mxu0
    %v1682 = vadd.f32 %v1604, %v1681
    %v1683 = vpop.f32.mrb[0].mxu0
    %1684 = vdwg.mxu0
    %v1685 = vld [vmem:[#allocation4 + $0x2] sm:$0xff]
    %v1686 = vld [vmem:[#allocation4 + $0xa] sm:$0x3]
    %v1687 = vld [vmem:[#allocation2 + $0x60] sm:$0xff]
    %v1688 = vld [vmem:[#allocation2 + $0x68] sm:$0xff]
    %v1689 = vld [vmem:[#allocation2 + $0x70] sm:$0xff]
    %v1690 = vld [vmem:[#allocation2 + $0x78] sm:$0xff]
    %v1691 = vld [vmem:[#allocation2 + $0x80] sm:$0xff]
    %v1692 = vld [vmem:[#allocation2 + $0x88] sm:$0x3]
    %v1693 = vunpack.c.l.bf16 %v1687
    %v1694 = vunpack.c.h.bf16 %v1687
    %v1695 = vunpack.c.l.bf16 %v1688
    %v1696 = vunpack.c.h.bf16 %v1688
    %v1697 = vunpack.c.l.bf16 %v1689
    %v1698 = vunpack.c.h.bf16 %v1689
    %v1699 = vunpack.c.l.bf16 %v1690
    %v1700 = vunpack.c.h.bf16 %v1690
    %v1701 = vunpack.c.l.bf16 %v1691
    %v1702 = vunpack.c.h.bf16 %v1691
    %v1703 = vunpack.c.l.bf16 %v1692
    %v1705 = vsel %vm1343, %v1685, 0
    %v1708 = vsel %vm1343, %v1686, 0
    %v1711 = vsel %vm1116, %v1703, 0
    %1713 = vmatprep.subr.mxu0 0.0
    %1714 = vmatpush1.msra.mxu0 %v1693
    %1715 = vmatprep.subr.mxu0 0.0
    %1716 = vmatpush1.msra.mxu0 %v1694
    %1717 = vmatprep.subr.mxu0 0.0
    %1718 = vmatpush1.msra.mxu0 %v1695
    %1719 = vmatprep.subr.mxu0 0.0
    %1720 = vmatpush1.msra.mxu0 %v1696
    %1721 = vmatprep.subr.mxu0 0.0
    %1722 = vmatpush1.msra.mxu0 %v1697
    %1723 = vmatprep.subr.mxu0 0.0
    %1724 = vmatpush1.msra.mxu0 %v1698
    %1725 = vmatprep.subr.mxu0 0.0
    %1726 = vmatpush1.msra.mxu0 %v1699
    %1727 = vmatprep.subr.mxu0 0.0
    %1728 = vmatpush1.msra.mxu0 %v1700
    %1729 = vmatprep.subr.mxu0 0.0
    %1730 = vmatpush1.msra.mxu0 %v1701
    %1731 = vmatprep.subr.mxu0 0.0
    %1732 = vmatpush1.msra.mxu0 %v1702
    %1733 = vmatprep.subr.mxu0 0.0
    %1734 = vmatpush1.msra.mxu0 %v1711
    %1735 = vmatprep.subr.mxu0 0.0
    %1736 = vmatpush1.msra.mxu0 0.0
    %1737 = vmatprep.subr.mxu0 0.0
    %1738 = vmatpush1.msra.mxu0 0.0
    %1739 = vmatprep.subr.mxu0 0.0
    %1740 = vmatpush1.msra.mxu0 0.0
    %1741 = vmatprep.subr.mxu0 0.0
    %1742 = vmatpush1.msra.mxu0 0.0
    %1743 = vmatprep.subr.mxu0 0.0
    %1744 = vmatpush1.msra.mxu0 0.0
    %1745 = vmatprep.subr.mxu0 0.0
    %1746 = vmatpush1.msra.mxu0 0.0
    %1747 = vmatprep.subr.mxu0 0.0
    %1748 = vmatpush1.msra.mxu0 0.0
    %1749 = vmatprep.subr.mxu0 0.0
    %1750 = vmatpush1.msra.mxu0 0.0
    %1751 = vmatprep.subr.mxu0 0.0
    %1752 = vmatpush1.msra.mxu0 0.0
    %1753 = vmatprep.subr.mxu0 0.0
    %1754 = vmatpush1.msra.mxu0 0.0
    %1755 = vmatprep.subr.mxu0 0.0
    %1756 = vmatpush1.msra.mxu0 0.0
    %1757 = vmatprep.subr.mxu0 0.0
    %1758 = vmatpush1.msra.mxu0 0.0
    %1759 = vmatprep.subr.mxu0 0.0
    %1760 = vmatpush1.msra.mxu0 0.0
    %1761 = vmatprep.subr.mxu0 0.0
    %1762 = vmatpush1.msra.mxu0 0.0
    %1763 = vmatprep.subr.mxu0 0.0
    %1764 = vmatpush1.msra.mxu0 0.0
    %1765 = vmatprep.subr.mxu0 0.0
    %1766 = vmatpush1.msra.mxu0 0.0
    %1767 = vmatprep.subr.mxu0 0.0
    %1768 = vmatpush1.msra.mxu0 0.0
    %1769 = vmatprep.subr.mxu0 0.0
    %1770 = vmatpush1.msra.mxu0 0.0
    %1771 = vmatprep.subr.mxu0 0.0
    %1772 = vmatpush1.msra.mxu0 0.0
    %1773 = vmatprep.subr.mxu0 0.0
    %1774 = vmatpush1.msra.mxu0 0.0
    %1775 = vmatprep.subr.mxu0 0.0
    %1776 = vmatpush1.msra.mxu0 0.0
    %1777 = vmatprep.mubr.f32.mxu0 0.0
    %1778 = vmatmul.mubr.f32.gmra.mrb[0].mxu0 %v1705
    %v1779 = vpop.f32.mrb[0].mxu0
    %v1780 = vadd.f32 0.0, %v1779
    %v1781 = vpop.f32.mrb[0].mxu0
    %1782 = vmatprep.mubr.f32.mxu0 0.0
    %1783 = vmatmul.mubr.f32.gmra.mrb[0].mxu0 %v1708
    %v1784 = vpop.f32.mrb[0].mxu0
    %v1785 = vadd.f32 0.0, %v1784
    %v1786 = vpop.f32.mrb[0].mxu0
    %1787 = vdwg.mxu0
    %v1788 = vadd.f32 %v1504, %v1780
    %v1789 = vadd.f32 %v1509, %v1785
    %v1790 = vld [vmem:[#allocation2 + $0x150] sm:$0xff]
    %v1791 = vld [vmem:[#allocation2 + $0x158] sm:$0xff]
    %v1792 = vld [vmem:[#allocation2 + $0x160] sm:$0xff]
    %v1793 = vld [vmem:[#allocation2 + $0x168] sm:$0xff]
    %v1794 = vld [vmem:[#allocation2 + $0x170] sm:$0xff]
    %v1795 = vld [vmem:[#allocation2 + $0x178] sm:$0x3]
    %v1796 = vunpack.c.l.bf16 %v1790
    %v1797 = vunpack.c.h.bf16 %v1790
    %v1798 = vunpack.c.l.bf16 %v1791
    %v1799 = vunpack.c.h.bf16 %v1791
    %v1800 = vunpack.c.l.bf16 %v1792
    %v1801 = vunpack.c.h.bf16 %v1792
    %v1802 = vunpack.c.l.bf16 %v1793
    %v1803 = vunpack.c.h.bf16 %v1793
    %v1804 = vunpack.c.l.bf16 %v1794
    %v1805 = vunpack.c.h.bf16 %v1794
    %v1806 = vunpack.c.l.bf16 %v1795
    %v1808 = vsel %vm1116, %v1806, 0
    %1810 = vmatprep.subr.mxu0 0.0
    %1811 = vmatpush1.msra.mxu0 %v1796
    %1812 = vmatprep.subr.mxu0 0.0
    %1813 = vmatpush1.msra.mxu0 %v1797
    %1814 = vmatprep.subr.mxu0 0.0
    %1815 = vmatpush1.msra.mxu0 %v1798
    %1816 = vmatprep.subr.mxu0 0.0
    %1817 = vmatpush1.msra.mxu0 %v1799
    %1818 = vmatprep.subr.mxu0 0.0
    %1819 = vmatpush1.msra.mxu0 %v1800
    %1820 = vmatprep.subr.mxu0 0.0
    %1821 = vmatpush1.msra.mxu0 %v1801
    %1822 = vmatprep.subr.mxu0 0.0
    %1823 = vmatpush1.msra.mxu0 %v1802
    %1824 = vmatprep.subr.mxu0 0.0
    %1825 = vmatpush1.msra.mxu0 %v1803
    %1826 = vmatprep.subr.mxu0 0.0
    %1827 = vmatpush1.msra.mxu0 %v1804
    %1828 = vmatprep.subr.mxu0 0.0
    %1829 = vmatpush1.msra.mxu0 %v1805
    %1830 = vmatprep.subr.mxu0 0.0
    %1831 = vmatpush1.msra.mxu0 %v1808
    %1832 = vmatprep.subr.mxu0 0.0
    %1833 = vmatpush1.msra.mxu0 0.0
    %1834 = vmatprep.subr.mxu0 0.0
    %1835 = vmatpush1.msra.mxu0 0.0
    %1836 = vmatprep.subr.mxu0 0.0
    %1837 = vmatpush1.msra.mxu0 0.0
    %1838 = vmatprep.subr.mxu0 0.0
    %1839 = vmatpush1.msra.mxu0 0.0
    %1840 = vmatprep.subr.mxu0 0.0
    %1841 = vmatpush1.msra.mxu0 0.0
    %1842 = vmatprep.subr.mxu0 0.0
    %1843 = vmatpush1.msra.mxu0 0.0
    %1844 = vmatprep.subr.mxu0 0.0
    %1845 = vmatpush1.msra.mxu0 0.0
    %1846 = vmatprep.subr.mxu0 0.0
    %1847 = vmatpush1.msra.mxu0 0.0
    %1848 = vmatprep.subr.mxu0 0.0
    %1849 = vmatpush1.msra.mxu0 0.0
    %1850 = vmatprep.subr.mxu0 0.0
    %1851 = vmatpush1.msra.mxu0 0.0
    %1852 = vmatprep.subr.mxu0 0.0
    %1853 = vmatpush1.msra.mxu0 0.0
    %1854 = vmatprep.subr.mxu0 0.0
    %1855 = vmatpush1.msra.mxu0 0.0
    %1856 = vmatprep.subr.mxu0 0.0
    %1857 = vmatpush1.msra.mxu0 0.0
    %1858 = vmatprep.subr.mxu0 0.0
    %1859 = vmatpush1.msra.mxu0 0.0
    %1860 = vmatprep.subr.mxu0 0.0
    %1861 = vmatpush1.msra.mxu0 0.0
    %1862 = vmatprep.subr.mxu0 0.0
    %1863 = vmatpush1.msra.mxu0 0.0
    %1864 = vmatprep.subr.mxu0 0.0
    %1865 = vmatpush1.msra.mxu0 0.0
    %1866 = vmatprep.subr.mxu0 0.0
    %1867 = vmatpush1.msra.mxu0 0.0
    %1868 = vmatprep.subr.mxu0 0.0
    %1869 = vmatpush1.msra.mxu0 0.0
    %1870 = vmatprep.subr.mxu0 0.0
    %1871 = vmatpush1.msra.mxu0 0.0
    %1872 = vmatprep.subr.mxu0 0.0
    %1873 = vmatpush1.msra.mxu0 0.0
    %1874 = vmatprep.mubr.f32.mxu0 0.0
    %1875 = vmatmul.mubr.f32.gmra.mrb[0].mxu0 %v1705
    %v1876 = vpop.f32.mrb[0].mxu0
    %v1877 = vadd.f32 0.0, %v1876
    %v1878 = vpop.f32.mrb[0].mxu0
    %1879 = vmatprep.mubr.f32.mxu0 0.0
    %1880 = vmatmul.mubr.f32.gmra.mrb[0].mxu0 %v1708
    %v1881 = vpop.f32.mrb[0].mxu0
    %v1882 = vadd.f32 0.0, %v1881
    %v1883 = vpop.f32.mrb[0].mxu0
    %1884 = vdwg.mxu0
    %v1885 = vadd.f32 %v1677, %v1877
    %v1886 = vadd.f32 %v1682, %v1882
    %v1887 = vld [vmem:[#allocation4 + $0x3] sm:$0xff]
    %v1888 = vld [vmem:[#allocation4 + $0xb] sm:$0x3]
    %v1889 = vld [vmem:[#allocation2 + $0x90] sm:$0xff]
    %v1890 = vld [vmem:[#allocation2 + $0x98] sm:$0xff]
    %v1891 = vld [vmem:[#allocation2 + $0xa0] sm:$0xff]
    %v1892 = vld [vmem:[#allocation2 + $0xa8] sm:$0xff]
    %v1893 = vld [vmem:[#allocation2 + $0xb0] sm:$0xff]
    %v1894 = vld [vmem:[#allocation2 + $0xb8] sm:$0x3]
    %v1895 = vunpack.c.l.bf16 %v1889
    %v1896 = vunpack.c.h.bf16 %v1889
    %v1897 = vunpack.c.l.bf16 %v1890
    %v1898 = vunpack.c.h.bf16 %v1890
    %v1899 = vunpack.c.l.bf16 %v1891
    %v1900 = vunpack.c.h.bf16 %v1891
    %v1901 = vunpack.c.l.bf16 %v1892
    %v1902 = vunpack.c.h.bf16 %v1892
    %v1903 = vunpack.c.l.bf16 %v1893
    %v1904 = vunpack.c.h.bf16 %v1893
    %v1905 = vunpack.c.l.bf16 %v1894
    %v1907 = vsel %vm1343, %v1887, 0
    %v1910 = vsel %vm1343, %v1888, 0
    %v1913 = vsel %vm1116, %v1905, 0
    %1915 = vmatprep.subr.mxu0 0.0
    %1916 = vmatpush1.msra.mxu0 %v1895
    %1917 = vmatprep.subr.mxu0 0.0
    %1918 = vmatpush1.msra.mxu0 %v1896
    %1919 = vmatprep.subr.mxu0 0.0
    %1920 = vmatpush1.msra.mxu0 %v1897
    %1921 = vmatprep.subr.mxu0 0.0
    %1922 = vmatpush1.msra.mxu0 %v1898
    %1923 = vmatprep.subr.mxu0 0.0
    %1924 = vmatpush1.msra.mxu0 %v1899
    %1925 = vmatprep.subr.mxu0 0.0
    %1926 = vmatpush1.msra.mxu0 %v1900
    %1927 = vmatprep.subr.mxu0 0.0
    %1928 = vmatpush1.msra.mxu0 %v1901
    %1929 = vmatprep.subr.mxu0 0.0
    %1930 = vmatpush1.msra.mxu0 %v1902
    %1931 = vmatprep.subr.mxu0 0.0
    %1932 = vmatpush1.msra.mxu0 %v1903
    %1933 = vmatprep.subr.mxu0 0.0
    %1934 = vmatpush1.msra.mxu0 %v1904
    %1935 = vmatprep.subr.mxu0 0.0
    %1936 = vmatpush1.msra.mxu0 %v1913
    %1937 = vmatprep.subr.mxu0 0.0
    %1938 = vmatpush1.msra.mxu0 0.0
    %1939 = vmatprep.subr.mxu0 0.0
    %1940 = vmatpush1.msra.mxu0 0.0
    %1941 = vmatprep.subr.mxu0 0.0
    %1942 = vmatpush1.msra.mxu0 0.0
    %1943 = vmatprep.subr.mxu0 0.0
    %1944 = vmatpush1.msra.mxu0 0.0
    %1945 = vmatprep.subr.mxu0 0.0
    %1946 = vmatpush1.msra.mxu0 0.0
    %1947 = vmatprep.subr.mxu0 0.0
    %1948 = vmatpush1.msra.mxu0 0.0
    %1949 = vmatprep.subr.mxu0 0.0
    %1950 = vmatpush1.msra.mxu0 0.0
    %1951 = vmatprep.subr.mxu0 0.0
    %1952 = vmatpush1.msra.mxu0 0.0
    %1953 = vmatprep.subr.mxu0 0.0
    %1954 = vmatpush1.msra.mxu0 0.0
    %1955 = vmatprep.subr.mxu0 0.0
    %1956 = vmatpush1.msra.mxu0 0.0
    %1957 = vmatprep.subr.mxu0 0.0
    %1958 = vmatpush1.msra.mxu0 0.0
    %1959 = vmatprep.subr.mxu0 0.0
    %1960 = vmatpush1.msra.mxu0 0.0
    %1961 = vmatprep.subr.mxu0 0.0
    %1962 = vmatpush1.msra.mxu0 0.0
    %1963 = vmatprep.subr.mxu0 0.0
    %1964 = vmatpush1.msra.mxu0 0.0
    %1965 = vmatprep.subr.mxu0 0.0
    %1966 = vmatpush1.msra.mxu0 0.0
    %1967 = vmatprep.subr.mxu0 0.0
    %1968 = vmatpush1.msra.mxu0 0.0
    %1969 = vmatprep.subr.mxu0 0.0
    %1970 = vmatpush1.msra.mxu0 0.0
    %1971 = vmatprep.subr.mxu0 0.0
    %1972 = vmatpush1.msra.mxu0 0.0
    %1973 = vmatprep.subr.mxu0 0.0
    %1974 = vmatpush1.msra.mxu0 0.0
    %1975 = vmatprep.subr.mxu0 0.0
    %1976 = vmatpush1.msra.mxu0 0.0
    %1977 = vmatprep.subr.mxu0 0.0
    %1978 = vmatpush1.msra.mxu0 0.0
    %1979 = vmatprep.mubr.f32.mxu0 0.0
    %1980 = vmatmul.mubr.f32.gmra.mrb[0].mxu0 %v1907
    %v1981 = vpop.f32.mrb[0].mxu0
    %v1982 = vadd.f32 0.0, %v1981
    %v1983 = vpop.f32.mrb[0].mxu0
    %1984 = vmatprep.mubr.f32.mxu0 0.0
    %1985 = vmatmul.mubr.f32.gmra.mrb[0].mxu0 %v1910
    %v1986 = vpop.f32.mrb[0].mxu0
    %v1987 = vadd.f32 0.0, %v1986
    %v1988 = vpop.f32.mrb[0].mxu0
    %1989 = vdwg.mxu0
    %v1990 = vadd.f32 %v1788, %v1982
    %v1991 = vadd.f32 %v1789, %v1987
    %v1992 = vld [vmem:[#allocation2 + $0x180] sm:$0xff]
    %v1993 = vld [vmem:[#allocation2 + $0x188] sm:$0xff]
    %v1994 = vld [vmem:[#allocation2 + $0x190] sm:$0xff]
    %v1995 = vld [vmem:[#allocation2 + $0x198] sm:$0xff]
    %v1996 = vld [vmem:[#allocation2 + $0x1a0] sm:$0xff]
    %v1997 = vld [vmem:[#allocation2 + $0x1a8] sm:$0x3]
    %v1998 = vunpack.c.l.bf16 %v1992
    %v1999 = vunpack.c.h.bf16 %v1992
    %v2000 = vunpack.c.l.bf16 %v1993
    %v2001 = vunpack.c.h.bf16 %v1993
    %v2002 = vunpack.c.l.bf16 %v1994
    %v2003 = vunpack.c.h.bf16 %v1994
    %v2004 = vunpack.c.l.bf16 %v1995
    %v2005 = vunpack.c.h.bf16 %v1995
    %v2006 = vunpack.c.l.bf16 %v1996
    %v2007 = vunpack.c.h.bf16 %v1996
    %v2008 = vunpack.c.l.bf16 %v1997
    %v2010 = vsel %vm1116, %v2008, 0
    %2012 = vmatprep.subr.mxu0 0.0
    %2013 = vmatpush1.msra.mxu0 %v1998
    %2014 = vmatprep.subr.mxu0 0.0
    %2015 = vmatpush1.msra.mxu0 %v1999
    %2016 = vmatprep.subr.mxu0 0.0
    %2017 = vmatpush1.msra.mxu0 %v2000
    %2018 = vmatprep.subr.mxu0 0.0
    %2019 = vmatpush1.msra.mxu0 %v2001
    %2020 = vmatprep.subr.mxu0 0.0
    %2021 = vmatpush1.msra.mxu0 %v2002
    %2022 = vmatprep.subr.mxu0 0.0
    %2023 = vmatpush1.msra.mxu0 %v2003
    %2024 = vmatprep.subr.mxu0 0.0
    %2025 = vmatpush1.msra.mxu0 %v2004
    %2026 = vmatprep.subr.mxu0 0.0
    %2027 = vmatpush1.msra.mxu0 %v2005
    %2028 = vmatprep.subr.mxu0 0.0
    %2029 = vmatpush1.msra.mxu0 %v2006
    %2030 = vmatprep.subr.mxu0 0.0
    %2031 = vmatpush1.msra.mxu0 %v2007
    %2032 = vmatprep.subr.mxu0 0.0
    %2033 = vmatpush1.msra.mxu0 %v2010
    %2034 = vmatprep.subr.mxu0 0.0
    %2035 = vmatpush1.msra.mxu0 0.0
    %2036 = vmatprep.subr.mxu0 0.0
    %2037 = vmatpush1.msra.mxu0 0.0
    %2038 = vmatprep.subr.mxu0 0.0
    %2039 = vmatpush1.msra.mxu0 0.0
    %2040 = vmatprep.subr.mxu0 0.0
    %2041 = vmatpush1.msra.mxu0 0.0
    %2042 = vmatprep.subr.mxu0 0.0
    %2043 = vmatpush1.msra.mxu0 0.0
    %2044 = vmatprep.subr.mxu0 0.0
    %2045 = vmatpush1.msra.mxu0 0.0
    %2046 = vmatprep.subr.mxu0 0.0
    %2047 = vmatpush1.msra.mxu0 0.0
    %2048 = vmatprep.subr.mxu0 0.0
    %2049 = vmatpush1.msra.mxu0 0.0
    %2050 = vmatprep.subr.mxu0 0.0
    %2051 = vmatpush1.msra.mxu0 0.0
    %2052 = vmatprep.subr.mxu0 0.0
    %2053 = vmatpush1.msra.mxu0 0.0
    %2054 = vmatprep.subr.mxu0 0.0
    %2055 = vmatpush1.msra.mxu0 0.0
    %2056 = vmatprep.subr.mxu0 0.0
    %2057 = vmatpush1.msra.mxu0 0.0
    %2058 = vmatprep.subr.mxu0 0.0
    %2059 = vmatpush1.msra.mxu0 0.0
    %2060 = vmatprep.subr.mxu0 0.0
    %2061 = vmatpush1.msra.mxu0 0.0
    %2062 = vmatprep.subr.mxu0 0.0
    %2063 = vmatpush1.msra.mxu0 0.0
    %2064 = vmatprep.subr.mxu0 0.0
    %2065 = vmatpush1.msra.mxu0 0.0
    %2066 = vmatprep.subr.mxu0 0.0
    %2067 = vmatpush1.msra.mxu0 0.0
    %2068 = vmatprep.subr.mxu0 0.0
    %2069 = vmatpush1.msra.mxu0 0.0
    %2070 = vmatprep.subr.mxu0 0.0
    %2071 = vmatpush1.msra.mxu0 0.0
    %2072 = vmatprep.subr.mxu0 0.0
    %2073 = vmatpush1.msra.mxu0 0.0
    %2074 = vmatprep.subr.mxu0 0.0
    %2075 = vmatpush1.msra.mxu0 0.0
    %2076 = vmatprep.mubr.f32.mxu0 0.0
    %2077 = vmatmul.mubr.f32.gmra.mrb[0].mxu0 %v1907
    %v2078 = vpop.f32.mrb[0].mxu0
    %v2079 = vadd.f32 0.0, %v2078
    %v2080 = vpop.f32.mrb[0].mxu0
    %2081 = vmatprep.mubr.f32.mxu0 0.0
    %2082 = vmatmul.mubr.f32.gmra.mrb[0].mxu0 %v1910
    %v2083 = vpop.f32.mrb[0].mxu0
    %v2084 = vadd.f32 0.0, %v2083
    %v2085 = vpop.f32.mrb[0].mxu0
    %2086 = vdwg.mxu0
    %v2087 = vadd.f32 %v1885, %v2079
    %v2088 = vadd.f32 %v1886, %v2084
    %v2089 = vld [vmem:[#allocation4 + $0x4] sm:$0xff]
    %v2090 = vld [vmem:[#allocation4 + $0xc] sm:$0x3]
    %v2091 = vld [vmem:[#allocation2 + $0xc0] sm:$0xff]
    %v2092 = vld [vmem:[#allocation2 + $0xc8] sm:$0xff]
    %v2093 = vld [vmem:[#allocation2 + $0xd0] sm:$0xff]
    %v2094 = vld [vmem:[#allocation2 + $0xd8] sm:$0xff]
    %v2095 = vld [vmem:[#allocation2 + $0xe0] sm:$0xff]
    %v2096 = vld [vmem:[#allocation2 + $0xe8] sm:$0x3]
    %v2097 = vunpack.c.l.bf16 %v2091
    %v2098 = vunpack.c.h.bf16 %v2091
    %v2099 = vunpack.c.l.bf16 %v2092
    %v2100 = vunpack.c.h.bf16 %v2092
    %v2101 = vunpack.c.l.bf16 %v2093
    %v2102 = vunpack.c.h.bf16 %v2093
    %v2103 = vunpack.c.l.bf16 %v2094
    %v2104 = vunpack.c.h.bf16 %v2094
    %v2105 = vunpack.c.l.bf16 %v2095
    %v2106 = vunpack.c.h.bf16 %v2095
    %v2107 = vunpack.c.l.bf16 %v2096
    %v2109 = vsel %vm1343, %v2089, 0
    %v2112 = vsel %vm1343, %v2090, 0
    %v2115 = vsel %vm1116, %v2107, 0
    %2117 = vmatprep.subr.mxu0 0.0
    %2118 = vmatpush1.msra.mxu0 %v2097
    %2119 = vmatprep.subr.mxu0 0.0
    %2120 = vmatpush1.msra.mxu0 %v2098
    %2121 = vmatprep.subr.mxu0 0.0
    %2122 = vmatpush1.msra.mxu0 %v2099
    %2123 = vmatprep.subr.mxu0 0.0
    %2124 = vmatpush1.msra.mxu0 %v2100
    %2125 = vmatprep.subr.mxu0 0.0
    %2126 = vmatpush1.msra.mxu0 %v2101
    %2127 = vmatprep.subr.mxu0 0.0
    %2128 = vmatpush1.msra.mxu0 %v2102
    %2129 = vmatprep.subr.mxu0 0.0
    %2130 = vmatpush1.msra.mxu0 %v2103
    %2131 = vmatprep.subr.mxu0 0.0
    %2132 = vmatpush1.msra.mxu0 %v2104
    %2133 = vmatprep.subr.mxu0 0.0
    %2134 = vmatpush1.msra.mxu0 %v2105
    %2135 = vmatprep.subr.mxu0 0.0
    %2136 = vmatpush1.msra.mxu0 %v2106
    %2137 = vmatprep.subr.mxu0 0.0
    %2138 = vmatpush1.msra.mxu0 %v2115
    %2139 = vmatprep.subr.mxu0 0.0
    %2140 = vmatpush1.msra.mxu0 0.0
    %2141 = vmatprep.subr.mxu0 0.0
    %2142 = vmatpush1.msra.mxu0 0.0
    %2143 = vmatprep.subr.mxu0 0.0
    %2144 = vmatpush1.msra.mxu0 0.0
    %2145 = vmatprep.subr.mxu0 0.0
    %2146 = vmatpush1.msra.mxu0 0.0
    %2147 = vmatprep.subr.mxu0 0.0
    %2148 = vmatpush1.msra.mxu0 0.0
    %2149 = vmatprep.subr.mxu0 0.0
    %2150 = vmatpush1.msra.mxu0 0.0
    %2151 = vmatprep.subr.mxu0 0.0
    %2152 = vmatpush1.msra.mxu0 0.0
    %2153 = vmatprep.subr.mxu0 0.0
    %2154 = vmatpush1.msra.mxu0 0.0
    %2155 = vmatprep.subr.mxu0 0.0
    %2156 = vmatpush1.msra.mxu0 0.0
    %2157 = vmatprep.subr.mxu0 0.0
    %2158 = vmatpush1.msra.mxu0 0.0
    %2159 = vmatprep.subr.mxu0 0.0
    %2160 = vmatpush1.msra.mxu0 0.0
    %2161 = vmatprep.subr.mxu0 0.0
    %2162 = vmatpush1.msra.mxu0 0.0
    %2163 = vmatprep.subr.mxu0 0.0
    %2164 = vmatpush1.msra.mxu0 0.0
    %2165 = vmatprep.subr.mxu0 0.0
    %2166 = vmatpush1.msra.mxu0 0.0
    %2167 = vmatprep.subr.mxu0 0.0
    %2168 = vmatpush1.msra.mxu0 0.0
    %2169 = vmatprep.subr.mxu0 0.0
    %2170 = vmatpush1.msra.mxu0 0.0
    %2171 = vmatprep.subr.mxu0 0.0
    %2172 = vmatpush1.msra.mxu0 0.0
    %2173 = vmatprep.subr.mxu0 0.0
    %2174 = vmatpush1.msra.mxu0 0.0
    %2175 = vmatprep.subr.mxu0 0.0
    %2176 = vmatpush1.msra.mxu0 0.0
    %2177 = vmatprep.subr.mxu0 0.0
    %2178 = vmatpush1.msra.mxu0 0.0
    %2179 = vmatprep.subr.mxu0 0.0
    %2180 = vmatpush1.msra.mxu0 0.0
    %2181 = vmatprep.mubr.f32.mxu0 0.0
    %2182 = vmatmul.mubr.f32.gmra.mrb[0].mxu0 %v2109
    %v2183 = vpop.f32.mrb[0].mxu0
    %v2184 = vadd.f32 0.0, %v2183
    %v2185 = vpop.f32.mrb[0].mxu0
    %2186 = vmatprep.mubr.f32.mxu0 0.0
    %2187 = vmatmul.mubr.f32.gmra.mrb[0].mxu0 %v2112
    %v2188 = vpop.f32.mrb[0].mxu0
    %v2189 = vadd.f32 0.0, %v2188
    %v2190 = vpop.f32.mrb[0].mxu0
    %2191 = vdwg.mxu0
    %v2192 = vadd.f32 %v1990, %v2184
    %v2193 = vadd.f32 %v1991, %v2189
    %v2194 = vld [vmem:[#allocation2 + $0x1b0] sm:$0xff]
    %v2195 = vld [vmem:[#allocation2 + $0x1b8] sm:$0xff]
    %v2196 = vld [vmem:[#allocation2 + $0x1c0] sm:$0xff]
    %v2197 = vld [vmem:[#allocation2 + $0x1c8] sm:$0xff]
    %v2198 = vld [vmem:[#allocation2 + $0x1d0] sm:$0xff]
    %v2199 = vld [vmem:[#allocation2 + $0x1d8] sm:$0x3]
    %v2200 = vunpack.c.l.bf16 %v2194
    %v2201 = vunpack.c.h.bf16 %v2194
    %v2202 = vunpack.c.l.bf16 %v2195
    %v2203 = vunpack.c.h.bf16 %v2195
    %v2204 = vunpack.c.l.bf16 %v2196
    %v2205 = vunpack.c.h.bf16 %v2196
    %v2206 = vunpack.c.l.bf16 %v2197
    %v2207 = vunpack.c.h.bf16 %v2197
    %v2208 = vunpack.c.l.bf16 %v2198
    %v2209 = vunpack.c.h.bf16 %v2198
    %v2210 = vunpack.c.l.bf16 %v2199
    %v2212 = vsel %vm1116, %v2210, 0
    %2214 = vmatprep.subr.mxu0 0.0
    %2215 = vmatpush1.msra.mxu0 %v2200
    %2216 = vmatprep.subr.mxu0 0.0
    %2217 = vmatpush1.msra.mxu0 %v2201
    %2218 = vmatprep.subr.mxu0 0.0
    %2219 = vmatpush1.msra.mxu0 %v2202
    %2220 = vmatprep.subr.mxu0 0.0
    %2221 = vmatpush1.msra.mxu0 %v2203
    %2222 = vmatprep.subr.mxu0 0.0
    %2223 = vmatpush1.msra.mxu0 %v2204
    %2224 = vmatprep.subr.mxu0 0.0
    %2225 = vmatpush1.msra.mxu0 %v2205
    %2226 = vmatprep.subr.mxu0 0.0
    %2227 = vmatpush1.msra.mxu0 %v2206
    %2228 = vmatprep.subr.mxu0 0.0
    %2229 = vmatpush1.msra.mxu0 %v2207
    %2230 = vmatprep.subr.mxu0 0.0
    %2231 = vmatpush1.msra.mxu0 %v2208
    %2232 = vmatprep.subr.mxu0 0.0
    %2233 = vmatpush1.msra.mxu0 %v2209
    %2234 = vmatprep.subr.mxu0 0.0
    %2235 = vmatpush1.msra.mxu0 %v2212
    %2236 = vmatprep.subr.mxu0 0.0
    %2237 = vmatpush1.msra.mxu0 0.0
    %2238 = vmatprep.subr.mxu0 0.0
    %2239 = vmatpush1.msra.mxu0 0.0
    %2240 = vmatprep.subr.mxu0 0.0
    %2241 = vmatpush1.msra.mxu0 0.0
    %2242 = vmatprep.subr.mxu0 0.0
    %2243 = vmatpush1.msra.mxu0 0.0
    %2244 = vmatprep.subr.mxu0 0.0
    %2245 = vmatpush1.msra.mxu0 0.0
    %2246 = vmatprep.subr.mxu0 0.0
    %2247 = vmatpush1.msra.mxu0 0.0
    %2248 = vmatprep.subr.mxu0 0.0
    %2249 = vmatpush1.msra.mxu0 0.0
    %2250 = vmatprep.subr.mxu0 0.0
    %2251 = vmatpush1.msra.mxu0 0.0
    %2252 = vmatprep.subr.mxu0 0.0
    %2253 = vmatpush1.msra.mxu0 0.0
    %2254 = vmatprep.subr.mxu0 0.0
    %2255 = vmatpush1.msra.mxu0 0.0
    %2256 = vmatprep.subr.mxu0 0.0
    %2257 = vmatpush1.msra.mxu0 0.0
    %2258 = vmatprep.subr.mxu0 0.0
    %2259 = vmatpush1.msra.mxu0 0.0
    %2260 = vmatprep.subr.mxu0 0.0
    %2261 = vmatpush1.msra.mxu0 0.0
    %2262 = vmatprep.subr.mxu0 0.0
    %2263 = vmatpush1.msra.mxu0 0.0
    %2264 = vmatprep.subr.mxu0 0.0
    %2265 = vmatpush1.msra.mxu0 0.0
    %2266 = vmatprep.subr.mxu0 0.0
    %2267 = vmatpush1.msra.mxu0 0.0
    %2268 = vmatprep.subr.mxu0 0.0
    %2269 = vmatpush1.msra.mxu0 0.0
    %2270 = vmatprep.subr.mxu0 0.0
    %2271 = vmatpush1.msra.mxu0 0.0
    %2272 = vmatprep.subr.mxu0 0.0
    %2273 = vmatpush1.msra.mxu0 0.0
    %2274 = vmatprep.subr.mxu0 0.0
    %2275 = vmatpush1.msra.mxu0 0.0
    %2276 = vmatprep.subr.mxu0 0.0
    %2277 = vmatpush1.msra.mxu0 0.0
    %2278 = vmatprep.mubr.f32.mxu0 0.0
    %2279 = vmatmul.mubr.f32.gmra.mrb[0].mxu0 %v2109
    %v2280 = vpop.f32.mrb[0].mxu0
    %v2281 = vadd.f32 0.0, %v2280
    %v2282 = vpop.f32.mrb[0].mxu0
    %2283 = vmatprep.mubr.f32.mxu0 0.0
    %2284 = vmatmul.mubr.f32.gmra.mrb[0].mxu0 %v2112
    %v2285 = vpop.f32.mrb[0].mxu0
    %v2286 = vadd.f32 0.0, %v2285
    %v2287 = vpop.f32.mrb[0].mxu0
    %2288 = vdwg.mxu0
    %v2289 = vadd.f32 %v2087, %v2281
    %v2290 = vadd.f32 %v2088, %v2286
    %v2291 = vmax.f32 %v2192, %v2289
    %v2292 = vmax.f32 %v2193, %v2290
    %v2293 = vld [vmem:[#allocation2 + $0x1e0] sm:$0x1]
    %v2294 = vunpack.c.l.bf16 %v2293
    %v2295 = vlaneseq
    %v2296 = vshrl.u32 %v2295, 7
    %v2297 = vsub.s32 0, %v2296
    %v2298 = vrot.slane %v2294, %v2297
    %v2299 = vadd.f32 %v2291, %v2298
    %v2300 = vadd.f32 %v2292, %v2298
    %v2301 = vmax.f32 %v2299, 0.0
    %v2302 = vmax.f32 %v2300, 0.0
    %v2303 = vld [vmem:[#allocation2 + $0x1e8] sm:$0xf]
    %v2304 = vunpack.c.l.bf16 %v2303
    %vm2305 = vcmask 80896
    %v2307 = vsel %vm2305, %v2304, 0
    %vm2309 = vcmask 1041408
    %v2311 = vsel %vm2309, %v2302, 0
    %2313 = vmatprep.subr.mxu0 0.0
    %2314 = vmatpush1.msra.mxu0 %v2301
    %2315 = vmatprep.subr.mxu0 0.0
    %2316 = vmatpush1.msra.mxu0 %v2311
    %2317 = vmatprep.subr.mxu0 0.0
    %2318 = vmatpush1.msra.mxu0 0.0
    %2319 = vmatprep.subr.mxu0 0.0
    %2320 = vmatpush1.msra.mxu0 0.0
    %2321 = vmatprep.subr.mxu0 0.0
    %2322 = vmatpush1.msra.mxu0 0.0
    %2323 = vmatprep.subr.mxu0 0.0
    %2324 = vmatpush1.msra.mxu0 0.0
    %2325 = vmatprep.subr.mxu0 0.0
    %2326 = vmatpush1.msra.mxu0 0.0
    %2327 = vmatprep.subr.mxu0 0.0
    %2328 = vmatpush1.msra.mxu0 0.0
    %2329 = vmatprep.subr.mxu0 0.0
    %2330 = vmatpush1.msra.mxu0 0.0
    %2331 = vmatprep.subr.mxu0 0.0
    %2332 = vmatpush1.msra.mxu0 0.0
    %2333 = vmatprep.subr.mxu0 0.0
    %2334 = vmatpush1.msra.mxu0 0.0
    %2335 = vmatprep.subr.mxu0 0.0
    %2336 = vmatpush1.msra.mxu0 0.0
    %2337 = vmatprep.subr.mxu0 0.0
    %2338 = vmatpush1.msra.mxu0 0.0
    %2339 = vmatprep.subr.mxu0 0.0
    %2340 = vmatpush1.msra.mxu0 0.0
    %2341 = vmatprep.subr.mxu0 0.0
    %2342 = vmatpush1.msra.mxu0 0.0
    %2343 = vmatprep.subr.mxu0 0.0
    %2344 = vmatpush1.msra.mxu0 0.0
    %2345 = vmatprep.subr.mxu0 0.0
    %2346 = vmatpush1.msra.mxu0 0.0
    %2347 = vmatprep.subr.mxu0 0.0
    %2348 = vmatpush1.msra.mxu0 0.0
    %2349 = vmatprep.subr.mxu0 0.0
    %2350 = vmatpush1.msra.mxu0 0.0
    %2351 = vmatprep.subr.mxu0 0.0
    %2352 = vmatpush1.msra.mxu0 0.0
    %2353 = vmatprep.subr.mxu0 0.0
    %2354 = vmatpush1.msra.mxu0 0.0
    %2355 = vmatprep.subr.mxu0 0.0
    %2356 = vmatpush1.msra.mxu0 0.0
    %2357 = vmatprep.subr.mxu0 0.0
    %2358 = vmatpush1.msra.mxu0 0.0
    %2359 = vmatprep.subr.mxu0 0.0
    %2360 = vmatpush1.msra.mxu0 0.0
    %2361 = vmatprep.subr.mxu0 0.0
    %2362 = vmatpush1.msra.mxu0 0.0
    %2363 = vmatprep.subr.mxu0 0.0
    %2364 = vmatpush1.msra.mxu0 0.0
    %2365 = vmatprep.subr.mxu0 0.0
    %2366 = vmatpush1.msra.mxu0 0.0
    %2367 = vmatprep.subr.mxu0 0.0
    %2368 = vmatpush1.msra.mxu0 0.0
    %2369 = vmatprep.subr.mxu0 0.0
    %2370 = vmatpush1.msra.mxu0 0.0
    %2371 = vmatprep.subr.mxu0 0.0
    %2372 = vmatpush1.msra.mxu0 0.0
    %2373 = vmatprep.subr.mxu0 0.0
    %2374 = vmatpush1.msra.mxu0 0.0
    %2375 = vmatprep.subr.mxu0 0.0
    %2376 = vmatpush1.msra.mxu0 0.0
    %2377 = vmatprep.mubr.f32.mxu0 0.0
    %2378 = vmatmul.mubr.f32.gmra.mrb[0].mxu0 %v2307
    %v2379 = vpop.f32.mrb[0].mxu0
    %v2380 = vadd.f32 0.0, %v2379
    %v2381 = vpop.f32.mrb[0].mxu0
    %2382 = vdwg.mxu0
    %v2383 = vld [vmem:[#allocation2 + $0x1f0] sm:$0xf]
    %v2384 = vunpack.c.l.bf16 %v2383
    %v2386 = vsel %vm2305, %v2384, 0
    %2388 = vmatprep.subr.mxu0 0.0
    %2389 = vmatpush1.msra.mxu0 %v2301
    %2390 = vmatprep.subr.mxu0 0.0
    %2391 = vmatpush1.msra.mxu0 %v2311
    %2392 = vmatprep.subr.mxu0 0.0
    %2393 = vmatpush1.msra.mxu0 0.0
    %2394 = vmatprep.subr.mxu0 0.0
    %2395 = vmatpush1.msra.mxu0 0.0
    %2396 = vmatprep.subr.mxu0 0.0
    %2397 = vmatpush1.msra.mxu0 0.0
    %2398 = vmatprep.subr.mxu0 0.0
    %2399 = vmatpush1.msra.mxu0 0.0
    %2400 = vmatprep.subr.mxu0 0.0
    %2401 = vmatpush1.msra.mxu0 0.0
    %2402 = vmatprep.subr.mxu0 0.0
    %2403 = vmatpush1.msra.mxu0 0.0
    %2404 = vmatprep.subr.mxu0 0.0
    %2405 = vmatpush1.msra.mxu0 0.0
    %2406 = vmatprep.subr.mxu0 0.0
    %2407 = vmatpush1.msra.mxu0 0.0
    %2408 = vmatprep.subr.mxu0 0.0
    %2409 = vmatpush1.msra.mxu0 0.0
    %2410 = vmatprep.subr.mxu0 0.0
    %2411 = vmatpush1.msra.mxu0 0.0
    %2412 = vmatprep.subr.mxu0 0.0
    %2413 = vmatpush1.msra.mxu0 0.0
    %2414 = vmatprep.subr.mxu0 0.0
    %2415 = vmatpush1.msra.mxu0 0.0
    %2416 = vmatprep.subr.mxu0 0.0
    %2417 = vmatpush1.msra.mxu0 0.0
    %2418 = vmatprep.subr.mxu0 0.0
    %2419 = vmatpush1.msra.mxu0 0.0
    %2420 = vmatprep.subr.mxu0 0.0
    %2421 = vmatpush1.msra.mxu0 0.0
    %2422 = vmatprep.subr.mxu0 0.0
    %2423 = vmatpush1.msra.mxu0 0.0
    %2424 = vmatprep.subr.mxu0 0.0
    %2425 = vmatpush1.msra.mxu0 0.0
    %2426 = vmatprep.subr.mxu0 0.0
    %2427 = vmatpush1.msra.mxu0 0.0
    %2428 = vmatprep.subr.mxu0 0.0
    %2429 = vmatpush1.msra.mxu0 0.0
    %2430 = vmatprep.subr.mxu0 0.0
    %2431 = vmatpush1.msra.mxu0 0.0
    %2432 = vmatprep.subr.mxu0 0.0
    %2433 = vmatpush1.msra.mxu0 0.0
    %2434 = vmatprep.subr.mxu0 0.0
    %2435 = vmatpush1.msra.mxu0 0.0
    %2436 = vmatprep.subr.mxu0 0.0
    %2437 = vmatpush1.msra.mxu0 0.0
    %2438 = vmatprep.subr.mxu0 0.0
    %2439 = vmatpush1.msra.mxu0 0.0
    %2440 = vmatprep.subr.mxu0 0.0
    %2441 = vmatpush1.msra.mxu0 0.0
    %2442 = vmatprep.subr.mxu0 0.0
    %2443 = vmatpush1.msra.mxu0 0.0
    %2444 = vmatprep.subr.mxu0 0.0
    %2445 = vmatpush1.msra.mxu0 0.0
    %2446 = vmatprep.subr.mxu0 0.0
    %2447 = vmatpush1.msra.mxu0 0.0
    %2448 = vmatprep.subr.mxu0 0.0
    %2449 = vmatpush1.msra.mxu0 0.0
    %2450 = vmatprep.subr.mxu0 0.0
    %2451 = vmatpush1.msra.mxu0 0.0
    %2452 = vmatprep.mubr.f32.mxu0 0.0
    %2453 = vmatmul.mubr.f32.gmra.mrb[0].mxu0 %v2386
    %v2454 = vpop.f32.mrb[0].mxu0
    %v2455 = vadd.f32 0.0, %v2454
    %v2456 = vpop.f32.mrb[0].mxu0
    %2457 = vdwg.mxu0
    %v2458 = vmax.f32 %v2380, %v2455
    %2459 = vst [vmem:[#allocation5] sm:$0xff] %v2458
    %v2460 = vld [vmem:[#allocation5] sm:$0x1]
    %v2461 = vld [vmem:[#allocation2 + $0x1f8] sm:$0xff]
    %v2462 = vld [vmem:[#allocation2 + $0x200] sm:$0xff]
    %v2463 = vld [vmem:[#allocation2 + $0x208] sm:$0xff]
    %v2464 = vld [vmem:[#allocation2 + $0x210] sm:$0xff]
    %v2465 = vld [vmem:[#allocation2 + $0x218] sm:$0xff]
    %v2466 = vunpack.c.l.bf16 %v2461
    %v2467 = vunpack.c.h.bf16 %v2461
    %v2468 = vunpack.c.l.bf16 %v2462
    %v2469 = vunpack.c.h.bf16 %v2462
    %v2470 = vunpack.c.l.bf16 %v2463
    %v2471 = vunpack.c.h.bf16 %v2463
    %v2472 = vunpack.c.l.bf16 %v2464
    %v2473 = vunpack.c.h.bf16 %v2464
    %v2474 = vunpack.c.l.bf16 %v2465
    %v2475 = vunpack.c.h.bf16 %v2465
    %v2476 = vld [vmem:[#allocation5 + $0x1] sm:$0x1]
    %v2477 = vld [vmem:[#allocation2 + $0x220] sm:$0xff]
    %v2478 = vld [vmem:[#allocation2 + $0x228] sm:$0xff]
    %v2479 = vld [vmem:[#allocation2 + $0x230] sm:$0xff]
    %v2480 = vld [vmem:[#allocation2 + $0x238] sm:$0xff]
    %v2481 = vld [vmem:[#allocation2 + $0x240] sm:$0xff]
    %v2482 = vunpack.c.l.bf16 %v2477
    %v2483 = vunpack.c.h.bf16 %v2477
    %v2484 = vunpack.c.l.bf16 %v2478
    %v2485 = vunpack.c.h.bf16 %v2478
    %v2486 = vunpack.c.l.bf16 %v2479
    %v2487 = vunpack.c.h.bf16 %v2479
    %v2488 = vunpack.c.l.bf16 %v2480
    %v2489 = vunpack.c.h.bf16 %v2480
    %v2490 = vunpack.c.l.bf16 %v2481
    %v2491 = vunpack.c.h.bf16 %v2481
    %vm2492 = vcmask 654336
    %v2494 = vsel %vm2492, %v2476, 0
    %2496 = vmatprep.subr.mxu0 0.0
    %2497 = vmatpush1.msra.mxu0 %v2482
    %2498 = vmatprep.subr.mxu0 0.0
    %2499 = vmatpush1.msra.mxu0 %v2483
    %2500 = vmatprep.subr.mxu0 0.0
    %2501 = vmatpush1.msra.mxu0 %v2484
    %2502 = vmatprep.subr.mxu0 0.0
    %2503 = vmatpush1.msra.mxu0 %v2485
    %2504 = vmatprep.subr.mxu0 0.0
    %2505 = vmatpush1.msra.mxu0 %v2486
    %2506 = vmatprep.subr.mxu0 0.0
    %2507 = vmatpush1.msra.mxu0 %v2487
    %2508 = vmatprep.subr.mxu0 0.0
    %2509 = vmatpush1.msra.mxu0 %v2488
    %2510 = vmatprep.subr.mxu0 0.0
    %2511 = vmatpush1.msra.mxu0 %v2489
    %2512 = vmatprep.subr.mxu0 0.0
    %2513 = vmatpush1.msra.mxu0 %v2490
    %2514 = vmatprep.subr.mxu0 0.0
    %2515 = vmatpush1.msra.mxu0 %v2491
    %2516 = vmatprep.subr.mxu0 0.0
    %2517 = vmatpush1.msra.mxu0 0.0
    %2518 = vmatprep.subr.mxu0 0.0
    %2519 = vmatpush1.msra.mxu0 0.0
    %2520 = vmatprep.subr.mxu0 0.0
    %2521 = vmatpush1.msra.mxu0 0.0
    %2522 = vmatprep.subr.mxu0 0.0
    %2523 = vmatpush1.msra.mxu0 0.0
    %2524 = vmatprep.subr.mxu0 0.0
    %2525 = vmatpush1.msra.mxu0 0.0
    %2526 = vmatprep.subr.mxu0 0.0
    %2527 = vmatpush1.msra.mxu0 0.0
    %2528 = vmatprep.subr.mxu0 0.0
    %2529 = vmatpush1.msra.mxu0 0.0
    %2530 = vmatprep.subr.mxu0 0.0
    %2531 = vmatpush1.msra.mxu0 0.0
    %2532 = vmatprep.subr.mxu0 0.0
    %2533 = vmatpush1.msra.mxu0 0.0
    %2534 = vmatprep.subr.mxu0 0.0
    %2535 = vmatpush1.msra.mxu0 0.0
    %2536 = vmatprep.subr.mxu0 0.0
    %2537 = vmatpush1.msra.mxu0 0.0
    %2538 = vmatprep.subr.mxu0 0.0
    %2539 = vmatpush1.msra.mxu0 0.0
    %2540 = vmatprep.subr.mxu0 0.0
    %2541 = vmatpush1.msra.mxu0 0.0
    %2542 = vmatprep.subr.mxu0 0.0
    %2543 = vmatpush1.msra.mxu0 0.0
    %2544 = vmatprep.subr.mxu0 0.0
    %2545 = vmatpush1.msra.mxu0 0.0
    %2546 = vmatprep.subr.mxu0 0.0
    %2547 = vmatpush1.msra.mxu0 0.0
    %2548 = vmatprep.subr.mxu0 0.0
    %2549 = vmatpush1.msra.mxu0 0.0
    %2550 = vmatprep.subr.mxu0 0.0
    %2551 = vmatpush1.msra.mxu0 0.0
    %2552 = vmatprep.subr.mxu0 0.0
    %2553 = vmatpush1.msra.mxu0 0.0
    %2554 = vmatprep.subr.mxu0 0.0
    %2555 = vmatpush1.msra.mxu0 0.0
    %2556 = vmatprep.subr.mxu0 0.0
    %2557 = vmatpush1.msra.mxu0 0.0
    %2558 = vmatprep.subr.mxu0 0.0
    %2559 = vmatpush1.msra.mxu0 0.0
    %2560 = vmatprep.mubr.f32.mxu0 0.0
    %2561 = vmatmul.mubr.f32.gmra.mrb[0].mxu0 %v2494
    %v2562 = vpop.f32.mrb[0].mxu0
    %v2563 = vadd.f32 0.0, %v2562
    %v2564 = vpop.f32.mrb[0].mxu0
    %2565 = vdwg.mxu0
    %v2567 = vsel %vm2492, %v2460, 0
    %2569 = vmatprep.subr.mxu0 0.0
    %2570 = vmatpush1.msra.mxu0 %v2466
    %2571 = vmatprep.subr.mxu0 0.0
    %2572 = vmatpush1.msra.mxu0 %v2467
    %2573 = vmatprep.subr.mxu0 0.0
    %2574 = vmatpush1.msra.mxu0 %v2468
    %2575 = vmatprep.subr.mxu0 0.0
    %2576 = vmatpush1.msra.mxu0 %v2469
    %2577 = vmatprep.subr.mxu0 0.0
    %2578 = vmatpush1.msra.mxu0 %v2470
    %2579 = vmatprep.subr.mxu0 0.0
    %2580 = vmatpush1.msra.mxu0 %v2471
    %2581 = vmatprep.subr.mxu0 0.0
    %2582 = vmatpush1.msra.mxu0 %v2472
    %2583 = vmatprep.subr.mxu0 0.0
    %2584 = vmatpush1.msra.mxu0 %v2473
    %2585 = vmatprep.subr.mxu0 0.0
    %2586 = vmatpush1.msra.mxu0 %v2474
    %2587 = vmatprep.subr.mxu0 0.0
    %2588 = vmatpush1.msra.mxu0 %v2475
    %2589 = vmatprep.subr.mxu0 0.0
    %2590 = vmatpush1.msra.mxu0 0.0
    %2591 = vmatprep.subr.mxu0 0.0
    %2592 = vmatpush1.msra.mxu0 0.0
    %2593 = vmatprep.subr.mxu0 0.0
    %2594 = vmatpush1.msra.mxu0 0.0
    %2595 = vmatprep.subr.mxu0 0.0
    %2596 = vmatpush1.msra.mxu0 0.0
    %2597 = vmatprep.subr.mxu0 0.0
    %2598 = vmatpush1.msra.mxu0 0.0
    %2599 = vmatprep.subr.mxu0 0.0
    %2600 = vmatpush1.msra.mxu0 0.0
    %2601 = vmatprep.subr.mxu0 0.0
    %2602 = vmatpush1.msra.mxu0 0.0
    %2603 = vmatprep.subr.mxu0 0.0
    %2604 = vmatpush1.msra.mxu0 0.0
    %2605 = vmatprep.subr.mxu0 0.0
    %2606 = vmatpush1.msra.mxu0 0.0
    %2607 = vmatprep.subr.mxu0 0.0
    %2608 = vmatpush1.msra.mxu0 0.0
    %2609 = vmatprep.subr.mxu0 0.0
    %2610 = vmatpush1.msra.mxu0 0.0
    %2611 = vmatprep.subr.mxu0 0.0
    %2612 = vmatpush1.msra.mxu0 0.0
    %2613 = vmatprep.subr.mxu0 0.0
    %2614 = vmatpush1.msra.mxu0 0.0
    %2615 = vmatprep.subr.mxu0 0.0
    %2616 = vmatpush1.msra.mxu0 0.0
    %2617 = vmatprep.subr.mxu0 0.0
    %2618 = vmatpush1.msra.mxu0 0.0
    %2619 = vmatprep.subr.mxu0 0.0
    %2620 = vmatpush1.msra.mxu0 0.0
    %2621 = vmatprep.subr.mxu0 0.0
    %2622 = vmatpush1.msra.mxu0 0.0
    %2623 = vmatprep.subr.mxu0 0.0
    %2624 = vmatpush1.msra.mxu0 0.0
    %2625 = vmatprep.subr.mxu0 0.0
    %2626 = vmatpush1.msra.mxu0 0.0
    %2627 = vmatprep.subr.mxu0 0.0
    %2628 = vmatpush1.msra.mxu0 0.0
    %2629 = vmatprep.subr.mxu0 0.0
    %2630 = vmatpush1.msra.mxu0 0.0
    %2631 = vmatprep.subr.mxu0 0.0
    %2632 = vmatpush1.msra.mxu0 0.0
    %2633 = vmatprep.mubr.f32.mxu0 0.0
    %2634 = vmatmul.mubr.f32.gmra.mrb[0].mxu0 %v2567
    %v2635 = vpop.f32.mrb[0].mxu0
    %v2636 = vadd.f32 %v2563, %v2635
    %v2637 = vpop.f32.mrb[0].mxu0
    %2638 = vdwg.mxu0
    %v2639 = vld [vmem:[#allocation5 + $0x2] sm:$0x1]
    %v2640 = vld [vmem:[#allocation2 + $0x248] sm:$0xff]
    %v2641 = vld [vmem:[#allocation2 + $0x250] sm:$0xff]
    %v2642 = vld [vmem:[#allocation2 + $0x258] sm:$0xff]
    %v2643 = vld [vmem:[#allocation2 + $0x260] sm:$0xff]
    %v2644 = vld [vmem:[#allocation2 + $0x268] sm:$0xff]
    %v2645 = vunpack.c.l.bf16 %v2640
    %v2646 = vunpack.c.h.bf16 %v2640
    %v2647 = vunpack.c.l.bf16 %v2641
    %v2648 = vunpack.c.h.bf16 %v2641
    %v2649 = vunpack.c.l.bf16 %v2642
    %v2650 = vunpack.c.h.bf16 %v2642
    %v2651 = vunpack.c.l.bf16 %v2643
    %v2652 = vunpack.c.h.bf16 %v2643
    %v2653 = vunpack.c.l.bf16 %v2644
    %v2654 = vunpack.c.h.bf16 %v2644
    %v2656 = vsel %vm2492, %v2639, 0
    %2658 = vmatprep.subr.mxu0 0.0
    %2659 = vmatpush1.msra.mxu0 %v2645
    %2660 = vmatprep.subr.mxu0 0.0
    %2661 = vmatpush1.msra.mxu0 %v2646
    %2662 = vmatprep.subr.mxu0 0.0
    %2663 = vmatpush1.msra.mxu0 %v2647
    %2664 = vmatprep.subr.mxu0 0.0
    %2665 = vmatpush1.msra.mxu0 %v2648
    %2666 = vmatprep.subr.mxu0 0.0
    %2667 = vmatpush1.msra.mxu0 %v2649
    %2668 = vmatprep.subr.mxu0 0.0
    %2669 = vmatpush1.msra.mxu0 %v2650
    %2670 = vmatprep.subr.mxu0 0.0
    %2671 = vmatpush1.msra.mxu0 %v2651
    %2672 = vmatprep.subr.mxu0 0.0
    %2673 = vmatpush1.msra.mxu0 %v2652
    %2674 = vmatprep.subr.mxu0 0.0
    %2675 = vmatpush1.msra.mxu0 %v2653
    %2676 = vmatprep.subr.mxu0 0.0
    %2677 = vmatpush1.msra.mxu0 %v2654
    %2678 = vmatprep.subr.mxu0 0.0
    %2679 = vmatpush1.msra.mxu0 0.0
    %2680 = vmatprep.subr.mxu0 0.0
    %2681 = vmatpush1.msra.mxu0 0.0
    %2682 = vmatprep.subr.mxu0 0.0
    %2683 = vmatpush1.msra.mxu0 0.0
    %2684 = vmatprep.subr.mxu0 0.0
    %2685 = vmatpush1.msra.mxu0 0.0
    %2686 = vmatprep.subr.mxu0 0.0
    %2687 = vmatpush1.msra.mxu0 0.0
    %2688 = vmatprep.subr.mxu0 0.0
    %2689 = vmatpush1.msra.mxu0 0.0
    %2690 = vmatprep.subr.mxu0 0.0
    %2691 = vmatpush1.msra.mxu0 0.0
    %2692 = vmatprep.subr.mxu0 0.0
    %2693 = vmatpush1.msra.mxu0 0.0
    %2694 = vmatprep.subr.mxu0 0.0
    %2695 = vmatpush1.msra.mxu0 0.0
    %2696 = vmatprep.subr.mxu0 0.0
    %2697 = vmatpush1.msra.mxu0 0.0
    %2698 = vmatprep.subr.mxu0 0.0
    %2699 = vmatpush1.msra.mxu0 0.0
    %2700 = vmatprep.subr.mxu0 0.0
    %2701 = vmatpush1.msra.mxu0 0.0
    %2702 = vmatprep.subr.mxu0 0.0
    %2703 = vmatpush1.msra.mxu0 0.0
    %2704 = vmatprep.subr.mxu0 0.0
    %2705 = vmatpush1.msra.mxu0 0.0
    %2706 = vmatprep.subr.mxu0 0.0
    %2707 = vmatpush1.msra.mxu0 0.0
    %2708 = vmatprep.subr.mxu0 0.0
    %2709 = vmatpush1.msra.mxu0 0.0
    %2710 = vmatprep.subr.mxu0 0.0
    %2711 = vmatpush1.msra.mxu0 0.0
    %2712 = vmatprep.subr.mxu0 0.0
    %2713 = vmatpush1.msra.mxu0 0.0
    %2714 = vmatprep.subr.mxu0 0.0
    %2715 = vmatpush1.msra.mxu0 0.0
    %2716 = vmatprep.subr.mxu0 0.0
    %2717 = vmatpush1.msra.mxu0 0.0
    %2718 = vmatprep.subr.mxu0 0.0
    %2719 = vmatpush1.msra.mxu0 0.0
    %2720 = vmatprep.subr.mxu0 0.0
    %2721 = vmatpush1.msra.mxu0 0.0
    %2722 = vmatprep.mubr.f32.mxu0 0.0
    %2723 = vmatmul.mubr.f32.gmra.mrb[0].mxu0 %v2656
    %v2724 = vpop.f32.mrb[0].mxu0
    %v2725 = vadd.f32 0.0, %v2724
    %v2726 = vpop.f32.mrb[0].mxu0
    %2727 = vdwg.mxu0
    %v2728 = vadd.f32 %v2636, %v2725
    %v2729 = vld [vmem:[#allocation5 + $0x3] sm:$0x1]
    %v2730 = vld [vmem:[#allocation2 + $0x270] sm:$0xff]
    %v2731 = vld [vmem:[#allocation2 + $0x278] sm:$0xff]
    %v2732 = vld [vmem:[#allocation2 + $0x280] sm:$0xff]
    %v2733 = vld [vmem:[#allocation2 + $0x288] sm:$0xff]
    %v2734 = vld [vmem:[#allocation2 + $0x290] sm:$0xff]
    %v2735 = vunpack.c.l.bf16 %v2730
    %v2736 = vunpack.c.h.bf16 %v2730
    %v2737 = vunpack.c.l.bf16 %v2731
    %v2738 = vunpack.c.h.bf16 %v2731
    %v2739 = vunpack.c.l.bf16 %v2732
    %v2740 = vunpack.c.h.bf16 %v2732
    %v2741 = vunpack.c.l.bf16 %v2733
    %v2742 = vunpack.c.h.bf16 %v2733
    %v2743 = vunpack.c.l.bf16 %v2734
    %v2744 = vunpack.c.h.bf16 %v2734
    %v2746 = vsel %vm2492, %v2729, 0
    %2748 = vmatprep.subr.mxu0 0.0
    %2749 = vmatpush1.msra.mxu0 %v2735
    %2750 = vmatprep.subr.mxu0 0.0
    %2751 = vmatpush1.msra.mxu0 %v2736
    %2752 = vmatprep.subr.mxu0 0.0
    %2753 = vmatpush1.msra.mxu0 %v2737
    %2754 = vmatprep.subr.mxu0 0.0
    %2755 = vmatpush1.msra.mxu0 %v2738
    %2756 = vmatprep.subr.mxu0 0.0
    %2757 = vmatpush1.msra.mxu0 %v2739
    %2758 = vmatprep.subr.mxu0 0.0
    %2759 = vmatpush1.msra.mxu0 %v2740
    %2760 = vmatprep.subr.mxu0 0.0
    %2761 = vmatpush1.msra.mxu0 %v2741
    %2762 = vmatprep.subr.mxu0 0.0
    %2763 = vmatpush1.msra.mxu0 %v2742
    %2764 = vmatprep.subr.mxu0 0.0
    %2765 = vmatpush1.msra.mxu0 %v2743
    %2766 = vmatprep.subr.mxu0 0.0
    %2767 = vmatpush1.msra.mxu0 %v2744
    %2768 = vmatprep.subr.mxu0 0.0
    %2769 = vmatpush1.msra.mxu0 0.0
    %2770 = vmatprep.subr.mxu0 0.0
    %2771 = vmatpush1.msra.mxu0 0.0
    %2772 = vmatprep.subr.mxu0 0.0
    %2773 = vmatpush1.msra.mxu0 0.0
    %2774 = vmatprep.subr.mxu0 0.0
    %2775 = vmatpush1.msra.mxu0 0.0
    %2776 = vmatprep.subr.mxu0 0.0
    %2777 = vmatpush1.msra.mxu0 0.0
    %2778 = vmatprep.subr.mxu0 0.0
    %2779 = vmatpush1.msra.mxu0 0.0
    %2780 = vmatprep.subr.mxu0 0.0
    %2781 = vmatpush1.msra.mxu0 0.0
    %2782 = vmatprep.subr.mxu0 0.0
    %2783 = vmatpush1.msra.mxu0 0.0
    %2784 = vmatprep.subr.mxu0 0.0
    %2785 = vmatpush1.msra.mxu0 0.0
    %2786 = vmatprep.subr.mxu0 0.0
    %2787 = vmatpush1.msra.mxu0 0.0
    %2788 = vmatprep.subr.mxu0 0.0
    %2789 = vmatpush1.msra.mxu0 0.0
    %2790 = vmatprep.subr.mxu0 0.0
    %2791 = vmatpush1.msra.mxu0 0.0
    %2792 = vmatprep.subr.mxu0 0.0
    %2793 = vmatpush1.msra.mxu0 0.0
    %2794 = vmatprep.subr.mxu0 0.0
    %2795 = vmatpush1.msra.mxu0 0.0
    %2796 = vmatprep.subr.mxu0 0.0
    %2797 = vmatpush1.msra.mxu0 0.0
    %2798 = vmatprep.subr.mxu0 0.0
    %2799 = vmatpush1.msra.mxu0 0.0
    %2800 = vmatprep.subr.mxu0 0.0
    %2801 = vmatpush1.msra.mxu0 0.0
    %2802 = vmatprep.subr.mxu0 0.0
    %2803 = vmatpush1.msra.mxu0 0.0
    %2804 = vmatprep.subr.mxu0 0.0
    %2805 = vmatpush1.msra.mxu0 0.0
    %2806 = vmatprep.subr.mxu0 0.0
    %2807 = vmatpush1.msra.mxu0 0.0
    %2808 = vmatprep.subr.mxu0 0.0
    %2809 = vmatpush1.msra.mxu0 0.0
    %2810 = vmatprep.subr.mxu0 0.0
    %2811 = vmatpush1.msra.mxu0 0.0
    %2812 = vmatprep.mubr.f32.mxu0 0.0
    %2813 = vmatmul.mubr.f32.gmra.mrb[0].mxu0 %v2746
    %v2814 = vpop.f32.mrb[0].mxu0
    %v2815 = vadd.f32 0.0, %v2814
    %v2816 = vpop.f32.mrb[0].mxu0
    %2817 = vdwg.mxu0
    %v2818 = vadd.f32 %v2728, %v2815
    %v2819 = vld [vmem:[#allocation5 + $0x4] sm:$0x1]
    %v2820 = vld [vmem:[#allocation2 + $0x298] sm:$0xff]
    %v2821 = vld [vmem:[#allocation2 + $0x2a0] sm:$0xff]
    %v2822 = vld [vmem:[#allocation2 + $0x2a8] sm:$0xff]
    %v2823 = vld [vmem:[#allocation2 + $0x2b0] sm:$0xff]
    %v2824 = vld [vmem:[#allocation2 + $0x2b8] sm:$0xff]
    %v2825 = vunpack.c.l.bf16 %v2820
    %v2826 = vunpack.c.h.bf16 %v2820
    %v2827 = vunpack.c.l.bf16 %v2821
    %v2828 = vunpack.c.h.bf16 %v2821
    %v2829 = vunpack.c.l.bf16 %v2822
    %v2830 = vunpack.c.h.bf16 %v2822
    %v2831 = vunpack.c.l.bf16 %v2823
    %v2832 = vunpack.c.h.bf16 %v2823
    %v2833 = vunpack.c.l.bf16 %v2824
    %v2834 = vunpack.c.h.bf16 %v2824
    %v2836 = vsel %vm2492, %v2819, 0
    %2838 = vmatprep.subr.mxu0 0.0
    %2839 = vmatpush1.msra.mxu0 %v2825
    %2840 = vmatprep.subr.mxu0 0.0
    %2841 = vmatpush1.msra.mxu0 %v2826
    %2842 = vmatprep.subr.mxu0 0.0
    %2843 = vmatpush1.msra.mxu0 %v2827
    %2844 = vmatprep.subr.mxu0 0.0
    %2845 = vmatpush1.msra.mxu0 %v2828
    %2846 = vmatprep.subr.mxu0 0.0
    %2847 = vmatpush1.msra.mxu0 %v2829
    %2848 = vmatprep.subr.mxu0 0.0
    %2849 = vmatpush1.msra.mxu0 %v2830
    %2850 = vmatprep.subr.mxu0 0.0
    %2851 = vmatpush1.msra.mxu0 %v2831
    %2852 = vmatprep.subr.mxu0 0.0
    %2853 = vmatpush1.msra.mxu0 %v2832
    %2854 = vmatprep.subr.mxu0 0.0
    %2855 = vmatpush1.msra.mxu0 %v2833
    %2856 = vmatprep.subr.mxu0 0.0
    %2857 = vmatpush1.msra.mxu0 %v2834
    %2858 = vmatprep.subr.mxu0 0.0
    %2859 = vmatpush1.msra.mxu0 0.0
    %2860 = vmatprep.subr.mxu0 0.0
    %2861 = vmatpush1.msra.mxu0 0.0
    %2862 = vmatprep.subr.mxu0 0.0
    %2863 = vmatpush1.msra.mxu0 0.0
    %2864 = vmatprep.subr.mxu0 0.0
    %2865 = vmatpush1.msra.mxu0 0.0
    %2866 = vmatprep.subr.mxu0 0.0
    %2867 = vmatpush1.msra.mxu0 0.0
    %2868 = vmatprep.subr.mxu0 0.0
    %2869 = vmatpush1.msra.mxu0 0.0
    %2870 = vmatprep.subr.mxu0 0.0
    %2871 = vmatpush1.msra.mxu0 0.0
    %2872 = vmatprep.subr.mxu0 0.0
    %2873 = vmatpush1.msra.mxu0 0.0
    %2874 = vmatprep.subr.mxu0 0.0
    %2875 = vmatpush1.msra.mxu0 0.0
    %2876 = vmatprep.subr.mxu0 0.0
    %2877 = vmatpush1.msra.mxu0 0.0
    %2878 = vmatprep.subr.mxu0 0.0
    %2879 = vmatpush1.msra.mxu0 0.0
    %2880 = vmatprep.subr.mxu0 0.0
    %2881 = vmatpush1.msra.mxu0 0.0
    %2882 = vmatprep.subr.mxu0 0.0
    %2883 = vmatpush1.msra.mxu0 0.0
    %2884 = vmatprep.subr.mxu0 0.0
    %2885 = vmatpush1.msra.mxu0 0.0
    %2886 = vmatprep.subr.mxu0 0.0
    %2887 = vmatpush1.msra.mxu0 0.0
    %2888 = vmatprep.subr.mxu0 0.0
    %2889 = vmatpush1.msra.mxu0 0.0
    %2890 = vmatprep.subr.mxu0 0.0
    %2891 = vmatpush1.msra.mxu0 0.0
    %2892 = vmatprep.subr.mxu0 0.0
    %2893 = vmatpush1.msra.mxu0 0.0
    %2894 = vmatprep.subr.mxu0 0.0
    %2895 = vmatpush1.msra.mxu0 0.0
    %2896 = vmatprep.subr.mxu0 0.0
    %2897 = vmatpush1.msra.mxu0 0.0
    %2898 = vmatprep.subr.mxu0 0.0
    %2899 = vmatpush1.msra.mxu0 0.0
    %2900 = vmatprep.subr.mxu0 0.0
    %2901 = vmatpush1.msra.mxu0 0.0
    %2902 = vmatprep.mubr.f32.mxu0 0.0
    %2903 = vmatmul.mubr.f32.gmra.mrb[0].mxu0 %v2836
    %v2904 = vpop.f32.mrb[0].mxu0
    %v2905 = vadd.f32 0.0, %v2904
    %v2906 = vpop.f32.mrb[0].mxu0
    %2907 = vdwg.mxu0
    %v2908 = vadd.f32 %v2818, %v2905
    %v2909 = vld [vmem:[#allocation2 + $0x2c0] sm:$0x1]
    %v2910 = vunpack.c.l.bf16 %v2909
    %v2911 = vadd.f32 %v2908, %v2910
    %v2912 = vmax.f32 %v2911, 0.0
    %v2913 = vld [vmem:[#allocation2 + $0x2c8] sm:$0xff]
    %v2914 = vld [vmem:[#allocation2 + $0x2d0] sm:$0xff]
    %v2915 = vld [vmem:[#allocation2 + $0x2d8] sm:$0xff]
    %v2916 = vld [vmem:[#allocation2 + $0x2e0] sm:$0xff]
    %v2917 = vld [vmem:[#allocation2 + $0x2e8] sm:$0xff]
    %v2918 = vld [vmem:[#allocation2 + $0x2f0] sm:$0xff]
    %v2919 = vld [vmem:[#allocation2 + $0x2f8] sm:$0xff]
    %v2920 = vld [vmem:[#allocation2 + $0x300] sm:$0xff]
    %v2921 = vunpack.c.l.bf16 %v2913
    %v2922 = vunpack.c.h.bf16 %v2913
    %v2923 = vunpack.c.l.bf16 %v2914
    %v2924 = vunpack.c.h.bf16 %v2914
    %v2925 = vunpack.c.l.bf16 %v2915
    %v2926 = vunpack.c.h.bf16 %v2915
    %v2927 = vunpack.c.l.bf16 %v2916
    %v2928 = vunpack.c.h.bf16 %v2916
    %v2929 = vunpack.c.l.bf16 %v2917
    %v2930 = vunpack.c.h.bf16 %v2917
    %v2931 = vunpack.c.l.bf16 %v2918
    %v2932 = vunpack.c.h.bf16 %v2918
    %v2933 = vunpack.c.l.bf16 %v2919
    %v2934 = vunpack.c.h.bf16 %v2919
    %v2935 = vunpack.c.l.bf16 %v2920
    %v2936 = vunpack.c.h.bf16 %v2920
    %v2937 = vld [vmem:[#allocation2 + $0x308] sm:$0x1]
    %v2938 = vunpack.c.l.bf16 %v2937
    %2939 = vmatprep.subr.mxu0 0.0
    %2940 = vmatpush1.msra.mxu0 %v2921
    %2941 = vmatprep.subr.mxu0 0.0
    %2942 = vmatpush1.msra.mxu0 %v2922
    %2943 = vmatprep.subr.mxu0 0.0
    %2944 = vmatpush1.msra.mxu0 %v2923
    %2945 = vmatprep.subr.mxu0 0.0
    %2946 = vmatpush1.msra.mxu0 %v2924
    %2947 = vmatprep.subr.mxu0 0.0
    %2948 = vmatpush1.msra.mxu0 %v2925
    %2949 = vmatprep.subr.mxu0 0.0
    %2950 = vmatpush1.msra.mxu0 %v2926
    %2951 = vmatprep.subr.mxu0 0.0
    %2952 = vmatpush1.msra.mxu0 %v2927
    %2953 = vmatprep.subr.mxu0 0.0
    %2954 = vmatpush1.msra.mxu0 %v2928
    %2955 = vmatprep.subr.mxu0 0.0
    %2956 = vmatpush1.msra.mxu0 %v2929
    %2957 = vmatprep.subr.mxu0 0.0
    %2958 = vmatpush1.msra.mxu0 %v2930
    %2959 = vmatprep.subr.mxu0 0.0
    %2960 = vmatpush1.msra.mxu0 %v2931
    %2961 = vmatprep.subr.mxu0 0.0
    %2962 = vmatpush1.msra.mxu0 %v2932
    %2963 = vmatprep.subr.mxu0 0.0
    %2964 = vmatpush1.msra.mxu0 %v2933
    %2965 = vmatprep.subr.mxu0 0.0
    %2966 = vmatpush1.msra.mxu0 %v2934
    %2967 = vmatprep.subr.mxu0 0.0
    %2968 = vmatpush1.msra.mxu0 %v2935
    %2969 = vmatprep.subr.mxu0 0.0
    %2970 = vmatpush1.msra.mxu0 %v2936
    %2971 = vmatprep.subr.mxu0 0.0
    %2972 = vmatpush1.msra.mxu0 0.0
    %2973 = vmatprep.subr.mxu0 0.0
    %2974 = vmatpush1.msra.mxu0 0.0
    %2975 = vmatprep.subr.mxu0 0.0
    %2976 = vmatpush1.msra.mxu0 0.0
    %2977 = vmatprep.subr.mxu0 0.0
    %2978 = vmatpush1.msra.mxu0 0.0
    %2979 = vmatprep.subr.mxu0 0.0
    %2980 = vmatpush1.msra.mxu0 0.0
    %2981 = vmatprep.subr.mxu0 0.0
    %2982 = vmatpush1.msra.mxu0 0.0
    %2983 = vmatprep.subr.mxu0 0.0
    %2984 = vmatpush1.msra.mxu0 0.0
    %2985 = vmatprep.subr.mxu0 0.0
    %2986 = vmatpush1.msra.mxu0 0.0
    %2987 = vmatprep.subr.mxu0 0.0
    %2988 = vmatpush1.msra.mxu0 0.0
    %2989 = vmatprep.subr.mxu0 0.0
    %2990 = vmatpush1.msra.mxu0 0.0
    %2991 = vmatprep.subr.mxu0 0.0
    %2992 = vmatpush1.msra.mxu0 0.0
    %2993 = vmatprep.subr.mxu0 0.0
    %2994 = vmatpush1.msra.mxu0 0.0
    %2995 = vmatprep.subr.mxu0 0.0
    %2996 = vmatpush1.msra.mxu0 0.0
    %2997 = vmatprep.subr.mxu0 0.0
    %2998 = vmatpush1.msra.mxu0 0.0
    %2999 = vmatprep.subr.mxu0 0.0
    %3000 = vmatpush1.msra.mxu0 0.0
    %3001 = vmatprep.subr.mxu0 0.0
    %3002 = vmatpush1.msra.mxu0 0.0
    %3003 = vmatprep.mubr.f32.mxu0 0.0
    %3004 = vmatmul.mubr.f32.gmra.mrb[0].mxu0 %v2912
    %v3005 = vpop.f32.mrb[0].mxu0
    %v3006 = vadd.f32 %v2938, %v3005
    %v3007 = vpop.f32.mrb[0].mxu0
    %3008 = vdwg.mxu0
    %v3009 = vmax.f32 %v3006, 0.0
    %v3010 = vld [vmem:[#allocation2 + $0x310] sm:$0xff]
    %v3011 = vld [vmem:[#allocation2 + $0x318] sm:$0xff]
    %v3012 = vld [vmem:[#allocation2 + $0x320] sm:$0xff]
    %v3013 = vld [vmem:[#allocation2 + $0x328] sm:$0xff]
    %v3014 = vld [vmem:[#allocation2 + $0x330] sm:$0xff]
    %v3015 = vld [vmem:[#allocation2 + $0x338] sm:$0xff]
    %v3016 = vld [vmem:[#allocation2 + $0x340] sm:$0xff]
    %v3017 = vld [vmem:[#allocation2 + $0x348] sm:$0xff]
    %v3018 = vunpack.c.l.bf16 %v3010
    %v3019 = vunpack.c.h.bf16 %v3010
    %v3020 = vunpack.c.l.bf16 %v3011
    %v3021 = vunpack.c.h.bf16 %v3011
    %v3022 = vunpack.c.l.bf16 %v3012
    %v3023 = vunpack.c.h.bf16 %v3012
    %v3024 = vunpack.c.l.bf16 %v3013
    %v3025 = vunpack.c.h.bf16 %v3013
    %v3026 = vunpack.c.l.bf16 %v3014
    %v3027 = vunpack.c.h.bf16 %v3014
    %v3028 = vunpack.c.l.bf16 %v3015
    %v3029 = vunpack.c.h.bf16 %v3015
    %v3030 = vunpack.c.l.bf16 %v3016
    %v3031 = vunpack.c.h.bf16 %v3016
    %v3032 = vunpack.c.l.bf16 %v3017
    %v3033 = vunpack.c.h.bf16 %v3017
    %v3034 = vld [vmem:[#allocation2 + $0x350] sm:$0x1]
    %v3035 = vunpack.c.l.bf16 %v3034
    %3036 = vmatprep.subr.mxu0 0.0
    %3037 = vmatpush1.msra.mxu0 %v3018
    %3038 = vmatprep.subr.mxu0 0.0
    %3039 = vmatpush1.msra.mxu0 %v3019
    %3040 = vmatprep.subr.mxu0 0.0
    %3041 = vmatpush1.msra.mxu0 %v3020
    %3042 = vmatprep.subr.mxu0 0.0
    %3043 = vmatpush1.msra.mxu0 %v3021
    %3044 = vmatprep.subr.mxu0 0.0
    %3045 = vmatpush1.msra.mxu0 %v3022
    %3046 = vmatprep.subr.mxu0 0.0
    %3047 = vmatpush1.msra.mxu0 %v3023
    %3048 = vmatprep.subr.mxu0 0.0
    %3049 = vmatpush1.msra.mxu0 %v3024
    %3050 = vmatprep.subr.mxu0 0.0
    %3051 = vmatpush1.msra.mxu0 %v3025
    %3052 = vmatprep.subr.mxu0 0.0
    %3053 = vmatpush1.msra.mxu0 %v3026
    %3054 = vmatprep.subr.mxu0 0.0
    %3055 = vmatpush1.msra.mxu0 %v3027
    %3056 = vmatprep.subr.mxu0 0.0
    %3057 = vmatpush1.msra.mxu0 %v3028
    %3058 = vmatprep.subr.mxu0 0.0
    %3059 = vmatpush1.msra.mxu0 %v3029
    %3060 = vmatprep.subr.mxu0 0.0
    %3061 = vmatpush1.msra.mxu0 %v3030
    %3062 = vmatprep.subr.mxu0 0.0
    %3063 = vmatpush1.msra.mxu0 %v3031
    %3064 = vmatprep.subr.mxu0 0.0
    %3065 = vmatpush1.msra.mxu0 %v3032
    %3066 = vmatprep.subr.mxu0 0.0
    %3067 = vmatpush1.msra.mxu0 %v3033
    %3068 = vmatprep.subr.mxu0 0.0
    %3069 = vmatpush1.msra.mxu0 0.0
    %3070 = vmatprep.subr.mxu0 0.0
    %3071 = vmatpush1.msra.mxu0 0.0
    %3072 = vmatprep.subr.mxu0 0.0
    %3073 = vmatpush1.msra.mxu0 0.0
    %3074 = vmatprep.subr.mxu0 0.0
    %3075 = vmatpush1.msra.mxu0 0.0
    %3076 = vmatprep.subr.mxu0 0.0
    %3077 = vmatpush1.msra.mxu0 0.0
    %3078 = vmatprep.subr.mxu0 0.0
    %3079 = vmatpush1.msra.mxu0 0.0
    %3080 = vmatprep.subr.mxu0 0.0
    %3081 = vmatpush1.msra.mxu0 0.0
    %3082 = vmatprep.subr.mxu0 0.0
    %3083 = vmatpush1.msra.mxu0 0.0
    %3084 = vmatprep.subr.mxu0 0.0
    %3085 = vmatpush1.msra.mxu0 0.0
    %3086 = vmatprep.subr.mxu0 0.0
    %3087 = vmatpush1.msra.mxu0 0.0
    %3088 = vmatprep.subr.mxu0 0.0
    %3089 = vmatpush1.msra.mxu0 0.0
    %3090 = vmatprep.subr.mxu0 0.0
    %3091 = vmatpush1.msra.mxu0 0.0
    %3092 = vmatprep.subr.mxu0 0.0
    %3093 = vmatpush1.msra.mxu0 0.0
    %3094 = vmatprep.subr.mxu0 0.0
    %3095 = vmatpush1.msra.mxu0 0.0
    %3096 = vmatprep.subr.mxu0 0.0
    %3097 = vmatpush1.msra.mxu0 0.0
    %3098 = vmatprep.subr.mxu0 0.0
    %3099 = vmatpush1.msra.mxu0 0.0
    %3100 = vmatprep.mubr.f32.mxu0 0.0
    %3101 = vmatmul.mubr.f32.gmra.mrb[0].mxu0 %v3009
    %v3102 = vpop.f32.mrb[0].mxu0
    %v3103 = vadd.f32 %v3035, %v3102
    %v3104 = vpop.f32.mrb[0].mxu0
    %3105 = vdwg.mxu0
    %3106 = vst [vmem:[#allocation11] sm:$0x1] %v3103
    // Predicated region
    $region22: #{forward.1} parent=1 // pred_check
      _
    $region23: #{forward.1} parent=1 // pred_check_branch
      %3108 = sbr.rel (0) target = $region25
    $region24: #{forward.1} parent=1 // pred_region
      %s3110 = ssub.s32 16, 16
      %3111 = vsyncadd [#allocation8], %s3110
      %s3113 = sshll.u32 [#allocation11], 4
      %s3114 = int_to_ptr.vmem [resolvable:$true] %s3113
      %3116 = dma.vmem_to_hbm [thread:$0]  %s3114, 16, %s3, [#allocation8]
    $region25: #{forward.1} parent=1 // pred_fallthru
      _
    // Predicated region
    $region26: #{forward.1} parent=1 // pred_check
      _
    $region27: #{forward.1} parent=1 // pred_check_branch
      %3118 = sbr.rel (0) target = $region29
    $region28: #{forward.1} parent=1 // pred_region
      %3119 = dma.done [#allocation8], 16
    $region29: #{forward.1} parent=1 // pred_fallthru
      _
    %3120 = vsyncpa [#allocation7], 1
    %3121 = vsyncpa [#allocation10], 1
    %3122 = vsyncpa [#allocation8], 1
  %3123 = vsyncmov [#allocation3]
  %s3124 = vpop.sfrf %3123
  %p3125 = scmp.eq.s32.totalorder %s3124, 0
  %p3126 = pneg %p3125
  %3128 = shalt.err (%p3126)

</llo_original>
